<compile_context>
chip_gen: v7x
topology: tpu7x:2x2x1
jax: 0.10.0
libtpu: 0.0.40
codegen_flags: <defaults>
</compile_context>

<pallas_src>
import functools
import numpy as np
import jax
import jax.numpy as jnp
from jax.experimental import pallas as pl
from jax.experimental.pallas import tpu as pltpu

KSIZE = 12              # self.upsample_kernelSize
STRIDE = KSIZE // 2     # stride = upsample_kernelSize // 2


def dsnt_scale(learn_size: int) -> np.ndarray:
    """Replicates the DSNT_Scale construction from NETS.__init__ (learnSize odd)."""
    s = np.ones(learn_size, dtype=np.float32)
    half = learn_size // 2
    s[1:half + 1] = 2.0 * np.pi / np.arange(1, half + 1, dtype=np.float32)
    s[half + 1:] = 2.0 * np.pi / (half + 1 - np.arange(1, half + 1, dtype=np.float32))
    s[0] = 4.0
    return s


def nets_head_kernel(z_ref, w_ref, bias_ref, xw_ref, xh_ref, scale_ref,
                     hm_ref, pack_ref, y_scr, xc_scr, yc_scr,
                     *, L, HW, HWpad):
    """Whole batch in one shot: upsample matmul + per-channel softmax + DSNT."""
    # --- ConvTranspose2d as a single MXU matmul (bf16 in, f32 accumulate) ---
    y_scr[...] = jnp.dot(z_ref[...], w_ref[...],
                         preferred_element_type=jnp.float32) + bias_ref[...]

    hm_ref[...] = jnp.zeros_like(hm_ref)            # padded lanes stay zero

    xw = xw_ref[...]                                # (1, HW): xs_w[w] at flat h*W+w
    xh = xh_ref[...]                                # (1, HW): xs_h[h] at flat h*W+w

    # --- per-channel softmax over h*w + DSNT reductions (VPU/EUP/XLU) ---
    for l in range(L):
        yl = y_scr[:, pl.ds(l * HWpad, HW)]         # (b, HW), lane-aligned offset
        mx = jnp.max(yl, axis=-1, keepdims=True)    # (b, 1)
        e = jnp.exp(yl - mx)
        s = jnp.sum(e, axis=-1, keepdims=True)      # (b, 1)
        hm_ref[:, pl.ds(l * HWpad, HW)] = e * pl.reciprocal(s, approx=True)
        xc_scr[:, pl.ds(l, 1)] = jnp.sum(e * xw, axis=-1, keepdims=True) / s
        yc_scr[:, pl.ds(l, 1)] = jnp.sum(e * xh, axis=-1, keepdims=True) / s

    # --- pack centres + logits into one small output: rows [x, y, x*s, y*s] ---
    xc = xc_scr[...]                                # (b, L)
    yc = yc_scr[...]
    scale = scale_ref[...]                          # (1, L)
    pack_ref[0] = xc
    pack_ref[1] = yc
    pack_ref[2] = xc * scale
    pack_ref[3] = yc * scale


def nets_head_pallas(z, wt, bias, learn_size, ksize=KSIZE):
    """z: (b, C, m, n) f32 NCHW feature map.  wt: (C, learnSize, k, k).  bias: (learnSize,)."""
    z = jnp.asarray(z, jnp.float32)
    b, C, m, n = z.shape
    L = learn_size
    stride = ksize // 2
    H = (m - 1) * stride + ksize          # == hm_outSize
    W = (n - 1) * stride + ksize
    HW = H * W
    HWpad = ((HW + 127) // 128) * 128     # lane-aligned per-channel slab
    K = C * m * n

    # ---------- parameter / layout glue (host-side numpy) ----------
    wt_np = np.asarray(wt, dtype=np.float32)
    bias_np = np.asarray(bias, dtype=np.float32)

    # Full Toeplitz expansion over (kh, kw):
    #   Wfull[(c,ih,iw), l*HWpad + h*W + w] = wt[c, l, h - ih*stride, w - iw*stride]
    # so the conv-transpose becomes zflat @ Wfull (zero scatter in-kernel).
    Wfull = np.zeros((K, L * HWpad), dtype=np.float32)
    for c in range(C):
        for ih in range(m):
            for iw in range(n):
                row = (c * m + ih) * n + iw
                for l in range(L):
                    for kh in range(ksize):
                        col = l * HWpad + (ih * stride + kh) * W + iw * stride
                        Wfull[row, col:col + ksize] = wt_np[c, l, kh, :]

    bias_row = np.zeros((1, L * HWpad), dtype=np.float32)
    for l in range(L):
        bias_row[0, l * HWpad:l * HWpad + HW] = bias_np[l]

    # NB: the torch module uses a single linspace (implicitly assumes H == W);
    # we build both so the layout stays well-defined (identical when m == n).
    xs_w = np.linspace(-1.0, 1.0, W, dtype=np.float32)
    xs_h = np.linspace(-1.0, 1.0, H, dtype=np.float32)
    xw_row = np.tile(xs_w, H)[None, :]               # (1, HW): xs_w[w]
    xh_row = np.repeat(xs_h, W)[None, :]             # (1, HW): xs_h[h]
    scale_row = dsnt_scale(L)[None, :]               # (1, L)

    # batch folded into MXU rows; bf16 MXU operands, f32 accumulation in-kernel
    zflat = z.reshape(b, K).astype(jnp.bfloat16)
    w_mat = jnp.asarray(Wfull, dtype=jnp.bfloat16)

    kernel = functools.partial(nets_head_kernel, L=L, HW=HW, HWpad=HWpad)

    out_shapes = (
        jax.ShapeDtypeStruct((b, L * HWpad), jnp.float32),   # hm, lane-dense + padded
        jax.ShapeDtypeStruct((4, b, L), jnp.float32),        # [x, y, x*scale, y*scale]
    )

    # Single invocation (no grid): all operands fit VMEM comfortably at these
    # shapes (~1.5 MiB total, single-buffered since nothing is pipelined).
    # TODO(synk): for a real backbone (large C / L) tile batch/L over a grid
    # with dimension_semantics=("parallel", ...) and re-audit VMEM (v7x: 64 MiB).
    hm_flat, pack = pl.pallas_call(
        kernel,
        out_shape=out_shapes,
        scratch_shapes=[
            pltpu.VMEM((b, L * HWpad), jnp.float32),   # pre-softmax activations
            pltpu.VMEM((b, L), jnp.float32),           # x coordinates
            pltpu.VMEM((b, L), jnp.float32),           # y coordinates
        ],
    )(zflat, w_mat, jnp.asarray(bias_row), jnp.asarray(xw_row),
      jnp.asarray(xh_row), jnp.asarray(scale_row))

    hm = hm_flat.reshape(b, L, HWpad)[:, :, :HW].reshape(b, L, H, W)
    centres = jnp.transpose(pack[0:2], (1, 0, 2))     # (b, 2, L)
    logit = jnp.transpose(pack[2:4], (1, 0, 2))       # (b, 2, L)
    return {"logit": logit, "hm": hm, "centres": centres}


# ---------------- pure numpy reference (mirrors the PyTorch forward) -------------
def reference_forward(z, wt, bias, L, ksize=KSIZE):
    z = z.astype(np.float64); wt = wt.astype(np.float64); bias = bias.astype(np.float64)
    b, C, m, n = z.shape
    stride = ksize // 2
    H = (m - 1) * stride + ksize
    W = (n - 1) * stride + ksize
    y = np.zeros((b, L, H, W)) + bias.reshape(1, L, 1, 1)
    for bi in range(b):
        for ih in range(m):
            for iw in range(n):
                contrib = np.einsum('c,clij->lij', z[bi, :, ih, iw], wt)
                y[bi, :, ih * stride:ih * stride + ksize,
                        iw * stride:iw * stride + ksize] += contrib
    yf = y.reshape(b, L, H * W)
    yf = yf - yf.max(axis=2, keepdims=True)
    e = np.exp(yf)
    hm = (e / e.sum(axis=2, keepdims=True)).reshape(b, L, H, W)
    xs = np.linspace(-1.0, 1.0, H)
    x_coord = (hm * xs[None, None, None, :]).sum(axis=(2, 3))
    y_coord = (hm * xs[None, None, :, None]).sum(axis=(2, 3))
    p = np.stack([x_coord, y_coord], axis=1)
    logit = p * dsnt_scale(L).astype(np.float64)[None, None, :]
    return logit.astype(np.float32), hm.astype(np.float32), p.astype(np.float32)


if __name__ == "__main__":
    key = jax.random.PRNGKey(0)
    k1, k2, k3 = jax.random.split(key, 3)

    # small shapes consistent with the module: encoder feature map (b, C, m, n)
    b, C, m, n = 2, 8, 4, 4
    learn_size = 5                      # learnSize (odd, as DSNT_Scale construction requires)

    z = jax.random.normal(k1, (b, C, m, n), jnp.float32)
    fan_in = C * KSIZE * KSIZE
    bound = 1.0 / np.sqrt(fan_in)
    wt = jax.random.uniform(k2, (C, learn_size, KSIZE, KSIZE), jnp.float32, -bound, bound)
    bias = jax.random.uniform(k3, (learn_size,), jnp.float32, -bound, bound)

    out = nets_head_pallas(z, wt, bias, learn_size)
    jax.block_until_ready(out)

    ref_logit, ref_hm, ref_p = reference_forward(np.asarray(z), np.asarray(wt),
                                                 np.asarray(bias), learn_size)
    np.testing.assert_allclose(np.asarray(out["hm"]), ref_hm, rtol=2e-2, atol=1e-4)
    np.testing.assert_allclose(np.asarray(out["centres"]), ref_p, rtol=2e-2, atol=2e-3)
    np.testing.assert_allclose(np.asarray(out["logit"]), ref_logit, rtol=2e-2, atol=5e-3)

    print("KERNEL_OK")
</pallas_src>

<mosaic_0001>
module attributes {stable_mosaic.version = 11 : i64} {
  func.func @nets_head_kernel(%arg0: memref<2x128xbf16, #tpu.memory_space<vmem>>, %arg1: memref<128x5120xbf16, #tpu.memory_space<vmem>>, %arg2: memref<1x5120xf32, #tpu.memory_space<vmem>>, %arg3: memref<1x900xf32, #tpu.memory_space<vmem>>, %arg4: memref<1x900xf32, #tpu.memory_space<vmem>>, %arg5: memref<1x5xf32, #tpu.memory_space<vmem>>, %arg6: memref<2x5120xf32, #tpu.memory_space<vmem>>, %arg7: memref<4x2x5xf32, #tpu.memory_space<vmem>>, %arg8: memref<2x5120xf32, #tpu.memory_space<vmem>>, %arg9: memref<2x5xf32, #tpu.memory_space<vmem>>, %arg10: memref<2x5xf32, #tpu.memory_space<vmem>>) attributes {dimension_semantics = [], scalar_prefetch = 0 : i64, scratch_operands = 3 : i64, tpu.core_type = #tpu.core_type<tc>} {
    %c0 = arith.constant 0 : index
    %c0_0 = arith.constant 0 : index
    %0 = vector.load %arg0[%c0, %c0_0] : memref<2x128xbf16, #tpu.memory_space<vmem>>, vector<2x128xbf16>
    %c0_1 = arith.constant 0 : index
    %c0_2 = arith.constant 0 : index
    %1 = vector.load %arg1[%c0_1, %c0_2] : memref<128x5120xbf16, #tpu.memory_space<vmem>>, vector<128x5120xbf16>
    %cst = arith.constant dense<0.000000e+00> : vector<2x5120xf32>
    %2 = tpu.matmul %0, %1, %cst {dimension_numbers = #tpu.dot_dimension_numbers<[1], [0], [0], [1], [0, 0, 1, 1], [], []>} : vector<2x128xbf16>, vector<128x5120xbf16>, vector<2x5120xf32> -> vector<2x5120xf32>
    %c0_3 = arith.constant 0 : index
    %c0_4 = arith.constant 0 : index
    %3 = vector.load %arg2[%c0_3, %c0_4] : memref<1x5120xf32, #tpu.memory_space<vmem>>, vector<1x5120xf32>
    %4 = vector.broadcast %3 : vector<1x5120xf32> to vector<2x5120xf32>
    %5 = arith.addf %2, %4 : vector<2x5120xf32>
    %c0_5 = arith.constant 0 : index
    %c0_6 = arith.constant 0 : index
    %6 = vector.load %arg8[%c0_5, %c0_6] : memref<2x5120xf32, #tpu.memory_space<vmem>>, vector<2x5120xf32>
    tpu.vector_store %arg8[%c0_5, %c0_6], %5 {strides = array<i32>} : memref<2x5120xf32, #tpu.memory_space<vmem>>, vector<2x5120xf32>,
    %cst_7 = arith.constant 0.000000e+00 : f32
    %7 = vector.broadcast %cst_7 : f32 to vector<2x5120xf32>
    %c0_8 = arith.constant 0 : index
    %c0_9 = arith.constant 0 : index
    %8 = vector.load %arg6[%c0_8, %c0_9] : memref<2x5120xf32, #tpu.memory_space<vmem>>, vector<2x5120xf32>
    tpu.vector_store %arg6[%c0_8, %c0_9], %7 {strides = array<i32>} : memref<2x5120xf32, #tpu.memory_space<vmem>>, vector<2x5120xf32>,
    %c0_10 = arith.constant 0 : index
    %c0_11 = arith.constant 0 : index
    %9 = vector.load %arg3[%c0_10, %c0_11] : memref<1x900xf32, #tpu.memory_space<vmem>>, vector<1x900xf32>
    %c0_12 = arith.constant 0 : index
    %c0_13 = arith.constant 0 : index
    %10 = vector.load %arg4[%c0_12, %c0_13] : memref<1x900xf32, #tpu.memory_space<vmem>>, vector<1x900xf32>
    %c0_14 = arith.constant 0 : index
    %c0_15 = arith.constant 0 : index
    %11 = vector.load %arg8[%c0_14, %c0_15] : memref<2x5120xf32, #tpu.memory_space<vmem>>, vector<2x900xf32>
    %cst_16 = arith.constant dense<0xFF800000> : vector<2xf32>
    %12 = vector.multi_reduction <maximumf>, %11, %cst_16 [1] : vector<2x900xf32> to vector<2xf32>
    %13 = vector.shape_cast %12 : vector<2xf32> to vector<2x1xf32>
    %14 = vector.broadcast %13 : vector<2x1xf32> to vector<2x900xf32>
    %15 = arith.subf %11, %14 : vector<2x900xf32>
    %16 = math.exp %15 : vector<2x900xf32>
    %cst_17 = arith.constant dense<0.000000e+00> : vector<2xf32>
    %17 = vector.multi_reduction <add>, %16, %cst_17 [1] : vector<2x900xf32> to vector<2xf32>
    %18 = vector.shape_cast %17 : vector<2xf32> to vector<2x1xf32>
    %19 = tpu.reciprocal %18 {approx = true} : vector<2x1xf32> -> vector<2x1xf32>
    %20 = vector.broadcast %19 : vector<2x1xf32> to vector<2x900xf32>
    %21 = arith.mulf %16, %20 : vector<2x900xf32>
    %c0_18 = arith.constant 0 : index
    %c0_19 = arith.constant 0 : index
    %22 = vector.load %arg6[%c0_18, %c0_19] : memref<2x5120xf32, #tpu.memory_space<vmem>>, vector<2x900xf32>
    tpu.vector_store %arg6[%c0_18, %c0_19], %21 {strides = array<i32>} : memref<2x5120xf32, #tpu.memory_space<vmem>>, vector<2x900xf32>,
    %23 = vector.broadcast %9 : vector<1x900xf32> to vector<2x900xf32>
    %24 = arith.mulf %16, %23 : vector<2x900xf32>
    %cst_20 = arith.constant dense<0.000000e+00> : vector<2xf32>
    %25 = vector.multi_reduction <add>, %24, %cst_20 [1] : vector<2x900xf32> to vector<2xf32>
    %26 = vector.shape_cast %25 : vector<2xf32> to vector<2x1xf32>
    %27 = arith.divf %26, %18 : vector<2x1xf32>
    %c0_21 = arith.constant 0 : index
    %c0_22 = arith.constant 0 : index
    %28 = vector.load %arg9[%c0_21, %c0_22] : memref<2x5xf32, #tpu.memory_space<vmem>>, vector<2x1xf32>
    tpu.vector_store %arg9[%c0_21, %c0_22], %27 {strides = array<i32>} : memref<2x5xf32, #tpu.memory_space<vmem>>, vector<2x1xf32>,
    %29 = vector.broadcast %10 : vector<1x900xf32> to vector<2x900xf32>
    %30 = arith.mulf %16, %29 : vector<2x900xf32>
    %cst_23 = arith.constant dense<0.000000e+00> : vector<2xf32>
    %31 = vector.multi_reduction <add>, %30, %cst_23 [1] : vector<2x900xf32> to vector<2xf32>
    %32 = vector.shape_cast %31 : vector<2xf32> to vector<2x1xf32>
    %33 = arith.divf %32, %18 : vector<2x1xf32>
    %c0_24 = arith.constant 0 : index
    %c0_25 = arith.constant 0 : index
    %34 = vector.load %arg10[%c0_24, %c0_25] : memref<2x5xf32, #tpu.memory_space<vmem>>, vector<2x1xf32>
    tpu.vector_store %arg10[%c0_24, %c0_25], %33 {strides = array<i32>} : memref<2x5xf32, #tpu.memory_space<vmem>>, vector<2x1xf32>,
    %c0_26 = arith.constant 0 : index
    %c1024 = arith.constant 1024 : index
    %35 = vector.load %arg8[%c0_26, %c1024] : memref<2x5120xf32, #tpu.memory_space<vmem>>, vector<2x900xf32>
    %cst_27 = arith.constant dense<0xFF800000> : vector<2xf32>
    %36 = vector.multi_reduction <maximumf>, %35, %cst_27 [1] : vector<2x900xf32> to vector<2xf32>
    %37 = vector.shape_cast %36 : vector<2xf32> to vector<2x1xf32>
    %38 = vector.broadcast %37 : vector<2x1xf32> to vector<2x900xf32>
    %39 = arith.subf %35, %38 : vector<2x900xf32>
    %40 = math.exp %39 : vector<2x900xf32>
    %cst_28 = arith.constant dense<0.000000e+00> : vector<2xf32>
    %41 = vector.multi_reduction <add>, %40, %cst_28 [1] : vector<2x900xf32> to vector<2xf32>
    %42 = vector.shape_cast %41 : vector<2xf32> to vector<2x1xf32>
    %43 = tpu.reciprocal %42 {approx = true} : vector<2x1xf32> -> vector<2x1xf32>
    %44 = vector.broadcast %43 : vector<2x1xf32> to vector<2x900xf32>
    %45 = arith.mulf %40, %44 : vector<2x900xf32>
    %c0_29 = arith.constant 0 : index
    %c1024_30 = arith.constant 1024 : index
    %46 = vector.load %arg6[%c0_29, %c1024_30] : memref<2x5120xf32, #tpu.memory_space<vmem>>, vector<2x900xf32>
    tpu.vector_store %arg6[%c0_29, %c1024_30], %45 {strides = array<i32>} : memref<2x5120xf32, #tpu.memory_space<vmem>>, vector<2x900xf32>,
    %47 = vector.broadcast %9 : vector<1x900xf32> to vector<2x900xf32>
    %48 = arith.mulf %40, %47 : vector<2x900xf32>
    %cst_31 = arith.constant dense<0.000000e+00> : vector<2xf32>
    %49 = vector.multi_reduction <add>, %48, %cst_31 [1] : vector<2x900xf32> to vector<2xf32>
    %50 = vector.shape_cast %49 : vector<2xf32> to vector<2x1xf32>
    %51 = arith.divf %50, %42 : vector<2x1xf32>
    %c0_32 = arith.constant 0 : index
    %c1 = arith.constant 1 : index
    %52 = vector.load %arg9[%c0_32, %c1] : memref<2x5xf32, #tpu.memory_space<vmem>>, vector<2x1xf32>
    tpu.vector_store %arg9[%c0_32, %c1], %51 {strides = array<i32>} : memref<2x5xf32, #tpu.memory_space<vmem>>, vector<2x1xf32>,
    %53 = vector.broadcast %10 : vector<1x900xf32> to vector<2x900xf32>
    %54 = arith.mulf %40, %53 : vector<2x900xf32>
    %cst_33 = arith.constant dense<0.000000e+00> : vector<2xf32>
    %55 = vector.multi_reduction <add>, %54, %cst_33 [1] : vector<2x900xf32> to vector<2xf32>
    %56 = vector.shape_cast %55 : vector<2xf32> to vector<2x1xf32>
    %57 = arith.divf %56, %42 : vector<2x1xf32>
    %c0_34 = arith.constant 0 : index
    %c1_35 = arith.constant 1 : index
    %58 = vector.load %arg10[%c0_34, %c1_35] : memref<2x5xf32, #tpu.memory_space<vmem>>, vector<2x1xf32>
    tpu.vector_store %arg10[%c0_34, %c1_35], %57 {strides = array<i32>} : memref<2x5xf32, #tpu.memory_space<vmem>>, vector<2x1xf32>,
    %c0_36 = arith.constant 0 : index
    %c2048 = arith.constant 2048 : index
    %59 = vector.load %arg8[%c0_36, %c2048] : memref<2x5120xf32, #tpu.memory_space<vmem>>, vector<2x900xf32>
    %cst_37 = arith.constant dense<0xFF800000> : vector<2xf32>
    %60 = vector.multi_reduction <maximumf>, %59, %cst_37 [1] : vector<2x900xf32> to vector<2xf32>
    %61 = vector.shape_cast %60 : vector<2xf32> to vector<2x1xf32>
    %62 = vector.broadcast %61 : vector<2x1xf32> to vector<2x900xf32>
    %63 = arith.subf %59, %62 : vector<2x900xf32>
    %64 = math.exp %63 : vector<2x900xf32>
    %cst_38 = arith.constant dense<0.000000e+00> : vector<2xf32>
    %65 = vector.multi_reduction <add>, %64, %cst_38 [1] : vector<2x900xf32> to vector<2xf32>
    %66 = vector.shape_cast %65 : vector<2xf32> to vector<2x1xf32>
    %67 = tpu.reciprocal %66 {approx = true} : vector<2x1xf32> -> vector<2x1xf32>
    %68 = vector.broadcast %67 : vector<2x1xf32> to vector<2x900xf32>
    %69 = arith.mulf %64, %68 : vector<2x900xf32>
    %c0_39 = arith.constant 0 : index
    %c2048_40 = arith.constant 2048 : index
    %70 = vector.load %arg6[%c0_39, %c2048_40] : memref<2x5120xf32, #tpu.memory_space<vmem>>, vector<2x900xf32>
    tpu.vector_store %arg6[%c0_39, %c2048_40], %69 {strides = array<i32>} : memref<2x5120xf32, #tpu.memory_space<vmem>>, vector<2x900xf32>,
    %71 = vector.broadcast %9 : vector<1x900xf32> to vector<2x900xf32>
    %72 = arith.mulf %64, %71 : vector<2x900xf32>
    %cst_41 = arith.constant dense<0.000000e+00> : vector<2xf32>
    %73 = vector.multi_reduction <add>, %72, %cst_41 [1] : vector<2x900xf32> to vector<2xf32>
    %74 = vector.shape_cast %73 : vector<2xf32> to vector<2x1xf32>
    %75 = arith.divf %74, %66 : vector<2x1xf32>
    %c0_42 = arith.constant 0 : index
    %c2 = arith.constant 2 : index
    %76 = vector.load %arg9[%c0_42, %c2] : memref<2x5xf32, #tpu.memory_space<vmem>>, vector<2x1xf32>
    tpu.vector_store %arg9[%c0_42, %c2], %75 {strides = array<i32>} : memref<2x5xf32, #tpu.memory_space<vmem>>, vector<2x1xf32>,
    %77 = vector.broadcast %10 : vector<1x900xf32> to vector<2x900xf32>
    %78 = arith.mulf %64, %77 : vector<2x900xf32>
    %cst_43 = arith.constant dense<0.000000e+00> : vector<2xf32>
    %79 = vector.multi_reduction <add>, %78, %cst_43 [1] : vector<2x900xf32> to vector<2xf32>
    %80 = vector.shape_cast %79 : vector<2xf32> to vector<2x1xf32>
    %81 = arith.divf %80, %66 : vector<2x1xf32>
    %c0_44 = arith.constant 0 : index
    %c2_45 = arith.constant 2 : index
    %82 = vector.load %arg10[%c0_44, %c2_45] : memref<2x5xf32, #tpu.memory_space<vmem>>, vector<2x1xf32>
    tpu.vector_store %arg10[%c0_44, %c2_45], %81 {strides = array<i32>} : memref<2x5xf32, #tpu.memory_space<vmem>>, vector<2x1xf32>,
    %c0_46 = arith.constant 0 : index
    %c3072 = arith.constant 3072 : index
    %83 = vector.load %arg8[%c0_46, %c3072] : memref<2x5120xf32, #tpu.memory_space<vmem>>, vector<2x900xf32>
    %cst_47 = arith.constant dense<0xFF800000> : vector<2xf32>
    %84 = vector.multi_reduction <maximumf>, %83, %cst_47 [1] : vector<2x900xf32> to vector<2xf32>
    %85 = vector.shape_cast %84 : vector<2xf32> to vector<2x1xf32>
    %86 = vector.broadcast %85 : vector<2x1xf32> to vector<2x900xf32>
    %87 = arith.subf %83, %86 : vector<2x900xf32>
    %88 = math.exp %87 : vector<2x900xf32>
    %cst_48 = arith.constant dense<0.000000e+00> : vector<2xf32>
    %89 = vector.multi_reduction <add>, %88, %cst_48 [1] : vector<2x900xf32> to vector<2xf32>
    %90 = vector.shape_cast %89 : vector<2xf32> to vector<2x1xf32>
    %91 = tpu.reciprocal %90 {approx = true} : vector<2x1xf32> -> vector<2x1xf32>
    %92 = vector.broadcast %91 : vector<2x1xf32> to vector<2x900xf32>
    %93 = arith.mulf %88, %92 : vector<2x900xf32>
    %c0_49 = arith.constant 0 : index
    %c3072_50 = arith.constant 3072 : index
    %94 = vector.load %arg6[%c0_49, %c3072_50] : memref<2x5120xf32, #tpu.memory_space<vmem>>, vector<2x900xf32>
    tpu.vector_store %arg6[%c0_49, %c3072_50], %93 {strides = array<i32>} : memref<2x5120xf32, #tpu.memory_space<vmem>>, vector<2x900xf32>,
    %95 = vector.broadcast %9 : vector<1x900xf32> to vector<2x900xf32>
    %96 = arith.mulf %88, %95 : vector<2x900xf32>
    %cst_51 = arith.constant dense<0.000000e+00> : vector<2xf32>
    %97 = vector.multi_reduction <add>, %96, %cst_51 [1] : vector<2x900xf32> to vector<2xf32>
    %98 = vector.shape_cast %97 : vector<2xf32> to vector<2x1xf32>
    %99 = arith.divf %98, %90 : vector<2x1xf32>
    %c0_52 = arith.constant 0 : index
    %c3 = arith.constant 3 : index
    %100 = vector.load %arg9[%c0_52, %c3] : memref<2x5xf32, #tpu.memory_space<vmem>>, vector<2x1xf32>
    tpu.vector_store %arg9[%c0_52, %c3], %99 {strides = array<i32>} : memref<2x5xf32, #tpu.memory_space<vmem>>, vector<2x1xf32>,
    %101 = vector.broadcast %10 : vector<1x900xf32> to vector<2x900xf32>
    %102 = arith.mulf %88, %101 : vector<2x900xf32>
    %cst_53 = arith.constant dense<0.000000e+00> : vector<2xf32>
    %103 = vector.multi_reduction <add>, %102, %cst_53 [1] : vector<2x900xf32> to vector<2xf32>
    %104 = vector.shape_cast %103 : vector<2xf32> to vector<2x1xf32>
    %105 = arith.divf %104, %90 : vector<2x1xf32>
    %c0_54 = arith.constant 0 : index
    %c3_55 = arith.constant 3 : index
    %106 = vector.load %arg10[%c0_54, %c3_55] : memref<2x5xf32, #tpu.memory_space<vmem>>, vector<2x1xf32>
    tpu.vector_store %arg10[%c0_54, %c3_55], %105 {strides = array<i32>} : memref<2x5xf32, #tpu.memory_space<vmem>>, vector<2x1xf32>,
    %c0_56 = arith.constant 0 : index
    %c4096 = arith.constant 4096 : index
    %107 = vector.load %arg8[%c0_56, %c4096] : memref<2x5120xf32, #tpu.memory_space<vmem>>, vector<2x900xf32>
    %cst_57 = arith.constant dense<0xFF800000> : vector<2xf32>
    %108 = vector.multi_reduction <maximumf>, %107, %cst_57 [1] : vector<2x900xf32> to vector<2xf32>
    %109 = vector.shape_cast %108 : vector<2xf32> to vector<2x1xf32>
    %110 = vector.broadcast %109 : vector<2x1xf32> to vector<2x900xf32>
    %111 = arith.subf %107, %110 : vector<2x900xf32>
    %112 = math.exp %111 : vector<2x900xf32>
    %cst_58 = arith.constant dense<0.000000e+00> : vector<2xf32>
    %113 = vector.multi_reduction <add>, %112, %cst_58 [1] : vector<2x900xf32> to vector<2xf32>
    %114 = vector.shape_cast %113 : vector<2xf32> to vector<2x1xf32>
    %115 = tpu.reciprocal %114 {approx = true} : vector<2x1xf32> -> vector<2x1xf32>
    %116 = vector.broadcast %115 : vector<2x1xf32> to vector<2x900xf32>
    %117 = arith.mulf %112, %116 : vector<2x900xf32>
    %c0_59 = arith.constant 0 : index
    %c4096_60 = arith.constant 4096 : index
    %118 = vector.load %arg6[%c0_59, %c4096_60] : memref<2x5120xf32, #tpu.memory_space<vmem>>, vector<2x900xf32>
    tpu.vector_store %arg6[%c0_59, %c4096_60], %117 {strides = array<i32>} : memref<2x5120xf32, #tpu.memory_space<vmem>>, vector<2x900xf32>,
    %119 = vector.broadcast %9 : vector<1x900xf32> to vector<2x900xf32>
    %120 = arith.mulf %112, %119 : vector<2x900xf32>
    %cst_61 = arith.constant dense<0.000000e+00> : vector<2xf32>
    %121 = vector.multi_reduction <add>, %120, %cst_61 [1] : vector<2x900xf32> to vector<2xf32>
    %122 = vector.shape_cast %121 : vector<2xf32> to vector<2x1xf32>
    %123 = arith.divf %122, %114 : vector<2x1xf32>
    %c0_62 = arith.constant 0 : index
    %c4 = arith.constant 4 : index
    %124 = vector.load %arg9[%c0_62, %c4] : memref<2x5xf32, #tpu.memory_space<vmem>>, vector<2x1xf32>
    tpu.vector_store %arg9[%c0_62, %c4], %123 {strides = array<i32>} : memref<2x5xf32, #tpu.memory_space<vmem>>, vector<2x1xf32>,
    %125 = vector.broadcast %10 : vector<1x900xf32> to vector<2x900xf32>
    %126 = arith.mulf %112, %125 : vector<2x900xf32>
    %cst_63 = arith.constant dense<0.000000e+00> : vector<2xf32>
    %127 = vector.multi_reduction <add>, %126, %cst_63 [1] : vector<2x900xf32> to vector<2xf32>
    %128 = vector.shape_cast %127 : vector<2xf32> to vector<2x1xf32>
    %129 = arith.divf %128, %114 : vector<2x1xf32>
    %c0_64 = arith.constant 0 : index
    %c4_65 = arith.constant 4 : index
    %130 = vector.load %arg10[%c0_64, %c4_65] : memref<2x5xf32, #tpu.memory_space<vmem>>, vector<2x1xf32>
    tpu.vector_store %arg10[%c0_64, %c4_65], %129 {strides = array<i32>} : memref<2x5xf32, #tpu.memory_space<vmem>>, vector<2x1xf32>,
    %c0_66 = arith.constant 0 : index
    %c0_67 = arith.constant 0 : index
    %131 = vector.load %arg9[%c0_66, %c0_67] : memref<2x5xf32, #tpu.memory_space<vmem>>, vector<2x5xf32>
    %c0_68 = arith.constant 0 : index
    %c0_69 = arith.constant 0 : index
    %132 = vector.load %arg10[%c0_68, %c0_69] : memref<2x5xf32, #tpu.memory_space<vmem>>, vector<2x5xf32>
    %c0_70 = arith.constant 0 : index
    %c0_71 = arith.constant 0 : index
    %133 = vector.load %arg5[%c0_70, %c0_71] : memref<1x5xf32, #tpu.memory_space<vmem>>, vector<1x5xf32>
    %c0_72 = arith.constant 0 : index
    %c0_73 = arith.constant 0 : index
    %c0_74 = arith.constant 0 : index
    %134 = vector.load %arg7[%c0_72, %c0_73, %c0_74] : memref<4x2x5xf32, #tpu.memory_space<vmem>>, vector<1x2x5xf32>
    %135 = vector.shape_cast %134 : vector<1x2x5xf32> to vector<2x5xf32>
    %136 = vector.shape_cast %131 : vector<2x5xf32> to vector<1x2x5xf32>
    tpu.vector_store %arg7[%c0_72, %c0_73, %c0_74], %136 {strides = array<i32>} : memref<4x2x5xf32, #tpu.memory_space<vmem>>, vector<1x2x5xf32>,
    %c1_75 = arith.constant 1 : index
    %c0_76 = arith.constant 0 : index
    %c0_77 = arith.constant 0 : index
    %137 = vector.load %arg7[%c1_75, %c0_76, %c0_77] : memref<4x2x5xf32, #tpu.memory_space<vmem>>, vector<1x2x5xf32>
    %138 = vector.shape_cast %137 : vector<1x2x5xf32> to vector<2x5xf32>
    %139 = vector.shape_cast %132 : vector<2x5xf32> to vector<1x2x5xf32>
    tpu.vector_store %arg7[%c1_75, %c0_76, %c0_77], %139 {strides = array<i32>} : memref<4x2x5xf32, #tpu.memory_space<vmem>>, vector<1x2x5xf32>,
    %140 = vector.broadcast %133 : vector<1x5xf32> to vector<2x5xf32>
    %141 = arith.mulf %131, %140 : vector<2x5xf32>
    %c2_78 = arith.constant 2 : index
    %c0_79 = arith.constant 0 : index
    %c0_80 = arith.constant 0 : index
    %142 = vector.load %arg7[%c2_78, %c0_79, %c0_80] : memref<4x2x5xf32, #tpu.memory_space<vmem>>, vector<1x2x5xf32>
    %143 = vector.shape_cast %142 : vector<1x2x5xf32> to vector<2x5xf32>
    %144 = vector.shape_cast %141 : vector<2x5xf32> to vector<1x2x5xf32>
    tpu.vector_store %arg7[%c2_78, %c0_79, %c0_80], %144 {strides = array<i32>} : memref<4x2x5xf32, #tpu.memory_space<vmem>>, vector<1x2x5xf32>,
    %145 = vector.broadcast %133 : vector<1x5xf32> to vector<2x5xf32>
    %146 = arith.mulf %132, %145 : vector<2x5xf32>
    %c3_81 = arith.constant 3 : index
    %c0_82 = arith.constant 0 : index
    %c0_83 = arith.constant 0 : index
    %147 = vector.load %arg7[%c3_81, %c0_82, %c0_83] : memref<4x2x5xf32, #tpu.memory_space<vmem>>, vector<1x2x5xf32>
    %148 = vector.shape_cast %147 : vector<1x2x5xf32> to vector<2x5xf32>
    %149 = vector.shape_cast %146 : vector<2x5xf32> to vector<1x2x5xf32>
    tpu.vector_store %arg7[%c3_81, %c0_82, %c0_83], %149 {strides = array<i32>} : memref<4x2x5xf32, #tpu.memory_space<vmem>>, vector<1x2x5xf32>,
    return
  }
}

</mosaic_0001>

<llo_original>
// kernel: tpu_custom_call.1
$region0: #{tpu_custom_call.1}
  #allocation0 [shape = 'u32[]', space=smem, size = 0x4, offset = 0x4, fixed_abs, tag = 'smem constant byte address 0x4 - core index']
  #allocation1 [shape = 'u32[144,128]{1,0:T(1,128)}', space=vmem, size = 0x12000, scoped, tag = 'internal scratch']
  #allocation2 [shape = 'f32[2,5120]{1,0:T(2,128)}', space=vmem, size = 0xa000, scoped, tag = 'scratch operand']
  #allocation3 [shape = 'f32[2,5]{1,0:T(2,128)}', space=vmem, size = 0x400, scoped, tag = 'scratch operand']
  #allocation4 [shape = 'f32[2,5]{1,0:T(2,128)}', space=vmem, size = 0x400, scoped, tag = 'scratch operand']
  %s0 = inlined_call_operand.hbm [shape: bf16[2,128], index: 0, kind: input, shape index: {}]
  %s1 = inlined_call_operand.hbm [shape: bf16[128,5120], index: 1, kind: input, shape index: {}]
  %s2 = inlined_call_operand.hbm [shape: f32[1,5120], index: 2, kind: input, shape index: {}]
  %s3 = inlined_call_operand.hbm [shape: f32[1,900], index: 3, kind: input, shape index: {}]
  %s4 = inlined_call_operand.hbm [shape: f32[1,900], index: 4, kind: input, shape index: {}]
  %s5 = inlined_call_operand.hbm [shape: f32[1,5], index: 5, kind: input, shape index: {}]
  %s6 = inlined_call_operand.hbm [shape: f32[2,5120], index: 6, kind: output, shape index: {0}]
  %s7 = inlined_call_operand.hbm [shape: f32[4,2,5], index: 7, kind: output, shape index: {1}]
  %8 = xla_tuple %s6, %s7
  %s9 = sld [smem:[#allocation0]]
  $region66: #{tpu_custom_call.1} parent=0
    _
  %s11 = ssub.s32 1, %s9
  %s12 = scalar_select 0, %s11, %s9
  $region1: #{tpu_custom_call.1} parent=0
    #allocation5 [shape = 'u8[512]{0}', space=vmem, size = 0x400, scoped, tag = 'input window, operand 0, single buffered']
    #allocation6 [shape = 's32[1]{0}', space=sflag, size = 0x4, scoped, tag = 'scoped memory for tpu_custom_call.1']
    #allocation7 [shape = 's32[1]{0}', space=sflag, size = 0x4, scoped, tag = 'scoped memory for tpu_custom_call.1']
    #allocation8 [shape = 'u8[1310720]{0}', space=vmem, size = 0x140000, scoped, tag = 'input window, operand 1, single buffered']
    #allocation9 [shape = 's32[1]{0}', space=sflag, size = 0x4, scoped, tag = 'scoped memory for tpu_custom_call.1']
    #allocation10 [shape = 'u8[20480]{0}', space=vmem, size = 0x5000, scoped, tag = 'input window, operand 2, single buffered']
    #allocation11 [shape = 'u8[4096]{0}', space=vmem, size = 0x1000, scoped, tag = 'input window, operand 3, single buffered']
    #allocation12 [shape = 's32[1]{0}', space=sflag, size = 0x4, scoped, tag = 'scoped memory for tpu_custom_call.1']
    #allocation13 [shape = 'u8[4096]{0}', space=vmem, size = 0x1000, scoped, tag = 'input window, operand 4, single buffered']
    #allocation14 [shape = 'u8[512]{0}', space=vmem, size = 0x400, scoped, tag = 'input window, operand 5, single buffered']
    #allocation15 [shape = 's32[1]{0}', space=sflag, size = 0x4, scoped, tag = 'scoped memory for tpu_custom_call.1']
    #allocation16 [shape = 'u8[40960]{0}', space=vmem, size = 0xa000, scoped, tag = 'output window, operand 0, single buffered']
    #allocation17 [shape = 'u8[4096]{0}', space=vmem, size = 0x1000, scoped, tag = 'output window, operand 1, single buffered']
    #allocation18 [shape = 's32[1]{0}', space=sflag, size = 0x4, scoped, tag = 'scoped memory for tpu_custom_call.1']
    %13 = vsyncpa [#allocation6], 0
    %14 = vsyncpa [#allocation9], 0
    %15 = vsyncpa [#allocation12], 0
    %16 = vsyncpa [#allocation15], 0
    %17 = vsyncpa [#allocation7], 0
    %18 = vsyncpa [#allocation18], 0
    // Predicated region
    $region2: #{tpu_custom_call.1} parent=1 // pred_check
      _
    $region3: #{tpu_custom_call.1} parent=1 // pred_check_branch
      %20 = sbr.rel (0) target = $region5
    $region4: #{tpu_custom_call.1} parent=1 // pred_region
      %s22 = ssub.s32 16, 16
      %23 = vsyncadd [#allocation6], %s22
      %s25 = sshll.u32 [#allocation5], 4
      %s26 = int_to_ptr.vmem [resolvable:$true] %s25
      %28 = dma.hbm_to_vmem [thread:$0]  %s0, 16, %s26, [#allocation6]
    $region5: #{tpu_custom_call.1} parent=1 // pred_fallthru
      _
    // Predicated region
    $region6: #{tpu_custom_call.1} parent=1 // pred_check
      _
    $region7: #{tpu_custom_call.1} parent=1 // pred_check_branch
      %30 = sbr.rel (0) target = $region9
    $region8: #{tpu_custom_call.1} parent=1 // pred_region
      %s32 = ssub.s32 40960, 40960
      %33 = vsyncadd [#allocation9], %s32
      %s34 = sshll.u32 [#allocation8], 4
      %s35 = int_to_ptr.vmem [resolvable:$true] %s34
      %40 = dma.hbm_to_vmem [thread:$0]  %s1, 40960, %s35, [#allocation9], 2560, 2560, 160
    $region9: #{tpu_custom_call.1} parent=1 // pred_fallthru
      _
    // Predicated region
    $region10: #{tpu_custom_call.1} parent=1 // pred_check
      _
    $region11: #{tpu_custom_call.1} parent=1 // pred_check_branch
      %42 = sbr.rel (0) target = $region13
    $region12: #{tpu_custom_call.1} parent=1 // pred_region
      %s44 = ssub.s32 640, 640
      %45 = vsyncadd [#allocation9], %s44
      %s47 = sshll.u32 [#allocation10], 4
      %s48 = int_to_ptr.vmem [resolvable:$true] %s47
      %50 = dma.hbm_to_vmem [thread:$0]  %s2, 640, %s48, [#allocation9]
    $region13: #{tpu_custom_call.1} parent=1 // pred_fallthru
      _
    // Predicated region
    $region14: #{tpu_custom_call.1} parent=1 // pred_check
      _
    $region15: #{tpu_custom_call.1} parent=1 // pred_check_branch
      %52 = sbr.rel (0) target = $region17
    $region16: #{tpu_custom_call.1} parent=1 // pred_region
      %s54 = ssub.s32 128, 128
      %55 = vsyncadd [#allocation12], %s54
      %s57 = sshll.u32 [#allocation11], 4
      %s58 = int_to_ptr.vmem [resolvable:$true] %s57
      %60 = dma.hbm_to_vmem [thread:$0]  %s3, 128, %s58, [#allocation12]
    $region17: #{tpu_custom_call.1} parent=1 // pred_fallthru
      _
    // Predicated region
    $region18: #{tpu_custom_call.1} parent=1 // pred_check
      _
    $region19: #{tpu_custom_call.1} parent=1 // pred_check_branch
      %62 = sbr.rel (0) target = $region21
    $region20: #{tpu_custom_call.1} parent=1 // pred_region
      %s64 = ssub.s32 128, 128
      %65 = vsyncadd [#allocation12], %s64
      %s67 = sshll.u32 [#allocation13], 4
      %s68 = int_to_ptr.vmem [resolvable:$true] %s67
      %70 = dma.hbm_to_vmem [thread:$0]  %s4, 128, %s68, [#allocation12]
    $region21: #{tpu_custom_call.1} parent=1 // pred_fallthru
      _
    // Predicated region
    $region22: #{tpu_custom_call.1} parent=1 // pred_check
      _
    $region23: #{tpu_custom_call.1} parent=1 // pred_check_branch
      %72 = sbr.rel (0) target = $region25
    $region24: #{tpu_custom_call.1} parent=1 // pred_region
      %s74 = ssub.s32 16, 16
      %75 = vsyncadd [#allocation15], %s74
      %s77 = sshll.u32 [#allocation14], 4
      %s78 = int_to_ptr.vmem [resolvable:$true] %s77
      %80 = dma.hbm_to_vmem [thread:$0]  %s5, 16, %s78, [#allocation15]
    $region25: #{tpu_custom_call.1} parent=1 // pred_fallthru
      _
    // Predicated region
    $region26: #{tpu_custom_call.1} parent=1 // pred_check
      _
    $region27: #{tpu_custom_call.1} parent=1 // pred_check_branch
      %82 = sbr.rel (0) target = $region29
    $region28: #{tpu_custom_call.1} parent=1 // pred_region
      %83 = dma.done [#allocation6], 16
    $region29: #{tpu_custom_call.1} parent=1 // pred_fallthru
      _
    // Predicated region
    $region30: #{tpu_custom_call.1} parent=1 // pred_check
      _
    $region31: #{tpu_custom_call.1} parent=1 // pred_check_branch
      %85 = sbr.rel (0) target = $region33
    $region32: #{tpu_custom_call.1} parent=1 // pred_region
      %86 = dma.done [#allocation9], 40960
    $region33: #{tpu_custom_call.1} parent=1 // pred_fallthru
      _
    // Predicated region
    $region34: #{tpu_custom_call.1} parent=1 // pred_check
      _
    $region35: #{tpu_custom_call.1} parent=1 // pred_check_branch
      %88 = sbr.rel (0) target = $region37
    $region36: #{tpu_custom_call.1} parent=1 // pred_region
      %89 = dma.done [#allocation9], 640
    $region37: #{tpu_custom_call.1} parent=1 // pred_fallthru
      _
    // Predicated region
    $region38: #{tpu_custom_call.1} parent=1 // pred_check
      _
    $region39: #{tpu_custom_call.1} parent=1 // pred_check_branch
      %91 = sbr.rel (0) target = $region41
    $region40: #{tpu_custom_call.1} parent=1 // pred_region
      %92 = dma.done [#allocation12], 128
    $region41: #{tpu_custom_call.1} parent=1 // pred_fallthru
      _
    // Predicated region
    $region42: #{tpu_custom_call.1} parent=1 // pred_check
      _
    $region43: #{tpu_custom_call.1} parent=1 // pred_check_branch
      %94 = sbr.rel (0) target = $region45
    $region44: #{tpu_custom_call.1} parent=1 // pred_region
      %95 = dma.done [#allocation12], 128
    $region45: #{tpu_custom_call.1} parent=1 // pred_fallthru
      _
    // Predicated region
    $region46: #{tpu_custom_call.1} parent=1 // pred_check
      _
    $region47: #{tpu_custom_call.1} parent=1 // pred_check_branch
      %97 = sbr.rel (0) target = $region49
    $region48: #{tpu_custom_call.1} parent=1 // pred_region
      %98 = dma.done [#allocation15], 16
    $region49: #{tpu_custom_call.1} parent=1 // pred_fallthru
      _
    %v100 = vld [vmem:[#allocation5] sm:$0x1]
    %v101 = vld [vmem:[#allocation8] sm:$0xff]
    %v102 = vld [vmem:[#allocation8 + $0x8] sm:$0xff]
    %v103 = vld [vmem:[#allocation8 + $0x10] sm:$0xff]
    %v104 = vld [vmem:[#allocation8 + $0x18] sm:$0xff]
    %v105 = vld [vmem:[#allocation8 + $0x20] sm:$0xff]
    %v106 = vld [vmem:[#allocation8 + $0x28] sm:$0xff]
    %v107 = vld [vmem:[#allocation8 + $0x30] sm:$0xff]
    %v108 = vld [vmem:[#allocation8 + $0x38] sm:$0xff]
    %v109 = vld [vmem:[#allocation8 + $0x40] sm:$0xff]
    %v110 = vld [vmem:[#allocation8 + $0x48] sm:$0xff]
    %v111 = vld [vmem:[#allocation8 + $0x50] sm:$0xff]
    %v112 = vld [vmem:[#allocation8 + $0x58] sm:$0xff]
    %v113 = vld [vmem:[#allocation8 + $0x60] sm:$0xff]
    %v114 = vld [vmem:[#allocation8 + $0x68] sm:$0xff]
    %v115 = vld [vmem:[#allocation8 + $0x70] sm:$0xff]
    %v116 = vld [vmem:[#allocation8 + $0x78] sm:$0xff]
    %v117 = vld [vmem:[#allocation8 + $0x80] sm:$0xff]
    %v118 = vld [vmem:[#allocation8 + $0x88] sm:$0xff]
    %v119 = vld [vmem:[#allocation8 + $0x90] sm:$0xff]
    %v120 = vld [vmem:[#allocation8 + $0x98] sm:$0xff]
    %v121 = vld [vmem:[#allocation8 + $0xa0] sm:$0xff]
    %v122 = vld [vmem:[#allocation8 + $0xa8] sm:$0xff]
    %v123 = vld [vmem:[#allocation8 + $0xb0] sm:$0xff]
    %v124 = vld [vmem:[#allocation8 + $0xb8] sm:$0xff]
    %v125 = vld [vmem:[#allocation8 + $0xc0] sm:$0xff]
    %v126 = vld [vmem:[#allocation8 + $0xc8] sm:$0xff]
    %v127 = vld [vmem:[#allocation8 + $0xd0] sm:$0xff]
    %v128 = vld [vmem:[#allocation8 + $0xd8] sm:$0xff]
    %v129 = vld [vmem:[#allocation8 + $0xe0] sm:$0xff]
    %v130 = vld [vmem:[#allocation8 + $0xe8] sm:$0xff]
    %v131 = vld [vmem:[#allocation8 + $0xf0] sm:$0xff]
    %v132 = vld [vmem:[#allocation8 + $0xf8] sm:$0xff]
    %v133 = vld [vmem:[#allocation8 + $0x100] sm:$0xff]
    %v134 = vld [vmem:[#allocation8 + $0x108] sm:$0xff]
    %v135 = vld [vmem:[#allocation8 + $0x110] sm:$0xff]
    %v136 = vld [vmem:[#allocation8 + $0x118] sm:$0xff]
    %v137 = vld [vmem:[#allocation8 + $0x120] sm:$0xff]
    %v138 = vld [vmem:[#allocation8 + $0x128] sm:$0xff]
    %v139 = vld [vmem:[#allocation8 + $0x130] sm:$0xff]
    %v140 = vld [vmem:[#allocation8 + $0x138] sm:$0xff]
    %v141 = vld [vmem:[#allocation8 + $0x140] sm:$0xff]
    %v142 = vld [vmem:[#allocation8 + $0x148] sm:$0xff]
    %v143 = vld [vmem:[#allocation8 + $0x150] sm:$0xff]
    %v144 = vld [vmem:[#allocation8 + $0x158] sm:$0xff]
    %v145 = vld [vmem:[#allocation8 + $0x160] sm:$0xff]
    %v146 = vld [vmem:[#allocation8 + $0x168] sm:$0xff]
    %v147 = vld [vmem:[#allocation8 + $0x170] sm:$0xff]
    %v148 = vld [vmem:[#allocation8 + $0x178] sm:$0xff]
    %v149 = vld [vmem:[#allocation8 + $0x180] sm:$0xff]
    %v150 = vld [vmem:[#allocation8 + $0x188] sm:$0xff]
    %v151 = vld [vmem:[#allocation8 + $0x190] sm:$0xff]
    %v152 = vld [vmem:[#allocation8 + $0x198] sm:$0xff]
    %v153 = vld [vmem:[#allocation8 + $0x1a0] sm:$0xff]
    %v154 = vld [vmem:[#allocation8 + $0x1a8] sm:$0xff]
    %v155 = vld [vmem:[#allocation8 + $0x1b0] sm:$0xff]
    %v156 = vld [vmem:[#allocation8 + $0x1b8] sm:$0xff]
    %v157 = vld [vmem:[#allocation8 + $0x1c0] sm:$0xff]
    %v158 = vld [vmem:[#allocation8 + $0x1c8] sm:$0xff]
    %v159 = vld [vmem:[#allocation8 + $0x1d0] sm:$0xff]
    %v160 = vld [vmem:[#allocation8 + $0x1d8] sm:$0xff]
    %v161 = vld [vmem:[#allocation8 + $0x1e0] sm:$0xff]
    %v162 = vld [vmem:[#allocation8 + $0x1e8] sm:$0xff]
    %v163 = vld [vmem:[#allocation8 + $0x1f0] sm:$0xff]
    %v164 = vld [vmem:[#allocation8 + $0x1f8] sm:$0xff]
    %v165 = vld [vmem:[#allocation8 + $0x200] sm:$0xff]
    %v166 = vld [vmem:[#allocation8 + $0x208] sm:$0xff]
    %v167 = vld [vmem:[#allocation8 + $0x210] sm:$0xff]
    %v168 = vld [vmem:[#allocation8 + $0x218] sm:$0xff]
    %v169 = vld [vmem:[#allocation8 + $0x220] sm:$0xff]
    %v170 = vld [vmem:[#allocation8 + $0x228] sm:$0xff]
    %v171 = vld [vmem:[#allocation8 + $0x230] sm:$0xff]
    %v172 = vld [vmem:[#allocation8 + $0x238] sm:$0xff]
    %v173 = vld [vmem:[#allocation8 + $0x240] sm:$0xff]
    %v174 = vld [vmem:[#allocation8 + $0x248] sm:$0xff]
    %v175 = vld [vmem:[#allocation8 + $0x250] sm:$0xff]
    %v176 = vld [vmem:[#allocation8 + $0x258] sm:$0xff]
    %v177 = vld [vmem:[#allocation8 + $0x260] sm:$0xff]
    %v178 = vld [vmem:[#allocation8 + $0x268] sm:$0xff]
    %v179 = vld [vmem:[#allocation8 + $0x270] sm:$0xff]
    %v180 = vld [vmem:[#allocation8 + $0x278] sm:$0xff]
    %v181 = vld [vmem:[#allocation8 + $0x280] sm:$0xff]
    %v182 = vld [vmem:[#allocation8 + $0x288] sm:$0xff]
    %v183 = vld [vmem:[#allocation8 + $0x290] sm:$0xff]
    %v184 = vld [vmem:[#allocation8 + $0x298] sm:$0xff]
    %v185 = vld [vmem:[#allocation8 + $0x2a0] sm:$0xff]
    %v186 = vld [vmem:[#allocation8 + $0x2a8] sm:$0xff]
    %v187 = vld [vmem:[#allocation8 + $0x2b0] sm:$0xff]
    %v188 = vld [vmem:[#allocation8 + $0x2b8] sm:$0xff]
    %v189 = vld [vmem:[#allocation8 + $0x2c0] sm:$0xff]
    %v190 = vld [vmem:[#allocation8 + $0x2c8] sm:$0xff]
    %v191 = vld [vmem:[#allocation8 + $0x2d0] sm:$0xff]
    %v192 = vld [vmem:[#allocation8 + $0x2d8] sm:$0xff]
    %v193 = vld [vmem:[#allocation8 + $0x2e0] sm:$0xff]
    %v194 = vld [vmem:[#allocation8 + $0x2e8] sm:$0xff]
    %v195 = vld [vmem:[#allocation8 + $0x2f0] sm:$0xff]
    %v196 = vld [vmem:[#allocation8 + $0x2f8] sm:$0xff]
    %v197 = vld [vmem:[#allocation8 + $0x300] sm:$0xff]
    %v198 = vld [vmem:[#allocation8 + $0x308] sm:$0xff]
    %v199 = vld [vmem:[#allocation8 + $0x310] sm:$0xff]
    %v200 = vld [vmem:[#allocation8 + $0x318] sm:$0xff]
    %v201 = vld [vmem:[#allocation8 + $0x320] sm:$0xff]
    %v202 = vld [vmem:[#allocation8 + $0x328] sm:$0xff]
    %v203 = vld [vmem:[#allocation8 + $0x330] sm:$0xff]
    %v204 = vld [vmem:[#allocation8 + $0x338] sm:$0xff]
    %v205 = vld [vmem:[#allocation8 + $0x340] sm:$0xff]
    %v206 = vld [vmem:[#allocation8 + $0x348] sm:$0xff]
    %v207 = vld [vmem:[#allocation8 + $0x350] sm:$0xff]
    %v208 = vld [vmem:[#allocation8 + $0x358] sm:$0xff]
    %v209 = vld [vmem:[#allocation8 + $0x360] sm:$0xff]
    %v210 = vld [vmem:[#allocation8 + $0x368] sm:$0xff]
    %v211 = vld [vmem:[#allocation8 + $0x370] sm:$0xff]
    %v212 = vld [vmem:[#allocation8 + $0x378] sm:$0xff]
    %v213 = vld [vmem:[#allocation8 + $0x380] sm:$0xff]
    %v214 = vld [vmem:[#allocation8 + $0x388] sm:$0xff]
    %v215 = vld [vmem:[#allocation8 + $0x390] sm:$0xff]
    %v216 = vld [vmem:[#allocation8 + $0x398] sm:$0xff]
    %v217 = vld [vmem:[#allocation8 + $0x3a0] sm:$0xff]
    %v218 = vld [vmem:[#allocation8 + $0x3a8] sm:$0xff]
    %v219 = vld [vmem:[#allocation8 + $0x3b0] sm:$0xff]
    %v220 = vld [vmem:[#allocation8 + $0x3b8] sm:$0xff]
    %v221 = vld [vmem:[#allocation8 + $0x3c0] sm:$0xff]
    %v222 = vld [vmem:[#allocation8 + $0x3c8] sm:$0xff]
    %v223 = vld [vmem:[#allocation8 + $0x3d0] sm:$0xff]
    %v224 = vld [vmem:[#allocation8 + $0x3d8] sm:$0xff]
    %v225 = vld [vmem:[#allocation8 + $0x3e0] sm:$0xff]
    %v226 = vld [vmem:[#allocation8 + $0x3e8] sm:$0xff]
    %v227 = vld [vmem:[#allocation8 + $0x3f0] sm:$0xff]
    %v228 = vld [vmem:[#allocation8 + $0x3f8] sm:$0xff]
    %v229 = vld [vmem:[#allocation8 + $0x400] sm:$0xff]
    %v230 = vld [vmem:[#allocation8 + $0x408] sm:$0xff]
    %v231 = vld [vmem:[#allocation8 + $0x410] sm:$0xff]
    %v232 = vld [vmem:[#allocation8 + $0x418] sm:$0xff]
    %v233 = vld [vmem:[#allocation8 + $0x420] sm:$0xff]
    %v234 = vld [vmem:[#allocation8 + $0x428] sm:$0xff]
    %v235 = vld [vmem:[#allocation8 + $0x430] sm:$0xff]
    %v236 = vld [vmem:[#allocation8 + $0x438] sm:$0xff]
    %v237 = vld [vmem:[#allocation8 + $0x440] sm:$0xff]
    %v238 = vld [vmem:[#allocation8 + $0x448] sm:$0xff]
    %v239 = vld [vmem:[#allocation8 + $0x450] sm:$0xff]
    %v240 = vld [vmem:[#allocation8 + $0x458] sm:$0xff]
    %v241 = vld [vmem:[#allocation8 + $0x460] sm:$0xff]
    %v242 = vld [vmem:[#allocation8 + $0x468] sm:$0xff]
    %v243 = vld [vmem:[#allocation8 + $0x470] sm:$0xff]
    %v244 = vld [vmem:[#allocation8 + $0x478] sm:$0xff]
    %v245 = vld [vmem:[#allocation8 + $0x480] sm:$0xff]
    %v246 = vld [vmem:[#allocation8 + $0x488] sm:$0xff]
    %v247 = vld [vmem:[#allocation8 + $0x490] sm:$0xff]
    %v248 = vld [vmem:[#allocation8 + $0x498] sm:$0xff]
    %v249 = vld [vmem:[#allocation8 + $0x4a0] sm:$0xff]
    %v250 = vld [vmem:[#allocation8 + $0x4a8] sm:$0xff]
    %v251 = vld [vmem:[#allocation8 + $0x4b0] sm:$0xff]
    %v252 = vld [vmem:[#allocation8 + $0x4b8] sm:$0xff]
    %v253 = vld [vmem:[#allocation8 + $0x4c0] sm:$0xff]
    %v254 = vld [vmem:[#allocation8 + $0x4c8] sm:$0xff]
    %v255 = vld [vmem:[#allocation8 + $0x4d0] sm:$0xff]
    %v256 = vld [vmem:[#allocation8 + $0x4d8] sm:$0xff]
    %v257 = vld [vmem:[#allocation8 + $0x4e0] sm:$0xff]
    %v258 = vld [vmem:[#allocation8 + $0x4e8] sm:$0xff]
    %v259 = vld [vmem:[#allocation8 + $0x4f0] sm:$0xff]
    %v260 = vld [vmem:[#allocation8 + $0x4f8] sm:$0xff]
    %v261 = vld [vmem:[#allocation8 + $0x500] sm:$0xff]
    %v262 = vld [vmem:[#allocation8 + $0x508] sm:$0xff]
    %v263 = vld [vmem:[#allocation8 + $0x510] sm:$0xff]
    %v264 = vld [vmem:[#allocation8 + $0x518] sm:$0xff]
    %v265 = vld [vmem:[#allocation8 + $0x520] sm:$0xff]
    %v266 = vld [vmem:[#allocation8 + $0x528] sm:$0xff]
    %v267 = vld [vmem:[#allocation8 + $0x530] sm:$0xff]
    %v268 = vld [vmem:[#allocation8 + $0x538] sm:$0xff]
    %v269 = vld [vmem:[#allocation8 + $0x540] sm:$0xff]
    %v270 = vld [vmem:[#allocation8 + $0x548] sm:$0xff]
    %v271 = vld [vmem:[#allocation8 + $0x550] sm:$0xff]
    %v272 = vld [vmem:[#allocation8 + $0x558] sm:$0xff]
    %v273 = vld [vmem:[#allocation8 + $0x560] sm:$0xff]
    %v274 = vld [vmem:[#allocation8 + $0x568] sm:$0xff]
    %v275 = vld [vmem:[#allocation8 + $0x570] sm:$0xff]
    %v276 = vld [vmem:[#allocation8 + $0x578] sm:$0xff]
    %v277 = vld [vmem:[#allocation8 + $0x580] sm:$0xff]
    %v278 = vld [vmem:[#allocation8 + $0x588] sm:$0xff]
    %v279 = vld [vmem:[#allocation8 + $0x590] sm:$0xff]
    %v280 = vld [vmem:[#allocation8 + $0x598] sm:$0xff]
    %v281 = vld [vmem:[#allocation8 + $0x5a0] sm:$0xff]
    %v282 = vld [vmem:[#allocation8 + $0x5a8] sm:$0xff]
    %v283 = vld [vmem:[#allocation8 + $0x5b0] sm:$0xff]
    %v284 = vld [vmem:[#allocation8 + $0x5b8] sm:$0xff]
    %v285 = vld [vmem:[#allocation8 + $0x5c0] sm:$0xff]
    %v286 = vld [vmem:[#allocation8 + $0x5c8] sm:$0xff]
    %v287 = vld [vmem:[#allocation8 + $0x5d0] sm:$0xff]
    %v288 = vld [vmem:[#allocation8 + $0x5d8] sm:$0xff]
    %v289 = vld [vmem:[#allocation8 + $0x5e0] sm:$0xff]
    %v290 = vld [vmem:[#allocation8 + $0x5e8] sm:$0xff]
    %v291 = vld [vmem:[#allocation8 + $0x5f0] sm:$0xff]
    %v292 = vld [vmem:[#allocation8 + $0x5f8] sm:$0xff]
    %v293 = vld [vmem:[#allocation8 + $0x600] sm:$0xff]
    %v294 = vld [vmem:[#allocation8 + $0x608] sm:$0xff]
    %v295 = vld [vmem:[#allocation8 + $0x610] sm:$0xff]
    %v296 = vld [vmem:[#allocation8 + $0x618] sm:$0xff]
    %v297 = vld [vmem:[#allocation8 + $0x620] sm:$0xff]
    %v298 = vld [vmem:[#allocation8 + $0x628] sm:$0xff]
    %v299 = vld [vmem:[#allocation8 + $0x630] sm:$0xff]
    %v300 = vld [vmem:[#allocation8 + $0x638] sm:$0xff]
    %v301 = vld [vmem:[#allocation8 + $0x640] sm:$0xff]
    %v302 = vld [vmem:[#allocation8 + $0x648] sm:$0xff]
    %v303 = vld [vmem:[#allocation8 + $0x650] sm:$0xff]
    %v304 = vld [vmem:[#allocation8 + $0x658] sm:$0xff]
    %v305 = vld [vmem:[#allocation8 + $0x660] sm:$0xff]
    %v306 = vld [vmem:[#allocation8 + $0x668] sm:$0xff]
    %v307 = vld [vmem:[#allocation8 + $0x670] sm:$0xff]
    %v308 = vld [vmem:[#allocation8 + $0x678] sm:$0xff]
    %v309 = vld [vmem:[#allocation8 + $0x680] sm:$0xff]
    %v310 = vld [vmem:[#allocation8 + $0x688] sm:$0xff]
    %v311 = vld [vmem:[#allocation8 + $0x690] sm:$0xff]
    %v312 = vld [vmem:[#allocation8 + $0x698] sm:$0xff]
    %v313 = vld [vmem:[#allocation8 + $0x6a0] sm:$0xff]
    %v314 = vld [vmem:[#allocation8 + $0x6a8] sm:$0xff]
    %v315 = vld [vmem:[#allocation8 + $0x6b0] sm:$0xff]
    %v316 = vld [vmem:[#allocation8 + $0x6b8] sm:$0xff]
    %v317 = vld [vmem:[#allocation8 + $0x6c0] sm:$0xff]
    %v318 = vld [vmem:[#allocation8 + $0x6c8] sm:$0xff]
    %v319 = vld [vmem:[#allocation8 + $0x6d0] sm:$0xff]
    %v320 = vld [vmem:[#allocation8 + $0x6d8] sm:$0xff]
    %v321 = vld [vmem:[#allocation8 + $0x6e0] sm:$0xff]
    %v322 = vld [vmem:[#allocation8 + $0x6e8] sm:$0xff]
    %v323 = vld [vmem:[#allocation8 + $0x6f0] sm:$0xff]
    %v324 = vld [vmem:[#allocation8 + $0x6f8] sm:$0xff]
    %v325 = vld [vmem:[#allocation8 + $0x700] sm:$0xff]
    %v326 = vld [vmem:[#allocation8 + $0x708] sm:$0xff]
    %v327 = vld [vmem:[#allocation8 + $0x710] sm:$0xff]
    %v328 = vld [vmem:[#allocation8 + $0x718] sm:$0xff]
    %v329 = vld [vmem:[#allocation8 + $0x720] sm:$0xff]
    %v330 = vld [vmem:[#allocation8 + $0x728] sm:$0xff]
    %v331 = vld [vmem:[#allocation8 + $0x730] sm:$0xff]
    %v332 = vld [vmem:[#allocation8 + $0x738] sm:$0xff]
    %v333 = vld [vmem:[#allocation8 + $0x740] sm:$0xff]
    %v334 = vld [vmem:[#allocation8 + $0x748] sm:$0xff]
    %v335 = vld [vmem:[#allocation8 + $0x750] sm:$0xff]
    %v336 = vld [vmem:[#allocation8 + $0x758] sm:$0xff]
    %v337 = vld [vmem:[#allocation8 + $0x760] sm:$0xff]
    %v338 = vld [vmem:[#allocation8 + $0x768] sm:$0xff]
    %v339 = vld [vmem:[#allocation8 + $0x770] sm:$0xff]
    %v340 = vld [vmem:[#allocation8 + $0x778] sm:$0xff]
    %v341 = vld [vmem:[#allocation8 + $0x780] sm:$0xff]
    %v342 = vld [vmem:[#allocation8 + $0x788] sm:$0xff]
    %v343 = vld [vmem:[#allocation8 + $0x790] sm:$0xff]
    %v344 = vld [vmem:[#allocation8 + $0x798] sm:$0xff]
    %v345 = vld [vmem:[#allocation8 + $0x7a0] sm:$0xff]
    %v346 = vld [vmem:[#allocation8 + $0x7a8] sm:$0xff]
    %v347 = vld [vmem:[#allocation8 + $0x7b0] sm:$0xff]
    %v348 = vld [vmem:[#allocation8 + $0x7b8] sm:$0xff]
    %v349 = vld [vmem:[#allocation8 + $0x7c0] sm:$0xff]
    %v350 = vld [vmem:[#allocation8 + $0x7c8] sm:$0xff]
    %v351 = vld [vmem:[#allocation8 + $0x7d0] sm:$0xff]
    %v352 = vld [vmem:[#allocation8 + $0x7d8] sm:$0xff]
    %v353 = vld [vmem:[#allocation8 + $0x7e0] sm:$0xff]
    %v354 = vld [vmem:[#allocation8 + $0x7e8] sm:$0xff]
    %v355 = vld [vmem:[#allocation8 + $0x7f0] sm:$0xff]
    %v356 = vld [vmem:[#allocation8 + $0x7f8] sm:$0xff]
    %v357 = vld [vmem:[#allocation8 + $0x800] sm:$0xff]
    %v358 = vld [vmem:[#allocation8 + $0x808] sm:$0xff]
    %v359 = vld [vmem:[#allocation8 + $0x810] sm:$0xff]
    %v360 = vld [vmem:[#allocation8 + $0x818] sm:$0xff]
    %v361 = vld [vmem:[#allocation8 + $0x820] sm:$0xff]
    %v362 = vld [vmem:[#allocation8 + $0x828] sm:$0xff]
    %v363 = vld [vmem:[#allocation8 + $0x830] sm:$0xff]
    %v364 = vld [vmem:[#allocation8 + $0x838] sm:$0xff]
    %v365 = vld [vmem:[#allocation8 + $0x840] sm:$0xff]
    %v366 = vld [vmem:[#allocation8 + $0x848] sm:$0xff]
    %v367 = vld [vmem:[#allocation8 + $0x850] sm:$0xff]
    %v368 = vld [vmem:[#allocation8 + $0x858] sm:$0xff]
    %v369 = vld [vmem:[#allocation8 + $0x860] sm:$0xff]
    %v370 = vld [vmem:[#allocation8 + $0x868] sm:$0xff]
    %v371 = vld [vmem:[#allocation8 + $0x870] sm:$0xff]
    %v372 = vld [vmem:[#allocation8 + $0x878] sm:$0xff]
    %v373 = vld [vmem:[#allocation8 + $0x880] sm:$0xff]
    %v374 = vld [vmem:[#allocation8 + $0x888] sm:$0xff]
    %v375 = vld [vmem:[#allocation8 + $0x890] sm:$0xff]
    %v376 = vld [vmem:[#allocation8 + $0x898] sm:$0xff]
    %v377 = vld [vmem:[#allocation8 + $0x8a0] sm:$0xff]
    %v378 = vld [vmem:[#allocation8 + $0x8a8] sm:$0xff]
    %v379 = vld [vmem:[#allocation8 + $0x8b0] sm:$0xff]
    %v380 = vld [vmem:[#allocation8 + $0x8b8] sm:$0xff]
    %v381 = vld [vmem:[#allocation8 + $0x8c0] sm:$0xff]
    %v382 = vld [vmem:[#allocation8 + $0x8c8] sm:$0xff]
    %v383 = vld [vmem:[#allocation8 + $0x8d0] sm:$0xff]
    %v384 = vld [vmem:[#allocation8 + $0x8d8] sm:$0xff]
    %v385 = vld [vmem:[#allocation8 + $0x8e0] sm:$0xff]
    %v386 = vld [vmem:[#allocation8 + $0x8e8] sm:$0xff]
    %v387 = vld [vmem:[#allocation8 + $0x8f0] sm:$0xff]
    %v388 = vld [vmem:[#allocation8 + $0x8f8] sm:$0xff]
    %v389 = vld [vmem:[#allocation8 + $0x900] sm:$0xff]
    %v390 = vld [vmem:[#allocation8 + $0x908] sm:$0xff]
    %v391 = vld [vmem:[#allocation8 + $0x910] sm:$0xff]
    %v392 = vld [vmem:[#allocation8 + $0x918] sm:$0xff]
    %v393 = vld [vmem:[#allocation8 + $0x920] sm:$0xff]
    %v394 = vld [vmem:[#allocation8 + $0x928] sm:$0xff]
    %v395 = vld [vmem:[#allocation8 + $0x930] sm:$0xff]
    %v396 = vld [vmem:[#allocation8 + $0x938] sm:$0xff]
    %v397 = vld [vmem:[#allocation8 + $0x940] sm:$0xff]
    %v398 = vld [vmem:[#allocation8 + $0x948] sm:$0xff]
    %v399 = vld [vmem:[#allocation8 + $0x950] sm:$0xff]
    %v400 = vld [vmem:[#allocation8 + $0x958] sm:$0xff]
    %v401 = vld [vmem:[#allocation8 + $0x960] sm:$0xff]
    %v402 = vld [vmem:[#allocation8 + $0x968] sm:$0xff]
    %v403 = vld [vmem:[#allocation8 + $0x970] sm:$0xff]
    %v404 = vld [vmem:[#allocation8 + $0x978] sm:$0xff]
    %v405 = vld [vmem:[#allocation8 + $0x980] sm:$0xff]
    %v406 = vld [vmem:[#allocation8 + $0x988] sm:$0xff]
    %v407 = vld [vmem:[#allocation8 + $0x990] sm:$0xff]
    %v408 = vld [vmem:[#allocation8 + $0x998] sm:$0xff]
    %v409 = vld [vmem:[#allocation8 + $0x9a0] sm:$0xff]
    %v410 = vld [vmem:[#allocation8 + $0x9a8] sm:$0xff]
    %v411 = vld [vmem:[#allocation8 + $0x9b0] sm:$0xff]
    %v412 = vld [vmem:[#allocation8 + $0x9b8] sm:$0xff]
    %v413 = vld [vmem:[#allocation8 + $0x9c0] sm:$0xff]
    %v414 = vld [vmem:[#allocation8 + $0x9c8] sm:$0xff]
    %v415 = vld [vmem:[#allocation8 + $0x9d0] sm:$0xff]
    %v416 = vld [vmem:[#allocation8 + $0x9d8] sm:$0xff]
    %v417 = vld [vmem:[#allocation8 + $0x9e0] sm:$0xff]
    %v418 = vld [vmem:[#allocation8 + $0x9e8] sm:$0xff]
    %v419 = vld [vmem:[#allocation8 + $0x9f0] sm:$0xff]
    %v420 = vld [vmem:[#allocation8 + $0x9f8] sm:$0xff]
    %v421 = vld [vmem:[#allocation10] sm:$0xff]
    %v422 = vld [vmem:[#allocation10 + $0x8] sm:$0xff]
    %v423 = vld [vmem:[#allocation10 + $0x10] sm:$0xff]
    %v424 = vld [vmem:[#allocation10 + $0x18] sm:$0xff]
    %v425 = vld [vmem:[#allocation10 + $0x20] sm:$0xff]
    %v431 = vlaneseq
    %v432 = vshrl.u32 %v431, 7
    %v433 = vsub.s32 0, %v432
    %v434 = vrot.slane %v421, %v433
    %v435 = vlaneseq
    %v436 = vshrl.u32 %v435, 7
    %v437 = vsub.s32 1, %v436
    %v438 = vrot.slane %v421, %v437
    %v439 = vlaneseq
    %v440 = vshrl.u32 %v439, 7
    %v441 = vsub.s32 2, %v440
    %v442 = vrot.slane %v421, %v441
    %v443 = vlaneseq
    %v444 = vshrl.u32 %v443, 7
    %v445 = vsub.s32 3, %v444
    %v446 = vrot.slane %v421, %v445
    %v447 = vlaneseq
    %v448 = vshrl.u32 %v447, 7
    %v449 = vsub.s32 4, %v448
    %v450 = vrot.slane %v421, %v449
    %v451 = vlaneseq
    %v452 = vshrl.u32 %v451, 7
    %v453 = vsub.s32 5, %v452
    %v454 = vrot.slane %v421, %v453
    %v455 = vlaneseq
    %v456 = vshrl.u32 %v455, 7
    %v457 = vsub.s32 6, %v456
    %v458 = vrot.slane %v421, %v457
    %v459 = vlaneseq
    %v460 = vshrl.u32 %v459, 7
    %v461 = vsub.s32 7, %v460
    %v462 = vrot.slane %v421, %v461
    %v463 = vlaneseq
    %v464 = vshrl.u32 %v463, 7
    %v465 = vsub.s32 0, %v464
    %v466 = vrot.slane %v422, %v465
    %v467 = vlaneseq
    %v468 = vshrl.u32 %v467, 7
    %v469 = vsub.s32 1, %v468
    %v470 = vrot.slane %v422, %v469
    %v471 = vlaneseq
    %v472 = vshrl.u32 %v471, 7
    %v473 = vsub.s32 2, %v472
    %v474 = vrot.slane %v422, %v473
    %v475 = vlaneseq
    %v476 = vshrl.u32 %v475, 7
    %v477 = vsub.s32 3, %v476
    %v478 = vrot.slane %v422, %v477
    %v479 = vlaneseq
    %v480 = vshrl.u32 %v479, 7
    %v481 = vsub.s32 4, %v480
    %v482 = vrot.slane %v422, %v481
    %v483 = vlaneseq
    %v484 = vshrl.u32 %v483, 7
    %v485 = vsub.s32 5, %v484
    %v486 = vrot.slane %v422, %v485
    %v487 = vlaneseq
    %v488 = vshrl.u32 %v487, 7
    %v489 = vsub.s32 6, %v488
    %v490 = vrot.slane %v422, %v489
    %v491 = vlaneseq
    %v492 = vshrl.u32 %v491, 7
    %v493 = vsub.s32 7, %v492
    %v494 = vrot.slane %v422, %v493
    %v495 = vlaneseq
    %v496 = vshrl.u32 %v495, 7
    %v497 = vsub.s32 0, %v496
    %v498 = vrot.slane %v423, %v497
    %v499 = vlaneseq
    %v500 = vshrl.u32 %v499, 7
    %v501 = vsub.s32 1, %v500
    %v502 = vrot.slane %v423, %v501
    %v503 = vlaneseq
    %v504 = vshrl.u32 %v503, 7
    %v505 = vsub.s32 2, %v504
    %v506 = vrot.slane %v423, %v505
    %v507 = vlaneseq
    %v508 = vshrl.u32 %v507, 7
    %v509 = vsub.s32 3, %v508
    %v510 = vrot.slane %v423, %v509
    %v511 = vlaneseq
    %v512 = vshrl.u32 %v511, 7
    %v513 = vsub.s32 4, %v512
    %v514 = vrot.slane %v423, %v513
    %v515 = vlaneseq
    %v516 = vshrl.u32 %v515, 7
    %v517 = vsub.s32 5, %v516
    %v518 = vrot.slane %v423, %v517
    %v519 = vlaneseq
    %v520 = vshrl.u32 %v519, 7
    %v521 = vsub.s32 6, %v520
    %v522 = vrot.slane %v423, %v521
    %v523 = vlaneseq
    %v524 = vshrl.u32 %v523, 7
    %v525 = vsub.s32 7, %v524
    %v526 = vrot.slane %v423, %v525
    %v527 = vlaneseq
    %v528 = vshrl.u32 %v527, 7
    %v529 = vsub.s32 0, %v528
    %v530 = vrot.slane %v424, %v529
    %v531 = vlaneseq
    %v532 = vshrl.u32 %v531, 7
    %v533 = vsub.s32 1, %v532
    %v534 = vrot.slane %v424, %v533
    %v535 = vlaneseq
    %v536 = vshrl.u32 %v535, 7
    %v537 = vsub.s32 2, %v536
    %v538 = vrot.slane %v424, %v537
    %v539 = vlaneseq
    %v540 = vshrl.u32 %v539, 7
    %v541 = vsub.s32 3, %v540
    %v542 = vrot.slane %v424, %v541
    %v543 = vlaneseq
    %v544 = vshrl.u32 %v543, 7
    %v545 = vsub.s32 4, %v544
    %v546 = vrot.slane %v424, %v545
    %v547 = vlaneseq
    %v548 = vshrl.u32 %v547, 7
    %v549 = vsub.s32 5, %v548
    %v550 = vrot.slane %v424, %v549
    %v551 = vlaneseq
    %v552 = vshrl.u32 %v551, 7
    %v553 = vsub.s32 6, %v552
    %v554 = vrot.slane %v424, %v553
    %v555 = vlaneseq
    %v556 = vshrl.u32 %v555, 7
    %v557 = vsub.s32 7, %v556
    %v558 = vrot.slane %v424, %v557
    %v559 = vlaneseq
    %v560 = vshrl.u32 %v559, 7
    %v561 = vsub.s32 0, %v560
    %v562 = vrot.slane %v425, %v561
    %v563 = vlaneseq
    %v564 = vshrl.u32 %v563, 7
    %v565 = vsub.s32 1, %v564
    %v566 = vrot.slane %v425, %v565
    %v567 = vlaneseq
    %v568 = vshrl.u32 %v567, 7
    %v569 = vsub.s32 2, %v568
    %v570 = vrot.slane %v425, %v569
    %v571 = vlaneseq
    %v572 = vshrl.u32 %v571, 7
    %v573 = vsub.s32 3, %v572
    %v574 = vrot.slane %v425, %v573
    %v575 = vlaneseq
    %v576 = vshrl.u32 %v575, 7
    %v577 = vsub.s32 4, %v576
    %v578 = vrot.slane %v425, %v577
    %v579 = vlaneseq
    %v580 = vshrl.u32 %v579, 7
    %v581 = vsub.s32 5, %v580
    %v582 = vrot.slane %v425, %v581
    %v583 = vlaneseq
    %v584 = vshrl.u32 %v583, 7
    %v585 = vsub.s32 6, %v584
    %v586 = vrot.slane %v425, %v585
    %v587 = vlaneseq
    %v588 = vshrl.u32 %v587, 7
    %v589 = vsub.s32 7, %v588
    %v590 = vrot.slane %v425, %v589
    %v951 = vunpack.c.l.b16 %v101
    %v952 = vunpack.c.h.b16 %v101
    %v953 = vunpack.c.l.b16 %v102
    %v954 = vunpack.c.h.b16 %v102
    %v955 = vunpack.c.l.b16 %v103
    %v956 = vunpack.c.h.b16 %v103
    %v957 = vunpack.c.l.b16 %v104
    %v958 = vunpack.c.h.b16 %v104
    %v959 = vunpack.c.l.b16 %v105
    %v960 = vunpack.c.h.b16 %v105
    %v961 = vunpack.c.l.b16 %v106
    %v962 = vunpack.c.h.b16 %v106
    %v963 = vunpack.c.l.b16 %v107
    %v964 = vunpack.c.h.b16 %v107
    %v965 = vunpack.c.l.b16 %v108
    %v966 = vunpack.c.h.b16 %v108
    %v967 = vunpack.c.l.b16 %v109
    %v968 = vunpack.c.h.b16 %v109
    %v969 = vunpack.c.l.b16 %v110
    %v970 = vunpack.c.h.b16 %v110
    %v971 = vunpack.c.l.b16 %v111
    %v972 = vunpack.c.h.b16 %v111
    %v973 = vunpack.c.l.b16 %v112
    %v974 = vunpack.c.h.b16 %v112
    %v975 = vunpack.c.l.b16 %v113
    %v976 = vunpack.c.h.b16 %v113
    %v977 = vunpack.c.l.b16 %v114
    %v978 = vunpack.c.h.b16 %v114
    %v979 = vunpack.c.l.b16 %v115
    %v980 = vunpack.c.h.b16 %v115
    %v981 = vunpack.c.l.b16 %v116
    %v982 = vunpack.c.h.b16 %v116
    %v983 = vunpack.c.l.b16 %v117
    %v984 = vunpack.c.h.b16 %v117
    %v985 = vunpack.c.l.b16 %v118
    %v986 = vunpack.c.h.b16 %v118
    %v987 = vunpack.c.l.b16 %v119
    %v988 = vunpack.c.h.b16 %v119
    %v989 = vunpack.c.l.b16 %v120
    %v990 = vunpack.c.h.b16 %v120
    %v991 = vunpack.c.l.b16 %v121
    %v992 = vunpack.c.h.b16 %v121
    %v993 = vunpack.c.l.b16 %v122
    %v994 = vunpack.c.h.b16 %v122
    %v995 = vunpack.c.l.b16 %v123
    %v996 = vunpack.c.h.b16 %v123
    %v997 = vunpack.c.l.b16 %v124
    %v998 = vunpack.c.h.b16 %v124
    %v999 = vunpack.c.l.b16 %v125
    %v1000 = vunpack.c.h.b16 %v125
    %v1001 = vunpack.c.l.b16 %v126
    %v1002 = vunpack.c.h.b16 %v126
    %v1003 = vunpack.c.l.b16 %v127
    %v1004 = vunpack.c.h.b16 %v127
    %v1005 = vunpack.c.l.b16 %v128
    %v1006 = vunpack.c.h.b16 %v128
    %v1007 = vunpack.c.l.b16 %v129
    %v1008 = vunpack.c.h.b16 %v129
    %v1009 = vunpack.c.l.b16 %v130
    %v1010 = vunpack.c.h.b16 %v130
    %v1011 = vunpack.c.l.b16 %v131
    %v1012 = vunpack.c.h.b16 %v131
    %v1013 = vunpack.c.l.b16 %v132
    %v1014 = vunpack.c.h.b16 %v132
    %v1015 = vunpack.c.l.b16 %v133
    %v1016 = vunpack.c.h.b16 %v133
    %v1017 = vunpack.c.l.b16 %v134
    %v1018 = vunpack.c.h.b16 %v134
    %v1019 = vunpack.c.l.b16 %v135
    %v1020 = vunpack.c.h.b16 %v135
    %v1021 = vunpack.c.l.b16 %v136
    %v1022 = vunpack.c.h.b16 %v136
    %v1023 = vunpack.c.l.b16 %v137
    %v1024 = vunpack.c.h.b16 %v137
    %v1025 = vunpack.c.l.b16 %v138
    %v1026 = vunpack.c.h.b16 %v138
    %v1027 = vunpack.c.l.b16 %v139
    %v1028 = vunpack.c.h.b16 %v139
    %v1029 = vunpack.c.l.b16 %v140
    %v1030 = vunpack.c.h.b16 %v140
    %v1031 = vunpack.c.l.b16 %v141
    %v1032 = vunpack.c.h.b16 %v141
    %v1033 = vunpack.c.l.b16 %v142
    %v1034 = vunpack.c.h.b16 %v142
    %v1035 = vunpack.c.l.b16 %v143
    %v1036 = vunpack.c.h.b16 %v143
    %v1037 = vunpack.c.l.b16 %v144
    %v1038 = vunpack.c.h.b16 %v144
    %v1039 = vunpack.c.l.b16 %v145
    %v1040 = vunpack.c.h.b16 %v145
    %v1041 = vunpack.c.l.b16 %v146
    %v1042 = vunpack.c.h.b16 %v146
    %v1043 = vunpack.c.l.b16 %v147
    %v1044 = vunpack.c.h.b16 %v147
    %v1045 = vunpack.c.l.b16 %v148
    %v1046 = vunpack.c.h.b16 %v148
    %v1047 = vunpack.c.l.b16 %v149
    %v1048 = vunpack.c.h.b16 %v149
    %v1049 = vunpack.c.l.b16 %v150
    %v1050 = vunpack.c.h.b16 %v150
    %v1051 = vunpack.c.l.b16 %v151
    %v1052 = vunpack.c.h.b16 %v151
    %v1053 = vunpack.c.l.b16 %v152
    %v1054 = vunpack.c.h.b16 %v152
    %v1055 = vunpack.c.l.b16 %v153
    %v1056 = vunpack.c.h.b16 %v153
    %v1057 = vunpack.c.l.b16 %v154
    %v1058 = vunpack.c.h.b16 %v154
    %v1059 = vunpack.c.l.b16 %v155
    %v1060 = vunpack.c.h.b16 %v155
    %v1061 = vunpack.c.l.b16 %v156
    %v1062 = vunpack.c.h.b16 %v156
    %v1063 = vunpack.c.l.b16 %v157
    %v1064 = vunpack.c.h.b16 %v157
    %v1065 = vunpack.c.l.b16 %v158
    %v1066 = vunpack.c.h.b16 %v158
    %v1067 = vunpack.c.l.b16 %v159
    %v1068 = vunpack.c.h.b16 %v159
    %v1069 = vunpack.c.l.b16 %v160
    %v1070 = vunpack.c.h.b16 %v160
    %v1071 = vunpack.c.l.b16 %v161
    %v1072 = vunpack.c.h.b16 %v161
    %v1073 = vunpack.c.l.b16 %v162
    %v1074 = vunpack.c.h.b16 %v162
    %v1075 = vunpack.c.l.b16 %v163
    %v1076 = vunpack.c.h.b16 %v163
    %v1077 = vunpack.c.l.b16 %v164
    %v1078 = vunpack.c.h.b16 %v164
    %v1079 = vunpack.c.l.b16 %v165
    %v1080 = vunpack.c.h.b16 %v165
    %v1081 = vunpack.c.l.b16 %v166
    %v1082 = vunpack.c.h.b16 %v166
    %v1083 = vunpack.c.l.b16 %v167
    %v1084 = vunpack.c.h.b16 %v167
    %v1085 = vunpack.c.l.b16 %v168
    %v1086 = vunpack.c.h.b16 %v168
    %v1087 = vunpack.c.l.b16 %v169
    %v1088 = vunpack.c.h.b16 %v169
    %v1089 = vunpack.c.l.b16 %v170
    %v1090 = vunpack.c.h.b16 %v170
    %v1091 = vunpack.c.l.b16 %v171
    %v1092 = vunpack.c.h.b16 %v171
    %v1093 = vunpack.c.l.b16 %v172
    %v1094 = vunpack.c.h.b16 %v172
    %v1095 = vunpack.c.l.b16 %v173
    %v1096 = vunpack.c.h.b16 %v173
    %v1097 = vunpack.c.l.b16 %v174
    %v1098 = vunpack.c.h.b16 %v174
    %v1099 = vunpack.c.l.b16 %v175
    %v1100 = vunpack.c.h.b16 %v175
    %v1101 = vunpack.c.l.b16 %v176
    %v1102 = vunpack.c.h.b16 %v176
    %v1103 = vunpack.c.l.b16 %v177
    %v1104 = vunpack.c.h.b16 %v177
    %v1105 = vunpack.c.l.b16 %v178
    %v1106 = vunpack.c.h.b16 %v178
    %v1107 = vunpack.c.l.b16 %v179
    %v1108 = vunpack.c.h.b16 %v179
    %v1109 = vunpack.c.l.b16 %v180
    %v1110 = vunpack.c.h.b16 %v180
    %v1111 = vunpack.c.l.b16 %v181
    %v1112 = vunpack.c.h.b16 %v181
    %v1113 = vunpack.c.l.b16 %v182
    %v1114 = vunpack.c.h.b16 %v182
    %v1115 = vunpack.c.l.b16 %v183
    %v1116 = vunpack.c.h.b16 %v183
    %v1117 = vunpack.c.l.b16 %v184
    %v1118 = vunpack.c.h.b16 %v184
    %v1119 = vunpack.c.l.b16 %v185
    %v1120 = vunpack.c.h.b16 %v185
    %v1121 = vunpack.c.l.b16 %v186
    %v1122 = vunpack.c.h.b16 %v186
    %v1123 = vunpack.c.l.b16 %v187
    %v1124 = vunpack.c.h.b16 %v187
    %v1125 = vunpack.c.l.b16 %v188
    %v1126 = vunpack.c.h.b16 %v188
    %v1127 = vunpack.c.l.b16 %v189
    %v1128 = vunpack.c.h.b16 %v189
    %v1129 = vunpack.c.l.b16 %v190
    %v1130 = vunpack.c.h.b16 %v190
    %v1131 = vunpack.c.l.b16 %v191
    %v1132 = vunpack.c.h.b16 %v191
    %v1133 = vunpack.c.l.b16 %v192
    %v1134 = vunpack.c.h.b16 %v192
    %v1135 = vunpack.c.l.b16 %v193
    %v1136 = vunpack.c.h.b16 %v193
    %v1137 = vunpack.c.l.b16 %v194
    %v1138 = vunpack.c.h.b16 %v194
    %v1139 = vunpack.c.l.b16 %v195
    %v1140 = vunpack.c.h.b16 %v195
    %v1141 = vunpack.c.l.b16 %v196
    %v1142 = vunpack.c.h.b16 %v196
    %v1143 = vunpack.c.l.b16 %v197
    %v1144 = vunpack.c.h.b16 %v197
    %v1145 = vunpack.c.l.b16 %v198
    %v1146 = vunpack.c.h.b16 %v198
    %v1147 = vunpack.c.l.b16 %v199
    %v1148 = vunpack.c.h.b16 %v199
    %v1149 = vunpack.c.l.b16 %v200
    %v1150 = vunpack.c.h.b16 %v200
    %v1151 = vunpack.c.l.b16 %v201
    %v1152 = vunpack.c.h.b16 %v201
    %v1153 = vunpack.c.l.b16 %v202
    %v1154 = vunpack.c.h.b16 %v202
    %v1155 = vunpack.c.l.b16 %v203
    %v1156 = vunpack.c.h.b16 %v203
    %v1157 = vunpack.c.l.b16 %v204
    %v1158 = vunpack.c.h.b16 %v204
    %v1159 = vunpack.c.l.b16 %v205
    %v1160 = vunpack.c.h.b16 %v205
    %v1161 = vunpack.c.l.b16 %v206
    %v1162 = vunpack.c.h.b16 %v206
    %v1163 = vunpack.c.l.b16 %v207
    %v1164 = vunpack.c.h.b16 %v207
    %v1165 = vunpack.c.l.b16 %v208
    %v1166 = vunpack.c.h.b16 %v208
    %v1167 = vunpack.c.l.b16 %v209
    %v1168 = vunpack.c.h.b16 %v209
    %v1169 = vunpack.c.l.b16 %v210
    %v1170 = vunpack.c.h.b16 %v210
    %v1171 = vunpack.c.l.b16 %v211
    %v1172 = vunpack.c.h.b16 %v211
    %v1173 = vunpack.c.l.b16 %v212
    %v1174 = vunpack.c.h.b16 %v212
    %v1175 = vunpack.c.l.b16 %v213
    %v1176 = vunpack.c.h.b16 %v213
    %v1177 = vunpack.c.l.b16 %v214
    %v1178 = vunpack.c.h.b16 %v214
    %v1179 = vunpack.c.l.b16 %v215
    %v1180 = vunpack.c.h.b16 %v215
    %v1181 = vunpack.c.l.b16 %v216
    %v1182 = vunpack.c.h.b16 %v216
    %v1183 = vunpack.c.l.b16 %v217
    %v1184 = vunpack.c.h.b16 %v217
    %v1185 = vunpack.c.l.b16 %v218
    %v1186 = vunpack.c.h.b16 %v218
    %v1187 = vunpack.c.l.b16 %v219
    %v1188 = vunpack.c.h.b16 %v219
    %v1189 = vunpack.c.l.b16 %v220
    %v1190 = vunpack.c.h.b16 %v220
    %v1191 = vunpack.c.l.b16 %v221
    %v1192 = vunpack.c.h.b16 %v221
    %v1193 = vunpack.c.l.b16 %v222
    %v1194 = vunpack.c.h.b16 %v222
    %v1195 = vunpack.c.l.b16 %v223
    %v1196 = vunpack.c.h.b16 %v223
    %v1197 = vunpack.c.l.b16 %v224
    %v1198 = vunpack.c.h.b16 %v224
    %v1199 = vunpack.c.l.b16 %v225
    %v1200 = vunpack.c.h.b16 %v225
    %v1201 = vunpack.c.l.b16 %v226
    %v1202 = vunpack.c.h.b16 %v226
    %v1203 = vunpack.c.l.b16 %v227
    %v1204 = vunpack.c.h.b16 %v227
    %v1205 = vunpack.c.l.b16 %v228
    %v1206 = vunpack.c.h.b16 %v228
    %v1207 = vunpack.c.l.b16 %v229
    %v1208 = vunpack.c.h.b16 %v229
    %v1209 = vunpack.c.l.b16 %v230
    %v1210 = vunpack.c.h.b16 %v230
    %v1211 = vunpack.c.l.b16 %v231
    %v1212 = vunpack.c.h.b16 %v231
    %v1213 = vunpack.c.l.b16 %v232
    %v1214 = vunpack.c.h.b16 %v232
    %v1215 = vunpack.c.l.b16 %v233
    %v1216 = vunpack.c.h.b16 %v233
    %v1217 = vunpack.c.l.b16 %v234
    %v1218 = vunpack.c.h.b16 %v234
    %v1219 = vunpack.c.l.b16 %v235
    %v1220 = vunpack.c.h.b16 %v235
    %v1221 = vunpack.c.l.b16 %v236
    %v1222 = vunpack.c.h.b16 %v236
    %v1223 = vunpack.c.l.b16 %v237
    %v1224 = vunpack.c.h.b16 %v237
    %v1225 = vunpack.c.l.b16 %v238
    %v1226 = vunpack.c.h.b16 %v238
    %v1227 = vunpack.c.l.b16 %v239
    %v1228 = vunpack.c.h.b16 %v239
    %v1229 = vunpack.c.l.b16 %v240
    %v1230 = vunpack.c.h.b16 %v240
    %v1231 = vunpack.c.l.b16 %v241
    %v1232 = vunpack.c.h.b16 %v241
    %v1233 = vunpack.c.l.b16 %v242
    %v1234 = vunpack.c.h.b16 %v242
    %v1235 = vunpack.c.l.b16 %v243
    %v1236 = vunpack.c.h.b16 %v243
    %v1237 = vunpack.c.l.b16 %v244
    %v1238 = vunpack.c.h.b16 %v244
    %v1239 = vunpack.c.l.b16 %v245
    %v1240 = vunpack.c.h.b16 %v245
    %v1241 = vunpack.c.l.b16 %v246
    %v1242 = vunpack.c.h.b16 %v246
    %v1243 = vunpack.c.l.b16 %v247
    %v1244 = vunpack.c.h.b16 %v247
    %v1245 = vunpack.c.l.b16 %v248
    %v1246 = vunpack.c.h.b16 %v248
    %v1247 = vunpack.c.l.b16 %v249
    %v1248 = vunpack.c.h.b16 %v249
    %v1249 = vunpack.c.l.b16 %v250
    %v1250 = vunpack.c.h.b16 %v250
    %v1251 = vunpack.c.l.b16 %v251
    %v1252 = vunpack.c.h.b16 %v251
    %v1253 = vunpack.c.l.b16 %v252
    %v1254 = vunpack.c.h.b16 %v252
    %v1255 = vunpack.c.l.b16 %v253
    %v1256 = vunpack.c.h.b16 %v253
    %v1257 = vunpack.c.l.b16 %v254
    %v1258 = vunpack.c.h.b16 %v254
    %v1259 = vunpack.c.l.b16 %v255
    %v1260 = vunpack.c.h.b16 %v255
    %v1261 = vunpack.c.l.b16 %v256
    %v1262 = vunpack.c.h.b16 %v256
    %v1263 = vunpack.c.l.b16 %v257
    %v1264 = vunpack.c.h.b16 %v257
    %v1265 = vunpack.c.l.b16 %v258
    %v1266 = vunpack.c.h.b16 %v258
    %v1267 = vunpack.c.l.b16 %v259
    %v1268 = vunpack.c.h.b16 %v259
    %v1269 = vunpack.c.l.b16 %v260
    %v1270 = vunpack.c.h.b16 %v260
    %v1271 = vunpack.c.l.b16 %v261
    %v1272 = vunpack.c.h.b16 %v261
    %v1273 = vunpack.c.l.b16 %v262
    %v1274 = vunpack.c.h.b16 %v262
    %v1275 = vunpack.c.l.b16 %v263
    %v1276 = vunpack.c.h.b16 %v263
    %v1277 = vunpack.c.l.b16 %v264
    %v1278 = vunpack.c.h.b16 %v264
    %v1279 = vunpack.c.l.b16 %v265
    %v1280 = vunpack.c.h.b16 %v265
    %v1281 = vunpack.c.l.b16 %v266
    %v1282 = vunpack.c.h.b16 %v266
    %v1283 = vunpack.c.l.b16 %v267
    %v1284 = vunpack.c.h.b16 %v267
    %v1285 = vunpack.c.l.b16 %v268
    %v1286 = vunpack.c.h.b16 %v268
    %v1287 = vunpack.c.l.b16 %v269
    %v1288 = vunpack.c.h.b16 %v269
    %v1289 = vunpack.c.l.b16 %v270
    %v1290 = vunpack.c.h.b16 %v270
    %v1291 = vunpack.c.l.b16 %v271
    %v1292 = vunpack.c.h.b16 %v271
    %v1293 = vunpack.c.l.b16 %v272
    %v1294 = vunpack.c.h.b16 %v272
    %v1295 = vunpack.c.l.b16 %v273
    %v1296 = vunpack.c.h.b16 %v273
    %v1297 = vunpack.c.l.b16 %v274
    %v1298 = vunpack.c.h.b16 %v274
    %v1299 = vunpack.c.l.b16 %v275
    %v1300 = vunpack.c.h.b16 %v275
    %v1301 = vunpack.c.l.b16 %v276
    %v1302 = vunpack.c.h.b16 %v276
    %v1303 = vunpack.c.l.b16 %v277
    %v1304 = vunpack.c.h.b16 %v277
    %v1305 = vunpack.c.l.b16 %v278
    %v1306 = vunpack.c.h.b16 %v278
    %v1307 = vunpack.c.l.b16 %v279
    %v1308 = vunpack.c.h.b16 %v279
    %v1309 = vunpack.c.l.b16 %v280
    %v1310 = vunpack.c.h.b16 %v280
    %v1311 = vunpack.c.l.b16 %v281
    %v1312 = vunpack.c.h.b16 %v281
    %v1313 = vunpack.c.l.b16 %v282
    %v1314 = vunpack.c.h.b16 %v282
    %v1315 = vunpack.c.l.b16 %v283
    %v1316 = vunpack.c.h.b16 %v283
    %v1317 = vunpack.c.l.b16 %v284
    %v1318 = vunpack.c.h.b16 %v284
    %v1319 = vunpack.c.l.b16 %v285
    %v1320 = vunpack.c.h.b16 %v285
    %v1321 = vunpack.c.l.b16 %v286
    %v1322 = vunpack.c.h.b16 %v286
    %v1323 = vunpack.c.l.b16 %v287
    %v1324 = vunpack.c.h.b16 %v287
    %v1325 = vunpack.c.l.b16 %v288
    %v1326 = vunpack.c.h.b16 %v288
    %v1327 = vunpack.c.l.b16 %v289
    %v1328 = vunpack.c.h.b16 %v289
    %v1329 = vunpack.c.l.b16 %v290
    %v1330 = vunpack.c.h.b16 %v290
    %v1331 = vunpack.c.l.b16 %v291
    %v1332 = vunpack.c.h.b16 %v291
    %v1333 = vunpack.c.l.b16 %v292
    %v1334 = vunpack.c.h.b16 %v292
    %v1335 = vunpack.c.l.b16 %v293
    %v1336 = vunpack.c.h.b16 %v293
    %v1337 = vunpack.c.l.b16 %v294
    %v1338 = vunpack.c.h.b16 %v294
    %v1339 = vunpack.c.l.b16 %v295
    %v1340 = vunpack.c.h.b16 %v295
    %v1341 = vunpack.c.l.b16 %v296
    %v1342 = vunpack.c.h.b16 %v296
    %v1343 = vunpack.c.l.b16 %v297
    %v1344 = vunpack.c.h.b16 %v297
    %v1345 = vunpack.c.l.b16 %v298
    %v1346 = vunpack.c.h.b16 %v298
    %v1347 = vunpack.c.l.b16 %v299
    %v1348 = vunpack.c.h.b16 %v299
    %v1349 = vunpack.c.l.b16 %v300
    %v1350 = vunpack.c.h.b16 %v300
    %v1351 = vunpack.c.l.b16 %v301
    %v1352 = vunpack.c.h.b16 %v301
    %v1353 = vunpack.c.l.b16 %v302
    %v1354 = vunpack.c.h.b16 %v302
    %v1355 = vunpack.c.l.b16 %v303
    %v1356 = vunpack.c.h.b16 %v303
    %v1357 = vunpack.c.l.b16 %v304
    %v1358 = vunpack.c.h.b16 %v304
    %v1359 = vunpack.c.l.b16 %v305
    %v1360 = vunpack.c.h.b16 %v305
    %v1361 = vunpack.c.l.b16 %v306
    %v1362 = vunpack.c.h.b16 %v306
    %v1363 = vunpack.c.l.b16 %v307
    %v1364 = vunpack.c.h.b16 %v307
    %v1365 = vunpack.c.l.b16 %v308
    %v1366 = vunpack.c.h.b16 %v308
    %v1367 = vunpack.c.l.b16 %v309
    %v1368 = vunpack.c.h.b16 %v309
    %v1369 = vunpack.c.l.b16 %v310
    %v1370 = vunpack.c.h.b16 %v310
    %v1371 = vunpack.c.l.b16 %v311
    %v1372 = vunpack.c.h.b16 %v311
    %v1373 = vunpack.c.l.b16 %v312
    %v1374 = vunpack.c.h.b16 %v312
    %v1375 = vunpack.c.l.b16 %v313
    %v1376 = vunpack.c.h.b16 %v313
    %v1377 = vunpack.c.l.b16 %v314
    %v1378 = vunpack.c.h.b16 %v314
    %v1379 = vunpack.c.l.b16 %v315
    %v1380 = vunpack.c.h.b16 %v315
    %v1381 = vunpack.c.l.b16 %v316
    %v1382 = vunpack.c.h.b16 %v316
    %v1383 = vunpack.c.l.b16 %v317
    %v1384 = vunpack.c.h.b16 %v317
    %v1385 = vunpack.c.l.b16 %v318
    %v1386 = vunpack.c.h.b16 %v318
    %v1387 = vunpack.c.l.b16 %v319
    %v1388 = vunpack.c.h.b16 %v319
    %v1389 = vunpack.c.l.b16 %v320
    %v1390 = vunpack.c.h.b16 %v320
    %v1391 = vunpack.c.l.b16 %v321
    %v1392 = vunpack.c.h.b16 %v321
    %v1393 = vunpack.c.l.b16 %v322
    %v1394 = vunpack.c.h.b16 %v322
    %v1395 = vunpack.c.l.b16 %v323
    %v1396 = vunpack.c.h.b16 %v323
    %v1397 = vunpack.c.l.b16 %v324
    %v1398 = vunpack.c.h.b16 %v324
    %v1399 = vunpack.c.l.b16 %v325
    %v1400 = vunpack.c.h.b16 %v325
    %v1401 = vunpack.c.l.b16 %v326
    %v1402 = vunpack.c.h.b16 %v326
    %v1403 = vunpack.c.l.b16 %v327
    %v1404 = vunpack.c.h.b16 %v327
    %v1405 = vunpack.c.l.b16 %v328
    %v1406 = vunpack.c.h.b16 %v328
    %v1407 = vunpack.c.l.b16 %v329
    %v1408 = vunpack.c.h.b16 %v329
    %v1409 = vunpack.c.l.b16 %v330
    %v1410 = vunpack.c.h.b16 %v330
    %v1411 = vunpack.c.l.b16 %v331
    %v1412 = vunpack.c.h.b16 %v331
    %v1413 = vunpack.c.l.b16 %v332
    %v1414 = vunpack.c.h.b16 %v332
    %v1415 = vunpack.c.l.b16 %v333
    %v1416 = vunpack.c.h.b16 %v333
    %v1417 = vunpack.c.l.b16 %v334
    %v1418 = vunpack.c.h.b16 %v334
    %v1419 = vunpack.c.l.b16 %v335
    %v1420 = vunpack.c.h.b16 %v335
    %v1421 = vunpack.c.l.b16 %v336
    %v1422 = vunpack.c.h.b16 %v336
    %v1423 = vunpack.c.l.b16 %v337
    %v1424 = vunpack.c.h.b16 %v337
    %v1425 = vunpack.c.l.b16 %v338
    %v1426 = vunpack.c.h.b16 %v338
    %v1427 = vunpack.c.l.b16 %v339
    %v1428 = vunpack.c.h.b16 %v339
    %v1429 = vunpack.c.l.b16 %v340
    %v1430 = vunpack.c.h.b16 %v340
    %v1431 = vunpack.c.l.b16 %v341
    %v1432 = vunpack.c.h.b16 %v341
    %v1433 = vunpack.c.l.b16 %v342
    %v1434 = vunpack.c.h.b16 %v342
    %v1435 = vunpack.c.l.b16 %v343
    %v1436 = vunpack.c.h.b16 %v343
    %v1437 = vunpack.c.l.b16 %v344
    %v1438 = vunpack.c.h.b16 %v344
    %v1439 = vunpack.c.l.b16 %v345
    %v1440 = vunpack.c.h.b16 %v345
    %v1441 = vunpack.c.l.b16 %v346
    %v1442 = vunpack.c.h.b16 %v346
    %v1443 = vunpack.c.l.b16 %v347
    %v1444 = vunpack.c.h.b16 %v347
    %v1445 = vunpack.c.l.b16 %v348
    %v1446 = vunpack.c.h.b16 %v348
    %v1447 = vunpack.c.l.b16 %v349
    %v1448 = vunpack.c.h.b16 %v349
    %v1449 = vunpack.c.l.b16 %v350
    %v1450 = vunpack.c.h.b16 %v350
    %v1451 = vunpack.c.l.b16 %v351
    %v1452 = vunpack.c.h.b16 %v351
    %v1453 = vunpack.c.l.b16 %v352
    %v1454 = vunpack.c.h.b16 %v352
    %v1455 = vunpack.c.l.b16 %v353
    %v1456 = vunpack.c.h.b16 %v353
    %v1457 = vunpack.c.l.b16 %v354
    %v1458 = vunpack.c.h.b16 %v354
    %v1459 = vunpack.c.l.b16 %v355
    %v1460 = vunpack.c.h.b16 %v355
    %v1461 = vunpack.c.l.b16 %v356
    %v1462 = vunpack.c.h.b16 %v356
    %v1463 = vunpack.c.l.b16 %v357
    %v1464 = vunpack.c.h.b16 %v357
    %v1465 = vunpack.c.l.b16 %v358
    %v1466 = vunpack.c.h.b16 %v358
    %v1467 = vunpack.c.l.b16 %v359
    %v1468 = vunpack.c.h.b16 %v359
    %v1469 = vunpack.c.l.b16 %v360
    %v1470 = vunpack.c.h.b16 %v360
    %v1471 = vunpack.c.l.b16 %v361
    %v1472 = vunpack.c.h.b16 %v361
    %v1473 = vunpack.c.l.b16 %v362
    %v1474 = vunpack.c.h.b16 %v362
    %v1475 = vunpack.c.l.b16 %v363
    %v1476 = vunpack.c.h.b16 %v363
    %v1477 = vunpack.c.l.b16 %v364
    %v1478 = vunpack.c.h.b16 %v364
    %v1479 = vunpack.c.l.b16 %v365
    %v1480 = vunpack.c.h.b16 %v365
    %v1481 = vunpack.c.l.b16 %v366
    %v1482 = vunpack.c.h.b16 %v366
    %v1483 = vunpack.c.l.b16 %v367
    %v1484 = vunpack.c.h.b16 %v367
    %v1485 = vunpack.c.l.b16 %v368
    %v1486 = vunpack.c.h.b16 %v368
    %v1487 = vunpack.c.l.b16 %v369
    %v1488 = vunpack.c.h.b16 %v369
    %v1489 = vunpack.c.l.b16 %v370
    %v1490 = vunpack.c.h.b16 %v370
    %v1491 = vunpack.c.l.b16 %v371
    %v1492 = vunpack.c.h.b16 %v371
    %v1493 = vunpack.c.l.b16 %v372
    %v1494 = vunpack.c.h.b16 %v372
    %v1495 = vunpack.c.l.b16 %v373
    %v1496 = vunpack.c.h.b16 %v373
    %v1497 = vunpack.c.l.b16 %v374
    %v1498 = vunpack.c.h.b16 %v374
    %v1499 = vunpack.c.l.b16 %v375
    %v1500 = vunpack.c.h.b16 %v375
    %v1501 = vunpack.c.l.b16 %v376
    %v1502 = vunpack.c.h.b16 %v376
    %v1503 = vunpack.c.l.b16 %v377
    %v1504 = vunpack.c.h.b16 %v377
    %v1505 = vunpack.c.l.b16 %v378
    %v1506 = vunpack.c.h.b16 %v378
    %v1507 = vunpack.c.l.b16 %v379
    %v1508 = vunpack.c.h.b16 %v379
    %v1509 = vunpack.c.l.b16 %v380
    %v1510 = vunpack.c.h.b16 %v380
    %v1511 = vunpack.c.l.b16 %v381
    %v1512 = vunpack.c.h.b16 %v381
    %v1513 = vunpack.c.l.b16 %v382
    %v1514 = vunpack.c.h.b16 %v382
    %v1515 = vunpack.c.l.b16 %v383
    %v1516 = vunpack.c.h.b16 %v383
    %v1517 = vunpack.c.l.b16 %v384
    %v1518 = vunpack.c.h.b16 %v384
    %v1519 = vunpack.c.l.b16 %v385
    %v1520 = vunpack.c.h.b16 %v385
    %v1521 = vunpack.c.l.b16 %v386
    %v1522 = vunpack.c.h.b16 %v386
    %v1523 = vunpack.c.l.b16 %v387
    %v1524 = vunpack.c.h.b16 %v387
    %v1525 = vunpack.c.l.b16 %v388
    %v1526 = vunpack.c.h.b16 %v388
    %v1527 = vunpack.c.l.b16 %v389
    %v1528 = vunpack.c.h.b16 %v389
    %v1529 = vunpack.c.l.b16 %v390
    %v1530 = vunpack.c.h.b16 %v390
    %v1531 = vunpack.c.l.b16 %v391
    %v1532 = vunpack.c.h.b16 %v391
    %v1533 = vunpack.c.l.b16 %v392
    %v1534 = vunpack.c.h.b16 %v392
    %v1535 = vunpack.c.l.b16 %v393
    %v1536 = vunpack.c.h.b16 %v393
    %v1537 = vunpack.c.l.b16 %v394
    %v1538 = vunpack.c.h.b16 %v394
    %v1539 = vunpack.c.l.b16 %v395
    %v1540 = vunpack.c.h.b16 %v395
    %v1541 = vunpack.c.l.b16 %v396
    %v1542 = vunpack.c.h.b16 %v396
    %v1543 = vunpack.c.l.b16 %v397
    %v1544 = vunpack.c.h.b16 %v397
    %v1545 = vunpack.c.l.b16 %v398
    %v1546 = vunpack.c.h.b16 %v398
    %v1547 = vunpack.c.l.b16 %v399
    %v1548 = vunpack.c.h.b16 %v399
    %v1549 = vunpack.c.l.b16 %v400
    %v1550 = vunpack.c.h.b16 %v400
    %v1551 = vunpack.c.l.b16 %v401
    %v1552 = vunpack.c.h.b16 %v401
    %v1553 = vunpack.c.l.b16 %v402
    %v1554 = vunpack.c.h.b16 %v402
    %v1555 = vunpack.c.l.b16 %v403
    %v1556 = vunpack.c.h.b16 %v403
    %v1557 = vunpack.c.l.b16 %v404
    %v1558 = vunpack.c.h.b16 %v404
    %v1559 = vunpack.c.l.b16 %v405
    %v1560 = vunpack.c.h.b16 %v405
    %v1561 = vunpack.c.l.b16 %v406
    %v1562 = vunpack.c.h.b16 %v406
    %v1563 = vunpack.c.l.b16 %v407
    %v1564 = vunpack.c.h.b16 %v407
    %v1565 = vunpack.c.l.b16 %v408
    %v1566 = vunpack.c.h.b16 %v408
    %v1567 = vunpack.c.l.b16 %v409
    %v1568 = vunpack.c.h.b16 %v409
    %v1569 = vunpack.c.l.b16 %v410
    %v1570 = vunpack.c.h.b16 %v410
    %v1571 = vunpack.c.l.b16 %v411
    %v1572 = vunpack.c.h.b16 %v411
    %v1573 = vunpack.c.l.b16 %v412
    %v1574 = vunpack.c.h.b16 %v412
    %v1575 = vunpack.c.l.b16 %v413
    %v1576 = vunpack.c.h.b16 %v413
    %v1577 = vunpack.c.l.b16 %v414
    %v1578 = vunpack.c.h.b16 %v414
    %v1579 = vunpack.c.l.b16 %v415
    %v1580 = vunpack.c.h.b16 %v415
    %v1581 = vunpack.c.l.b16 %v416
    %v1582 = vunpack.c.h.b16 %v416
    %v1583 = vunpack.c.l.b16 %v417
    %v1584 = vunpack.c.h.b16 %v417
    %v1585 = vunpack.c.l.b16 %v418
    %v1586 = vunpack.c.h.b16 %v418
    %v1587 = vunpack.c.l.b16 %v419
    %v1588 = vunpack.c.h.b16 %v419
    %v1589 = vunpack.c.l.b16 %v420
    %v1590 = vunpack.c.h.b16 %v420
    %v1591 = vpack.c.b16 %v991, %v951
    %v1592 = vpack.c.b16 %v992, %v952
    %v1593 = vpack.c.b16 %v993, %v953
    %v1594 = vpack.c.b16 %v994, %v954
    %v1595 = vpack.c.b16 %v995, %v955
    %v1596 = vpack.c.b16 %v996, %v956
    %v1597 = vpack.c.b16 %v997, %v957
    %v1598 = vpack.c.b16 %v998, %v958
    %v1599 = vpack.c.b16 %v999, %v959
    %v1600 = vpack.c.b16 %v1000, %v960
    %v1601 = vpack.c.b16 %v1001, %v961
    %v1602 = vpack.c.b16 %v1002, %v962
    %v1603 = vpack.c.b16 %v1003, %v963
    %v1604 = vpack.c.b16 %v1004, %v964
    %v1605 = vpack.c.b16 %v1005, %v965
    %v1606 = vpack.c.b16 %v1006, %v966
    %v1607 = vpack.c.b16 %v1007, %v967
    %v1608 = vpack.c.b16 %v1008, %v968
    %v1609 = vpack.c.b16 %v1009, %v969
    %v1610 = vpack.c.b16 %v1010, %v970
    %v1611 = vpack.c.b16 %v1011, %v971
    %v1612 = vpack.c.b16 %v1012, %v972
    %v1613 = vpack.c.b16 %v1013, %v973
    %v1614 = vpack.c.b16 %v1014, %v974
    %v1615 = vpack.c.b16 %v1015, %v975
    %v1616 = vpack.c.b16 %v1016, %v976
    %v1617 = vpack.c.b16 %v1017, %v977
    %v1618 = vpack.c.b16 %v1018, %v978
    %v1619 = vpack.c.b16 %v1019, %v979
    %v1620 = vpack.c.b16 %v1020, %v980
    %v1621 = vpack.c.b16 %v1021, %v981
    %v1622 = vpack.c.b16 %v1022, %v982
    %v1623 = vpack.c.b16 %v1023, %v983
    %v1624 = vpack.c.b16 %v1024, %v984
    %v1625 = vpack.c.b16 %v1025, %v985
    %v1626 = vpack.c.b16 %v1026, %v986
    %v1627 = vpack.c.b16 %v1027, %v987
    %v1628 = vpack.c.b16 %v1028, %v988
    %v1629 = vpack.c.b16 %v1029, %v989
    %v1630 = vpack.c.b16 %v1030, %v990
    %v1631 = vpack.c.b16 %v1071, %v1031
    %v1632 = vpack.c.b16 %v1072, %v1032
    %v1633 = vpack.c.b16 %v1073, %v1033
    %v1634 = vpack.c.b16 %v1074, %v1034
    %v1635 = vpack.c.b16 %v1075, %v1035
    %v1636 = vpack.c.b16 %v1076, %v1036
    %v1637 = vpack.c.b16 %v1077, %v1037
    %v1638 = vpack.c.b16 %v1078, %v1038
    %v1639 = vpack.c.b16 %v1079, %v1039
    %v1640 = vpack.c.b16 %v1080, %v1040
    %v1641 = vpack.c.b16 %v1081, %v1041
    %v1642 = vpack.c.b16 %v1082, %v1042
    %v1643 = vpack.c.b16 %v1083, %v1043
    %v1644 = vpack.c.b16 %v1084, %v1044
    %v1645 = vpack.c.b16 %v1085, %v1045
    %v1646 = vpack.c.b16 %v1086, %v1046
    %v1647 = vpack.c.b16 %v1087, %v1047
    %v1648 = vpack.c.b16 %v1088, %v1048
    %v1649 = vpack.c.b16 %v1089, %v1049
    %v1650 = vpack.c.b16 %v1090, %v1050
    %v1651 = vpack.c.b16 %v1091, %v1051
    %v1652 = vpack.c.b16 %v1092, %v1052
    %v1653 = vpack.c.b16 %v1093, %v1053
    %v1654 = vpack.c.b16 %v1094, %v1054
    %v1655 = vpack.c.b16 %v1095, %v1055
    %v1656 = vpack.c.b16 %v1096, %v1056
    %v1657 = vpack.c.b16 %v1097, %v1057
    %v1658 = vpack.c.b16 %v1098, %v1058
    %v1659 = vpack.c.b16 %v1099, %v1059
    %v1660 = vpack.c.b16 %v1100, %v1060
    %v1661 = vpack.c.b16 %v1101, %v1061
    %v1662 = vpack.c.b16 %v1102, %v1062
    %v1663 = vpack.c.b16 %v1103, %v1063
    %v1664 = vpack.c.b16 %v1104, %v1064
    %v1665 = vpack.c.b16 %v1105, %v1065
    %v1666 = vpack.c.b16 %v1106, %v1066
    %v1667 = vpack.c.b16 %v1107, %v1067
    %v1668 = vpack.c.b16 %v1108, %v1068
    %v1669 = vpack.c.b16 %v1109, %v1069
    %v1670 = vpack.c.b16 %v1110, %v1070
    %v1671 = vpack.c.b16 %v1151, %v1111
    %v1672 = vpack.c.b16 %v1152, %v1112
    %v1673 = vpack.c.b16 %v1153, %v1113
    %v1674 = vpack.c.b16 %v1154, %v1114
    %v1675 = vpack.c.b16 %v1155, %v1115
    %v1676 = vpack.c.b16 %v1156, %v1116
    %v1677 = vpack.c.b16 %v1157, %v1117
    %v1678 = vpack.c.b16 %v1158, %v1118
    %v1679 = vpack.c.b16 %v1159, %v1119
    %v1680 = vpack.c.b16 %v1160, %v1120
    %v1681 = vpack.c.b16 %v1161, %v1121
    %v1682 = vpack.c.b16 %v1162, %v1122
    %v1683 = vpack.c.b16 %v1163, %v1123
    %v1684 = vpack.c.b16 %v1164, %v1124
    %v1685 = vpack.c.b16 %v1165, %v1125
    %v1686 = vpack.c.b16 %v1166, %v1126
    %v1687 = vpack.c.b16 %v1167, %v1127
    %v1688 = vpack.c.b16 %v1168, %v1128
    %v1689 = vpack.c.b16 %v1169, %v1129
    %v1690 = vpack.c.b16 %v1170, %v1130
    %v1691 = vpack.c.b16 %v1171, %v1131
    %v1692 = vpack.c.b16 %v1172, %v1132
    %v1693 = vpack.c.b16 %v1173, %v1133
    %v1694 = vpack.c.b16 %v1174, %v1134
    %v1695 = vpack.c.b16 %v1175, %v1135
    %v1696 = vpack.c.b16 %v1176, %v1136
    %v1697 = vpack.c.b16 %v1177, %v1137
    %v1698 = vpack.c.b16 %v1178, %v1138
    %v1699 = vpack.c.b16 %v1179, %v1139
    %v1700 = vpack.c.b16 %v1180, %v1140
    %v1701 = vpack.c.b16 %v1181, %v1141
    %v1702 = vpack.c.b16 %v1182, %v1142
    %v1703 = vpack.c.b16 %v1183, %v1143
    %v1704 = vpack.c.b16 %v1184, %v1144
    %v1705 = vpack.c.b16 %v1185, %v1145
    %v1706 = vpack.c.b16 %v1186, %v1146
    %v1707 = vpack.c.b16 %v1187, %v1147
    %v1708 = vpack.c.b16 %v1188, %v1148
    %v1709 = vpack.c.b16 %v1189, %v1149
    %v1710 = vpack.c.b16 %v1190, %v1150
    %v1711 = vpack.c.b16 %v1231, %v1191
    %v1712 = vpack.c.b16 %v1232, %v1192
    %v1713 = vpack.c.b16 %v1233, %v1193
    %v1714 = vpack.c.b16 %v1234, %v1194
    %v1715 = vpack.c.b16 %v1235, %v1195
    %v1716 = vpack.c.b16 %v1236, %v1196
    %v1717 = vpack.c.b16 %v1237, %v1197
    %v1718 = vpack.c.b16 %v1238, %v1198
    %v1719 = vpack.c.b16 %v1239, %v1199
    %v1720 = vpack.c.b16 %v1240, %v1200
    %v1721 = vpack.c.b16 %v1241, %v1201
    %v1722 = vpack.c.b16 %v1242, %v1202
    %v1723 = vpack.c.b16 %v1243, %v1203
    %v1724 = vpack.c.b16 %v1244, %v1204
    %v1725 = vpack.c.b16 %v1245, %v1205
    %v1726 = vpack.c.b16 %v1246, %v1206
    %v1727 = vpack.c.b16 %v1247, %v1207
    %v1728 = vpack.c.b16 %v1248, %v1208
    %v1729 = vpack.c.b16 %v1249, %v1209
    %v1730 = vpack.c.b16 %v1250, %v1210
    %v1731 = vpack.c.b16 %v1251, %v1211
    %v1732 = vpack.c.b16 %v1252, %v1212
    %v1733 = vpack.c.b16 %v1253, %v1213
    %v1734 = vpack.c.b16 %v1254, %v1214
    %v1735 = vpack.c.b16 %v1255, %v1215
    %v1736 = vpack.c.b16 %v1256, %v1216
    %v1737 = vpack.c.b16 %v1257, %v1217
    %v1738 = vpack.c.b16 %v1258, %v1218
    %v1739 = vpack.c.b16 %v1259, %v1219
    %v1740 = vpack.c.b16 %v1260, %v1220
    %v1741 = vpack.c.b16 %v1261, %v1221
    %v1742 = vpack.c.b16 %v1262, %v1222
    %v1743 = vpack.c.b16 %v1263, %v1223
    %v1744 = vpack.c.b16 %v1264, %v1224
    %v1745 = vpack.c.b16 %v1265, %v1225
    %v1746 = vpack.c.b16 %v1266, %v1226
    %v1747 = vpack.c.b16 %v1267, %v1227
    %v1748 = vpack.c.b16 %v1268, %v1228
    %v1749 = vpack.c.b16 %v1269, %v1229
    %v1750 = vpack.c.b16 %v1270, %v1230
    %v1751 = vpack.c.b16 %v1311, %v1271
    %v1752 = vpack.c.b16 %v1312, %v1272
    %v1753 = vpack.c.b16 %v1313, %v1273
    %v1754 = vpack.c.b16 %v1314, %v1274
    %v1755 = vpack.c.b16 %v1315, %v1275
    %v1756 = vpack.c.b16 %v1316, %v1276
    %v1757 = vpack.c.b16 %v1317, %v1277
    %v1758 = vpack.c.b16 %v1318, %v1278
    %v1759 = vpack.c.b16 %v1319, %v1279
    %v1760 = vpack.c.b16 %v1320, %v1280
    %v1761 = vpack.c.b16 %v1321, %v1281
    %v1762 = vpack.c.b16 %v1322, %v1282
    %v1763 = vpack.c.b16 %v1323, %v1283
    %v1764 = vpack.c.b16 %v1324, %v1284
    %v1765 = vpack.c.b16 %v1325, %v1285
    %v1766 = vpack.c.b16 %v1326, %v1286
    %v1767 = vpack.c.b16 %v1327, %v1287
    %v1768 = vpack.c.b16 %v1328, %v1288
    %v1769 = vpack.c.b16 %v1329, %v1289
    %v1770 = vpack.c.b16 %v1330, %v1290
    %v1771 = vpack.c.b16 %v1331, %v1291
    %v1772 = vpack.c.b16 %v1332, %v1292
    %v1773 = vpack.c.b16 %v1333, %v1293
    %v1774 = vpack.c.b16 %v1334, %v1294
    %v1775 = vpack.c.b16 %v1335, %v1295
    %v1776 = vpack.c.b16 %v1336, %v1296
    %v1777 = vpack.c.b16 %v1337, %v1297
    %v1778 = vpack.c.b16 %v1338, %v1298
    %v1779 = vpack.c.b16 %v1339, %v1299
    %v1780 = vpack.c.b16 %v1340, %v1300
    %v1781 = vpack.c.b16 %v1341, %v1301
    %v1782 = vpack.c.b16 %v1342, %v1302
    %v1783 = vpack.c.b16 %v1343, %v1303
    %v1784 = vpack.c.b16 %v1344, %v1304
    %v1785 = vpack.c.b16 %v1345, %v1305
    %v1786 = vpack.c.b16 %v1346, %v1306
    %v1787 = vpack.c.b16 %v1347, %v1307
    %v1788 = vpack.c.b16 %v1348, %v1308
    %v1789 = vpack.c.b16 %v1349, %v1309
    %v1790 = vpack.c.b16 %v1350, %v1310
    %v1791 = vpack.c.b16 %v1391, %v1351
    %v1792 = vpack.c.b16 %v1392, %v1352
    %v1793 = vpack.c.b16 %v1393, %v1353
    %v1794 = vpack.c.b16 %v1394, %v1354
    %v1795 = vpack.c.b16 %v1395, %v1355
    %v1796 = vpack.c.b16 %v1396, %v1356
    %v1797 = vpack.c.b16 %v1397, %v1357
    %v1798 = vpack.c.b16 %v1398, %v1358
    %v1799 = vpack.c.b16 %v1399, %v1359
    %v1800 = vpack.c.b16 %v1400, %v1360
    %v1801 = vpack.c.b16 %v1401, %v1361
    %v1802 = vpack.c.b16 %v1402, %v1362
    %v1803 = vpack.c.b16 %v1403, %v1363
    %v1804 = vpack.c.b16 %v1404, %v1364
    %v1805 = vpack.c.b16 %v1405, %v1365
    %v1806 = vpack.c.b16 %v1406, %v1366
    %v1807 = vpack.c.b16 %v1407, %v1367
    %v1808 = vpack.c.b16 %v1408, %v1368
    %v1809 = vpack.c.b16 %v1409, %v1369
    %v1810 = vpack.c.b16 %v1410, %v1370
    %v1811 = vpack.c.b16 %v1411, %v1371
    %v1812 = vpack.c.b16 %v1412, %v1372
    %v1813 = vpack.c.b16 %v1413, %v1373
    %v1814 = vpack.c.b16 %v1414, %v1374
    %v1815 = vpack.c.b16 %v1415, %v1375
    %v1816 = vpack.c.b16 %v1416, %v1376
    %v1817 = vpack.c.b16 %v1417, %v1377
    %v1818 = vpack.c.b16 %v1418, %v1378
    %v1819 = vpack.c.b16 %v1419, %v1379
    %v1820 = vpack.c.b16 %v1420, %v1380
    %v1821 = vpack.c.b16 %v1421, %v1381
    %v1822 = vpack.c.b16 %v1422, %v1382
    %v1823 = vpack.c.b16 %v1423, %v1383
    %v1824 = vpack.c.b16 %v1424, %v1384
    %v1825 = vpack.c.b16 %v1425, %v1385
    %v1826 = vpack.c.b16 %v1426, %v1386
    %v1827 = vpack.c.b16 %v1427, %v1387
    %v1828 = vpack.c.b16 %v1428, %v1388
    %v1829 = vpack.c.b16 %v1429, %v1389
    %v1830 = vpack.c.b16 %v1430, %v1390
    %v1831 = vpack.c.b16 %v1471, %v1431
    %v1832 = vpack.c.b16 %v1472, %v1432
    %v1833 = vpack.c.b16 %v1473, %v1433
    %v1834 = vpack.c.b16 %v1474, %v1434
    %v1835 = vpack.c.b16 %v1475, %v1435
    %v1836 = vpack.c.b16 %v1476, %v1436
    %v1837 = vpack.c.b16 %v1477, %v1437
    %v1838 = vpack.c.b16 %v1478, %v1438
    %v1839 = vpack.c.b16 %v1479, %v1439
    %v1840 = vpack.c.b16 %v1480, %v1440
    %v1841 = vpack.c.b16 %v1481, %v1441
    %v1842 = vpack.c.b16 %v1482, %v1442
    %v1843 = vpack.c.b16 %v1483, %v1443
    %v1844 = vpack.c.b16 %v1484, %v1444
    %v1845 = vpack.c.b16 %v1485, %v1445
    %v1846 = vpack.c.b16 %v1486, %v1446
    %v1847 = vpack.c.b16 %v1487, %v1447
    %v1848 = vpack.c.b16 %v1488, %v1448
    %v1849 = vpack.c.b16 %v1489, %v1449
    %v1850 = vpack.c.b16 %v1490, %v1450
    %v1851 = vpack.c.b16 %v1491, %v1451
    %v1852 = vpack.c.b16 %v1492, %v1452
    %v1853 = vpack.c.b16 %v1493, %v1453
    %v1854 = vpack.c.b16 %v1494, %v1454
    %v1855 = vpack.c.b16 %v1495, %v1455
    %v1856 = vpack.c.b16 %v1496, %v1456
    %v1857 = vpack.c.b16 %v1497, %v1457
    %v1858 = vpack.c.b16 %v1498, %v1458
    %v1859 = vpack.c.b16 %v1499, %v1459
    %v1860 = vpack.c.b16 %v1500, %v1460
    %v1861 = vpack.c.b16 %v1501, %v1461
    %v1862 = vpack.c.b16 %v1502, %v1462
    %v1863 = vpack.c.b16 %v1503, %v1463
    %v1864 = vpack.c.b16 %v1504, %v1464
    %v1865 = vpack.c.b16 %v1505, %v1465
    %v1866 = vpack.c.b16 %v1506, %v1466
    %v1867 = vpack.c.b16 %v1507, %v1467
    %v1868 = vpack.c.b16 %v1508, %v1468
    %v1869 = vpack.c.b16 %v1509, %v1469
    %v1870 = vpack.c.b16 %v1510, %v1470
    %v1871 = vpack.c.b16 %v1551, %v1511
    %v1872 = vpack.c.b16 %v1552, %v1512
    %v1873 = vpack.c.b16 %v1553, %v1513
    %v1874 = vpack.c.b16 %v1554, %v1514
    %v1875 = vpack.c.b16 %v1555, %v1515
    %v1876 = vpack.c.b16 %v1556, %v1516
    %v1877 = vpack.c.b16 %v1557, %v1517
    %v1878 = vpack.c.b16 %v1558, %v1518
    %v1879 = vpack.c.b16 %v1559, %v1519
    %v1880 = vpack.c.b16 %v1560, %v1520
    %v1881 = vpack.c.b16 %v1561, %v1521
    %v1882 = vpack.c.b16 %v1562, %v1522
    %v1883 = vpack.c.b16 %v1563, %v1523
    %v1884 = vpack.c.b16 %v1564, %v1524
    %v1885 = vpack.c.b16 %v1565, %v1525
    %v1886 = vpack.c.b16 %v1566, %v1526
    %v1887 = vpack.c.b16 %v1567, %v1527
    %v1888 = vpack.c.b16 %v1568, %v1528
    %v1889 = vpack.c.b16 %v1569, %v1529
    %v1890 = vpack.c.b16 %v1570, %v1530
    %v1891 = vpack.c.b16 %v1571, %v1531
    %v1892 = vpack.c.b16 %v1572, %v1532
    %v1893 = vpack.c.b16 %v1573, %v1533
    %v1894 = vpack.c.b16 %v1574, %v1534
    %v1895 = vpack.c.b16 %v1575, %v1535
    %v1896 = vpack.c.b16 %v1576, %v1536
    %v1897 = vpack.c.b16 %v1577, %v1537
    %v1898 = vpack.c.b16 %v1578, %v1538
    %v1899 = vpack.c.b16 %v1579, %v1539
    %v1900 = vpack.c.b16 %v1580, %v1540
    %v1901 = vpack.c.b16 %v1581, %v1541
    %v1902 = vpack.c.b16 %v1582, %v1542
    %v1903 = vpack.c.b16 %v1583, %v1543
    %v1904 = vpack.c.b16 %v1584, %v1544
    %v1905 = vpack.c.b16 %v1585, %v1545
    %v1906 = vpack.c.b16 %v1586, %v1546
    %v1907 = vpack.c.b16 %v1587, %v1547
    %v1908 = vpack.c.b16 %v1588, %v1548
    %v1909 = vpack.c.b16 %v1589, %v1549
    %v1910 = vpack.c.b16 %v1590, %v1550
    %2231 = vmatprep.subr.bf16.mxu0 %v1592
    %2232 = vmatpush1.bf16.msra.mxu0 %v1591
    %2233 = vmatprep.subr.bf16.mxu0 %v1632
    %2234 = vmatpush1.bf16.msra.mxu0 %v1631
    %2235 = vmatprep.subr.bf16.mxu0 %v1672
    %2236 = vmatpush1.bf16.msra.mxu0 %v1671
    %2237 = vmatprep.subr.bf16.mxu0 %v1712
    %2238 = vmatpush1.bf16.msra.mxu0 %v1711
    %2239 = vmatprep.subr.bf16.mxu0 %v1752
    %2240 = vmatpush1.bf16.msra.mxu0 %v1751
    %2241 = vmatprep.subr.bf16.mxu0 %v1792
    %2242 = vmatpush1.bf16.msra.mxu0 %v1791
    %2243 = vmatprep.subr.bf16.mxu0 %v1832
    %2244 = vmatpush1.bf16.msra.mxu0 %v1831
    %2245 = vmatprep.subr.bf16.mxu0 %v1872
    %2246 = vmatpush1.bf16.msra.mxu0 %v1871
    %2247 = vmatprep.subr.bf16.mxu0 0
    %2248 = vmatpush1.bf16.msra.mxu0 0
    %2249 = vmatprep.subr.bf16.mxu0 0
    %2250 = vmatpush1.bf16.msra.mxu0 0
    %2251 = vmatprep.subr.bf16.mxu0 0
    %2252 = vmatpush1.bf16.msra.mxu0 0
    %2253 = vmatprep.subr.bf16.mxu0 0
    %2254 = vmatpush1.bf16.msra.mxu0 0
    %2255 = vmatprep.subr.bf16.mxu0 0
    %2256 = vmatpush1.bf16.msra.mxu0 0
    %2257 = vmatprep.subr.bf16.mxu0 0
    %2258 = vmatpush1.bf16.msra.mxu0 0
    %2259 = vmatprep.subr.bf16.mxu0 0
    %2260 = vmatpush1.bf16.msra.mxu0 0
    %2261 = vmatprep.subr.bf16.mxu0 0
    %2262 = vmatpush1.bf16.msra.mxu0 0
    %2263 = vmatprep.mubr.bf16.mxu0 0
    %2264 = vmatmul.mubr.bf16.gmra.mrb[0].mxu0 %v100
    %v2265 = vpop.f32.mrb[0].mxu0
    %v2266 = vadd.f32 %v434, %v2265
    %v2267 = vpop.f32.mrb[0].mxu0
    %v2268 = vadd.f32 %v438, %v2267
    %v2269 = vpop.f32.mrb[0].mxu0
    %v2270 = vpop.f32.mrb[0].mxu0
    %2271 = vdwg.mxu0
    %2272 = vmatprep.subr.bf16.mxu0 %v1594
    %2273 = vmatpush1.bf16.msra.mxu0 %v1593
    %2274 = vmatprep.subr.bf16.mxu0 %v1634
    %2275 = vmatpush1.bf16.msra.mxu0 %v1633
    %2276 = vmatprep.subr.bf16.mxu0 %v1674
    %2277 = vmatpush1.bf16.msra.mxu0 %v1673
    %2278 = vmatprep.subr.bf16.mxu0 %v1714
    %2279 = vmatpush1.bf16.msra.mxu0 %v1713
    %2280 = vmatprep.subr.bf16.mxu0 %v1754
    %2281 = vmatpush1.bf16.msra.mxu0 %v1753
    %2282 = vmatprep.subr.bf16.mxu0 %v1794
    %2283 = vmatpush1.bf16.msra.mxu0 %v1793
    %2284 = vmatprep.subr.bf16.mxu0 %v1834
    %2285 = vmatpush1.bf16.msra.mxu0 %v1833
    %2286 = vmatprep.subr.bf16.mxu0 %v1874
    %2287 = vmatpush1.bf16.msra.mxu0 %v1873
    %2288 = vmatprep.subr.bf16.mxu0 0
    %2289 = vmatpush1.bf16.msra.mxu0 0
    %2290 = vmatprep.subr.bf16.mxu0 0
    %2291 = vmatpush1.bf16.msra.mxu0 0
    %2292 = vmatprep.subr.bf16.mxu0 0
    %2293 = vmatpush1.bf16.msra.mxu0 0
    %2294 = vmatprep.subr.bf16.mxu0 0
    %2295 = vmatpush1.bf16.msra.mxu0 0
    %2296 = vmatprep.subr.bf16.mxu0 0
    %2297 = vmatpush1.bf16.msra.mxu0 0
    %2298 = vmatprep.subr.bf16.mxu0 0
    %2299 = vmatpush1.bf16.msra.mxu0 0
    %2300 = vmatprep.subr.bf16.mxu0 0
    %2301 = vmatpush1.bf16.msra.mxu0 0
    %2302 = vmatprep.subr.bf16.mxu0 0
    %2303 = vmatpush1.bf16.msra.mxu0 0
    %2304 = vmatprep.mubr.bf16.mxu0 0
    %2305 = vmatmul.mubr.bf16.gmra.mrb[0].mxu0 %v100
    %v2306 = vpop.f32.mrb[0].mxu0
    %v2307 = vadd.f32 %v442, %v2306
    %v2308 = vpop.f32.mrb[0].mxu0
    %v2309 = vadd.f32 %v446, %v2308
    %v2310 = vpop.f32.mrb[0].mxu0
    %v2311 = vpop.f32.mrb[0].mxu0
    %2312 = vdwg.mxu0
    %2313 = vmatprep.subr.bf16.mxu0 %v1596
    %2314 = vmatpush1.bf16.msra.mxu0 %v1595
    %2315 = vmatprep.subr.bf16.mxu0 %v1636
    %2316 = vmatpush1.bf16.msra.mxu0 %v1635
    %2317 = vmatprep.subr.bf16.mxu0 %v1676
    %2318 = vmatpush1.bf16.msra.mxu0 %v1675
    %2319 = vmatprep.subr.bf16.mxu0 %v1716
    %2320 = vmatpush1.bf16.msra.mxu0 %v1715
    %2321 = vmatprep.subr.bf16.mxu0 %v1756
    %2322 = vmatpush1.bf16.msra.mxu0 %v1755
    %2323 = vmatprep.subr.bf16.mxu0 %v1796
    %2324 = vmatpush1.bf16.msra.mxu0 %v1795
    %2325 = vmatprep.subr.bf16.mxu0 %v1836
    %2326 = vmatpush1.bf16.msra.mxu0 %v1835
    %2327 = vmatprep.subr.bf16.mxu0 %v1876
    %2328 = vmatpush1.bf16.msra.mxu0 %v1875
    %2329 = vmatprep.subr.bf16.mxu0 0
    %2330 = vmatpush1.bf16.msra.mxu0 0
    %2331 = vmatprep.subr.bf16.mxu0 0
    %2332 = vmatpush1.bf16.msra.mxu0 0
    %2333 = vmatprep.subr.bf16.mxu0 0
    %2334 = vmatpush1.bf16.msra.mxu0 0
    %2335 = vmatprep.subr.bf16.mxu0 0
    %2336 = vmatpush1.bf16.msra.mxu0 0
    %2337 = vmatprep.subr.bf16.mxu0 0
    %2338 = vmatpush1.bf16.msra.mxu0 0
    %2339 = vmatprep.subr.bf16.mxu0 0
    %2340 = vmatpush1.bf16.msra.mxu0 0
    %2341 = vmatprep.subr.bf16.mxu0 0
    %2342 = vmatpush1.bf16.msra.mxu0 0
    %2343 = vmatprep.subr.bf16.mxu0 0
    %2344 = vmatpush1.bf16.msra.mxu0 0
    %2345 = vmatprep.mubr.bf16.mxu0 0
    %2346 = vmatmul.mubr.bf16.gmra.mrb[0].mxu0 %v100
    %v2347 = vpop.f32.mrb[0].mxu0
    %v2348 = vadd.f32 %v450, %v2347
    %v2349 = vpop.f32.mrb[0].mxu0
    %v2350 = vadd.f32 %v454, %v2349
    %v2351 = vpop.f32.mrb[0].mxu0
    %v2352 = vpop.f32.mrb[0].mxu0
    %2353 = vdwg.mxu0
    %2354 = vmatprep.subr.bf16.mxu0 %v1598
    %2355 = vmatpush1.bf16.msra.mxu0 %v1597
    %2356 = vmatprep.subr.bf16.mxu0 %v1638
    %2357 = vmatpush1.bf16.msra.mxu0 %v1637
    %2358 = vmatprep.subr.bf16.mxu0 %v1678
    %2359 = vmatpush1.bf16.msra.mxu0 %v1677
    %2360 = vmatprep.subr.bf16.mxu0 %v1718
    %2361 = vmatpush1.bf16.msra.mxu0 %v1717
    %2362 = vmatprep.subr.bf16.mxu0 %v1758
    %2363 = vmatpush1.bf16.msra.mxu0 %v1757
    %2364 = vmatprep.subr.bf16.mxu0 %v1798
    %2365 = vmatpush1.bf16.msra.mxu0 %v1797
    %2366 = vmatprep.subr.bf16.mxu0 %v1838
    %2367 = vmatpush1.bf16.msra.mxu0 %v1837
    %2368 = vmatprep.subr.bf16.mxu0 %v1878
    %2369 = vmatpush1.bf16.msra.mxu0 %v1877
    %2370 = vmatprep.subr.bf16.mxu0 0
    %2371 = vmatpush1.bf16.msra.mxu0 0
    %2372 = vmatprep.subr.bf16.mxu0 0
    %2373 = vmatpush1.bf16.msra.mxu0 0
    %2374 = vmatprep.subr.bf16.mxu0 0
    %2375 = vmatpush1.bf16.msra.mxu0 0
    %2376 = vmatprep.subr.bf16.mxu0 0
    %2377 = vmatpush1.bf16.msra.mxu0 0
    %2378 = vmatprep.subr.bf16.mxu0 0
    %2379 = vmatpush1.bf16.msra.mxu0 0
    %2380 = vmatprep.subr.bf16.mxu0 0
    %2381 = vmatpush1.bf16.msra.mxu0 0
    %2382 = vmatprep.subr.bf16.mxu0 0
    %2383 = vmatpush1.bf16.msra.mxu0 0
    %2384 = vmatprep.subr.bf16.mxu0 0
    %2385 = vmatpush1.bf16.msra.mxu0 0
    %2386 = vmatprep.mubr.bf16.mxu0 0
    %2387 = vmatmul.mubr.bf16.gmra.mrb[0].mxu0 %v100
    %v2388 = vpop.f32.mrb[0].mxu0
    %v2389 = vadd.f32 %v458, %v2388
    %v2390 = vpop.f32.mrb[0].mxu0
    %v2391 = vadd.f32 %v462, %v2390
    %v2392 = vpop.f32.mrb[0].mxu0
    %v2393 = vpop.f32.mrb[0].mxu0
    %2394 = vdwg.mxu0
    %2395 = vmatprep.subr.bf16.mxu0 %v1600
    %2396 = vmatpush1.bf16.msra.mxu0 %v1599
    %2397 = vmatprep.subr.bf16.mxu0 %v1640
    %2398 = vmatpush1.bf16.msra.mxu0 %v1639
    %2399 = vmatprep.subr.bf16.mxu0 %v1680
    %2400 = vmatpush1.bf16.msra.mxu0 %v1679
    %2401 = vmatprep.subr.bf16.mxu0 %v1720
    %2402 = vmatpush1.bf16.msra.mxu0 %v1719
    %2403 = vmatprep.subr.bf16.mxu0 %v1760
    %2404 = vmatpush1.bf16.msra.mxu0 %v1759
    %2405 = vmatprep.subr.bf16.mxu0 %v1800
    %2406 = vmatpush1.bf16.msra.mxu0 %v1799
    %2407 = vmatprep.subr.bf16.mxu0 %v1840
    %2408 = vmatpush1.bf16.msra.mxu0 %v1839
    %2409 = vmatprep.subr.bf16.mxu0 %v1880
    %2410 = vmatpush1.bf16.msra.mxu0 %v1879
    %2411 = vmatprep.subr.bf16.mxu0 0
    %2412 = vmatpush1.bf16.msra.mxu0 0
    %2413 = vmatprep.subr.bf16.mxu0 0
    %2414 = vmatpush1.bf16.msra.mxu0 0
    %2415 = vmatprep.subr.bf16.mxu0 0
    %2416 = vmatpush1.bf16.msra.mxu0 0
    %2417 = vmatprep.subr.bf16.mxu0 0
    %2418 = vmatpush1.bf16.msra.mxu0 0
    %2419 = vmatprep.subr.bf16.mxu0 0
    %2420 = vmatpush1.bf16.msra.mxu0 0
    %2421 = vmatprep.subr.bf16.mxu0 0
    %2422 = vmatpush1.bf16.msra.mxu0 0
    %2423 = vmatprep.subr.bf16.mxu0 0
    %2424 = vmatpush1.bf16.msra.mxu0 0
    %2425 = vmatprep.subr.bf16.mxu0 0
    %2426 = vmatpush1.bf16.msra.mxu0 0
    %2427 = vmatprep.mubr.bf16.mxu0 0
    %2428 = vmatmul.mubr.bf16.gmra.mrb[0].mxu0 %v100
    %v2429 = vpop.f32.mrb[0].mxu0
    %v2430 = vadd.f32 %v466, %v2429
    %v2431 = vpop.f32.mrb[0].mxu0
    %v2432 = vadd.f32 %v470, %v2431
    %v2433 = vpop.f32.mrb[0].mxu0
    %v2434 = vpop.f32.mrb[0].mxu0
    %2435 = vdwg.mxu0
    %2436 = vmatprep.subr.bf16.mxu0 %v1602
    %2437 = vmatpush1.bf16.msra.mxu0 %v1601
    %2438 = vmatprep.subr.bf16.mxu0 %v1642
    %2439 = vmatpush1.bf16.msra.mxu0 %v1641
    %2440 = vmatprep.subr.bf16.mxu0 %v1682
    %2441 = vmatpush1.bf16.msra.mxu0 %v1681
    %2442 = vmatprep.subr.bf16.mxu0 %v1722
    %2443 = vmatpush1.bf16.msra.mxu0 %v1721
    %2444 = vmatprep.subr.bf16.mxu0 %v1762
    %2445 = vmatpush1.bf16.msra.mxu0 %v1761
    %2446 = vmatprep.subr.bf16.mxu0 %v1802
    %2447 = vmatpush1.bf16.msra.mxu0 %v1801
    %2448 = vmatprep.subr.bf16.mxu0 %v1842
    %2449 = vmatpush1.bf16.msra.mxu0 %v1841
    %2450 = vmatprep.subr.bf16.mxu0 %v1882
    %2451 = vmatpush1.bf16.msra.mxu0 %v1881
    %2452 = vmatprep.subr.bf16.mxu0 0
    %2453 = vmatpush1.bf16.msra.mxu0 0
    %2454 = vmatprep.subr.bf16.mxu0 0
    %2455 = vmatpush1.bf16.msra.mxu0 0
    %2456 = vmatprep.subr.bf16.mxu0 0
    %2457 = vmatpush1.bf16.msra.mxu0 0
    %2458 = vmatprep.subr.bf16.mxu0 0
    %2459 = vmatpush1.bf16.msra.mxu0 0
    %2460 = vmatprep.subr.bf16.mxu0 0
    %2461 = vmatpush1.bf16.msra.mxu0 0
    %2462 = vmatprep.subr.bf16.mxu0 0
    %2463 = vmatpush1.bf16.msra.mxu0 0
    %2464 = vmatprep.subr.bf16.mxu0 0
    %2465 = vmatpush1.bf16.msra.mxu0 0
    %2466 = vmatprep.subr.bf16.mxu0 0
    %2467 = vmatpush1.bf16.msra.mxu0 0
    %2468 = vmatprep.mubr.bf16.mxu0 0
    %2469 = vmatmul.mubr.bf16.gmra.mrb[0].mxu0 %v100
    %v2470 = vpop.f32.mrb[0].mxu0
    %v2471 = vadd.f32 %v474, %v2470
    %v2472 = vpop.f32.mrb[0].mxu0
    %v2473 = vadd.f32 %v478, %v2472
    %v2474 = vpop.f32.mrb[0].mxu0
    %v2475 = vpop.f32.mrb[0].mxu0
    %2476 = vdwg.mxu0
    %2477 = vmatprep.subr.bf16.mxu0 %v1604
    %2478 = vmatpush1.bf16.msra.mxu0 %v1603
    %2479 = vmatprep.subr.bf16.mxu0 %v1644
    %2480 = vmatpush1.bf16.msra.mxu0 %v1643
    %2481 = vmatprep.subr.bf16.mxu0 %v1684
    %2482 = vmatpush1.bf16.msra.mxu0 %v1683
    %2483 = vmatprep.subr.bf16.mxu0 %v1724
    %2484 = vmatpush1.bf16.msra.mxu0 %v1723
    %2485 = vmatprep.subr.bf16.mxu0 %v1764
    %2486 = vmatpush1.bf16.msra.mxu0 %v1763
    %2487 = vmatprep.subr.bf16.mxu0 %v1804
    %2488 = vmatpush1.bf16.msra.mxu0 %v1803
    %2489 = vmatprep.subr.bf16.mxu0 %v1844
    %2490 = vmatpush1.bf16.msra.mxu0 %v1843
    %2491 = vmatprep.subr.bf16.mxu0 %v1884
    %2492 = vmatpush1.bf16.msra.mxu0 %v1883
    %2493 = vmatprep.subr.bf16.mxu0 0
    %2494 = vmatpush1.bf16.msra.mxu0 0
    %2495 = vmatprep.subr.bf16.mxu0 0
    %2496 = vmatpush1.bf16.msra.mxu0 0
    %2497 = vmatprep.subr.bf16.mxu0 0
    %2498 = vmatpush1.bf16.msra.mxu0 0
    %2499 = vmatprep.subr.bf16.mxu0 0
    %2500 = vmatpush1.bf16.msra.mxu0 0
    %2501 = vmatprep.subr.bf16.mxu0 0
    %2502 = vmatpush1.bf16.msra.mxu0 0
    %2503 = vmatprep.subr.bf16.mxu0 0
    %2504 = vmatpush1.bf16.msra.mxu0 0
    %2505 = vmatprep.subr.bf16.mxu0 0
    %2506 = vmatpush1.bf16.msra.mxu0 0
    %2507 = vmatprep.subr.bf16.mxu0 0
    %2508 = vmatpush1.bf16.msra.mxu0 0
    %2509 = vmatprep.mubr.bf16.mxu0 0
    %2510 = vmatmul.mubr.bf16.gmra.mrb[0].mxu0 %v100
    %v2511 = vpop.f32.mrb[0].mxu0
    %v2512 = vadd.f32 %v482, %v2511
    %v2513 = vpop.f32.mrb[0].mxu0
    %v2514 = vadd.f32 %v486, %v2513
    %v2515 = vpop.f32.mrb[0].mxu0
    %v2516 = vpop.f32.mrb[0].mxu0
    %2517 = vdwg.mxu0
    %2518 = vmatprep.subr.bf16.mxu0 %v1606
    %2519 = vmatpush1.bf16.msra.mxu0 %v1605
    %2520 = vmatprep.subr.bf16.mxu0 %v1646
    %2521 = vmatpush1.bf16.msra.mxu0 %v1645
    %2522 = vmatprep.subr.bf16.mxu0 %v1686
    %2523 = vmatpush1.bf16.msra.mxu0 %v1685
    %2524 = vmatprep.subr.bf16.mxu0 %v1726
    %2525 = vmatpush1.bf16.msra.mxu0 %v1725
    %2526 = vmatprep.subr.bf16.mxu0 %v1766
    %2527 = vmatpush1.bf16.msra.mxu0 %v1765
    %2528 = vmatprep.subr.bf16.mxu0 %v1806
    %2529 = vmatpush1.bf16.msra.mxu0 %v1805
    %2530 = vmatprep.subr.bf16.mxu0 %v1846
    %2531 = vmatpush1.bf16.msra.mxu0 %v1845
    %2532 = vmatprep.subr.bf16.mxu0 %v1886
    %2533 = vmatpush1.bf16.msra.mxu0 %v1885
    %2534 = vmatprep.subr.bf16.mxu0 0
    %2535 = vmatpush1.bf16.msra.mxu0 0
    %2536 = vmatprep.subr.bf16.mxu0 0
    %2537 = vmatpush1.bf16.msra.mxu0 0
    %2538 = vmatprep.subr.bf16.mxu0 0
    %2539 = vmatpush1.bf16.msra.mxu0 0
    %2540 = vmatprep.subr.bf16.mxu0 0
    %2541 = vmatpush1.bf16.msra.mxu0 0
    %2542 = vmatprep.subr.bf16.mxu0 0
    %2543 = vmatpush1.bf16.msra.mxu0 0
    %2544 = vmatprep.subr.bf16.mxu0 0
    %2545 = vmatpush1.bf16.msra.mxu0 0
    %2546 = vmatprep.subr.bf16.mxu0 0
    %2547 = vmatpush1.bf16.msra.mxu0 0
    %2548 = vmatprep.subr.bf16.mxu0 0
    %2549 = vmatpush1.bf16.msra.mxu0 0
    %2550 = vmatprep.mubr.bf16.mxu0 0
    %2551 = vmatmul.mubr.bf16.gmra.mrb[0].mxu0 %v100
    %v2552 = vpop.f32.mrb[0].mxu0
    %v2553 = vadd.f32 %v490, %v2552
    %v2554 = vpop.f32.mrb[0].mxu0
    %v2555 = vadd.f32 %v494, %v2554
    %v2556 = vpop.f32.mrb[0].mxu0
    %v2557 = vpop.f32.mrb[0].mxu0
    %2558 = vdwg.mxu0
    %2559 = vmatprep.subr.bf16.mxu0 %v1608
    %2560 = vmatpush1.bf16.msra.mxu0 %v1607
    %2561 = vmatprep.subr.bf16.mxu0 %v1648
    %2562 = vmatpush1.bf16.msra.mxu0 %v1647
    %2563 = vmatprep.subr.bf16.mxu0 %v1688
    %2564 = vmatpush1.bf16.msra.mxu0 %v1687
    %2565 = vmatprep.subr.bf16.mxu0 %v1728
    %2566 = vmatpush1.bf16.msra.mxu0 %v1727
    %2567 = vmatprep.subr.bf16.mxu0 %v1768
    %2568 = vmatpush1.bf16.msra.mxu0 %v1767
    %2569 = vmatprep.subr.bf16.mxu0 %v1808
    %2570 = vmatpush1.bf16.msra.mxu0 %v1807
    %2571 = vmatprep.subr.bf16.mxu0 %v1848
    %2572 = vmatpush1.bf16.msra.mxu0 %v1847
    %2573 = vmatprep.subr.bf16.mxu0 %v1888
    %2574 = vmatpush1.bf16.msra.mxu0 %v1887
    %2575 = vmatprep.subr.bf16.mxu0 0
    %2576 = vmatpush1.bf16.msra.mxu0 0
    %2577 = vmatprep.subr.bf16.mxu0 0
    %2578 = vmatpush1.bf16.msra.mxu0 0
    %2579 = vmatprep.subr.bf16.mxu0 0
    %2580 = vmatpush1.bf16.msra.mxu0 0
    %2581 = vmatprep.subr.bf16.mxu0 0
    %2582 = vmatpush1.bf16.msra.mxu0 0
    %2583 = vmatprep.subr.bf16.mxu0 0
    %2584 = vmatpush1.bf16.msra.mxu0 0
    %2585 = vmatprep.subr.bf16.mxu0 0
    %2586 = vmatpush1.bf16.msra.mxu0 0
    %2587 = vmatprep.subr.bf16.mxu0 0
    %2588 = vmatpush1.bf16.msra.mxu0 0
    %2589 = vmatprep.subr.bf16.mxu0 0
    %2590 = vmatpush1.bf16.msra.mxu0 0
    %2591 = vmatprep.mubr.bf16.mxu0 0
    %2592 = vmatmul.mubr.bf16.gmra.mrb[0].mxu0 %v100
    %v2593 = vpop.f32.mrb[0].mxu0
    %v2594 = vadd.f32 %v498, %v2593
    %v2595 = vpop.f32.mrb[0].mxu0
    %v2596 = vadd.f32 %v502, %v2595
    %v2597 = vpop.f32.mrb[0].mxu0
    %v2598 = vpop.f32.mrb[0].mxu0
    %2599 = vdwg.mxu0
    %2600 = vmatprep.subr.bf16.mxu0 %v1610
    %2601 = vmatpush1.bf16.msra.mxu0 %v1609
    %2602 = vmatprep.subr.bf16.mxu0 %v1650
    %2603 = vmatpush1.bf16.msra.mxu0 %v1649
    %2604 = vmatprep.subr.bf16.mxu0 %v1690
    %2605 = vmatpush1.bf16.msra.mxu0 %v1689
    %2606 = vmatprep.subr.bf16.mxu0 %v1730
    %2607 = vmatpush1.bf16.msra.mxu0 %v1729
    %2608 = vmatprep.subr.bf16.mxu0 %v1770
    %2609 = vmatpush1.bf16.msra.mxu0 %v1769
    %2610 = vmatprep.subr.bf16.mxu0 %v1810
    %2611 = vmatpush1.bf16.msra.mxu0 %v1809
    %2612 = vmatprep.subr.bf16.mxu0 %v1850
    %2613 = vmatpush1.bf16.msra.mxu0 %v1849
    %2614 = vmatprep.subr.bf16.mxu0 %v1890
    %2615 = vmatpush1.bf16.msra.mxu0 %v1889
    %2616 = vmatprep.subr.bf16.mxu0 0
    %2617 = vmatpush1.bf16.msra.mxu0 0
    %2618 = vmatprep.subr.bf16.mxu0 0
    %2619 = vmatpush1.bf16.msra.mxu0 0
    %2620 = vmatprep.subr.bf16.mxu0 0
    %2621 = vmatpush1.bf16.msra.mxu0 0
    %2622 = vmatprep.subr.bf16.mxu0 0
    %2623 = vmatpush1.bf16.msra.mxu0 0
    %2624 = vmatprep.subr.bf16.mxu0 0
    %2625 = vmatpush1.bf16.msra.mxu0 0
    %2626 = vmatprep.subr.bf16.mxu0 0
    %2627 = vmatpush1.bf16.msra.mxu0 0
    %2628 = vmatprep.subr.bf16.mxu0 0
    %2629 = vmatpush1.bf16.msra.mxu0 0
    %2630 = vmatprep.subr.bf16.mxu0 0
    %2631 = vmatpush1.bf16.msra.mxu0 0
    %2632 = vmatprep.mubr.bf16.mxu0 0
    %2633 = vmatmul.mubr.bf16.gmra.mrb[0].mxu0 %v100
    %v2634 = vpop.f32.mrb[0].mxu0
    %v2635 = vadd.f32 %v506, %v2634
    %v2636 = vpop.f32.mrb[0].mxu0
    %v2637 = vadd.f32 %v510, %v2636
    %v2638 = vpop.f32.mrb[0].mxu0
    %v2639 = vpop.f32.mrb[0].mxu0
    %2640 = vdwg.mxu0
    %2641 = vmatprep.subr.bf16.mxu0 %v1612
    %2642 = vmatpush1.bf16.msra.mxu0 %v1611
    %2643 = vmatprep.subr.bf16.mxu0 %v1652
    %2644 = vmatpush1.bf16.msra.mxu0 %v1651
    %2645 = vmatprep.subr.bf16.mxu0 %v1692
    %2646 = vmatpush1.bf16.msra.mxu0 %v1691
    %2647 = vmatprep.subr.bf16.mxu0 %v1732
    %2648 = vmatpush1.bf16.msra.mxu0 %v1731
    %2649 = vmatprep.subr.bf16.mxu0 %v1772
    %2650 = vmatpush1.bf16.msra.mxu0 %v1771
    %2651 = vmatprep.subr.bf16.mxu0 %v1812
    %2652 = vmatpush1.bf16.msra.mxu0 %v1811
    %2653 = vmatprep.subr.bf16.mxu0 %v1852
    %2654 = vmatpush1.bf16.msra.mxu0 %v1851
    %2655 = vmatprep.subr.bf16.mxu0 %v1892
    %2656 = vmatpush1.bf16.msra.mxu0 %v1891
    %2657 = vmatprep.subr.bf16.mxu0 0
    %2658 = vmatpush1.bf16.msra.mxu0 0
    %2659 = vmatprep.subr.bf16.mxu0 0
    %2660 = vmatpush1.bf16.msra.mxu0 0
    %2661 = vmatprep.subr.bf16.mxu0 0
    %2662 = vmatpush1.bf16.msra.mxu0 0
    %2663 = vmatprep.subr.bf16.mxu0 0
    %2664 = vmatpush1.bf16.msra.mxu0 0
    %2665 = vmatprep.subr.bf16.mxu0 0
    %2666 = vmatpush1.bf16.msra.mxu0 0
    %2667 = vmatprep.subr.bf16.mxu0 0
    %2668 = vmatpush1.bf16.msra.mxu0 0
    %2669 = vmatprep.subr.bf16.mxu0 0
    %2670 = vmatpush1.bf16.msra.mxu0 0
    %2671 = vmatprep.subr.bf16.mxu0 0
    %2672 = vmatpush1.bf16.msra.mxu0 0
    %2673 = vmatprep.mubr.bf16.mxu0 0
    %2674 = vmatmul.mubr.bf16.gmra.mrb[0].mxu0 %v100
    %v2675 = vpop.f32.mrb[0].mxu0
    %v2676 = vadd.f32 %v514, %v2675
    %v2677 = vpop.f32.mrb[0].mxu0
    %v2678 = vadd.f32 %v518, %v2677
    %v2679 = vpop.f32.mrb[0].mxu0
    %v2680 = vpop.f32.mrb[0].mxu0
    %2681 = vdwg.mxu0
    %2682 = vmatprep.subr.bf16.mxu0 %v1614
    %2683 = vmatpush1.bf16.msra.mxu0 %v1613
    %2684 = vmatprep.subr.bf16.mxu0 %v1654
    %2685 = vmatpush1.bf16.msra.mxu0 %v1653
    %2686 = vmatprep.subr.bf16.mxu0 %v1694
    %2687 = vmatpush1.bf16.msra.mxu0 %v1693
    %2688 = vmatprep.subr.bf16.mxu0 %v1734
    %2689 = vmatpush1.bf16.msra.mxu0 %v1733
    %2690 = vmatprep.subr.bf16.mxu0 %v1774
    %2691 = vmatpush1.bf16.msra.mxu0 %v1773
    %2692 = vmatprep.subr.bf16.mxu0 %v1814
    %2693 = vmatpush1.bf16.msra.mxu0 %v1813
    %2694 = vmatprep.subr.bf16.mxu0 %v1854
    %2695 = vmatpush1.bf16.msra.mxu0 %v1853
    %2696 = vmatprep.subr.bf16.mxu0 %v1894
    %2697 = vmatpush1.bf16.msra.mxu0 %v1893
    %2698 = vmatprep.subr.bf16.mxu0 0
    %2699 = vmatpush1.bf16.msra.mxu0 0
    %2700 = vmatprep.subr.bf16.mxu0 0
    %2701 = vmatpush1.bf16.msra.mxu0 0
    %2702 = vmatprep.subr.bf16.mxu0 0
    %2703 = vmatpush1.bf16.msra.mxu0 0
    %2704 = vmatprep.subr.bf16.mxu0 0
    %2705 = vmatpush1.bf16.msra.mxu0 0
    %2706 = vmatprep.subr.bf16.mxu0 0
    %2707 = vmatpush1.bf16.msra.mxu0 0
    %2708 = vmatprep.subr.bf16.mxu0 0
    %2709 = vmatpush1.bf16.msra.mxu0 0
    %2710 = vmatprep.subr.bf16.mxu0 0
    %2711 = vmatpush1.bf16.msra.mxu0 0
    %2712 = vmatprep.subr.bf16.mxu0 0
    %2713 = vmatpush1.bf16.msra.mxu0 0
    %2714 = vmatprep.mubr.bf16.mxu0 0
    %2715 = vmatmul.mubr.bf16.gmra.mrb[0].mxu0 %v100
    %v2716 = vpop.f32.mrb[0].mxu0
    %v2717 = vadd.f32 %v522, %v2716
    %v2718 = vpop.f32.mrb[0].mxu0
    %v2719 = vadd.f32 %v526, %v2718
    %v2720 = vpop.f32.mrb[0].mxu0
    %v2721 = vpop.f32.mrb[0].mxu0
    %2722 = vdwg.mxu0
    %2723 = vmatprep.subr.bf16.mxu0 %v1616
    %2724 = vmatpush1.bf16.msra.mxu0 %v1615
    %2725 = vmatprep.subr.bf16.mxu0 %v1656
    %2726 = vmatpush1.bf16.msra.mxu0 %v1655
    %2727 = vmatprep.subr.bf16.mxu0 %v1696
    %2728 = vmatpush1.bf16.msra.mxu0 %v1695
    %2729 = vmatprep.subr.bf16.mxu0 %v1736
    %2730 = vmatpush1.bf16.msra.mxu0 %v1735
    %2731 = vmatprep.subr.bf16.mxu0 %v1776
    %2732 = vmatpush1.bf16.msra.mxu0 %v1775
    %2733 = vmatprep.subr.bf16.mxu0 %v1816
    %2734 = vmatpush1.bf16.msra.mxu0 %v1815
    %2735 = vmatprep.subr.bf16.mxu0 %v1856
    %2736 = vmatpush1.bf16.msra.mxu0 %v1855
    %2737 = vmatprep.subr.bf16.mxu0 %v1896
    %2738 = vmatpush1.bf16.msra.mxu0 %v1895
    %2739 = vmatprep.subr.bf16.mxu0 0
    %2740 = vmatpush1.bf16.msra.mxu0 0
    %2741 = vmatprep.subr.bf16.mxu0 0
    %2742 = vmatpush1.bf16.msra.mxu0 0
    %2743 = vmatprep.subr.bf16.mxu0 0
    %2744 = vmatpush1.bf16.msra.mxu0 0
    %2745 = vmatprep.subr.bf16.mxu0 0
    %2746 = vmatpush1.bf16.msra.mxu0 0
    %2747 = vmatprep.subr.bf16.mxu0 0
    %2748 = vmatpush1.bf16.msra.mxu0 0
    %2749 = vmatprep.subr.bf16.mxu0 0
    %2750 = vmatpush1.bf16.msra.mxu0 0
    %2751 = vmatprep.subr.bf16.mxu0 0
    %2752 = vmatpush1.bf16.msra.mxu0 0
    %2753 = vmatprep.subr.bf16.mxu0 0
    %2754 = vmatpush1.bf16.msra.mxu0 0
    %2755 = vmatprep.mubr.bf16.mxu0 0
    %2756 = vmatmul.mubr.bf16.gmra.mrb[0].mxu0 %v100
    %v2757 = vpop.f32.mrb[0].mxu0
    %v2758 = vadd.f32 %v530, %v2757
    %v2759 = vpop.f32.mrb[0].mxu0
    %v2760 = vadd.f32 %v534, %v2759
    %v2761 = vpop.f32.mrb[0].mxu0
    %v2762 = vpop.f32.mrb[0].mxu0
    %2763 = vdwg.mxu0
    %2764 = vmatprep.subr.bf16.mxu0 %v1618
    %2765 = vmatpush1.bf16.msra.mxu0 %v1617
    %2766 = vmatprep.subr.bf16.mxu0 %v1658
    %2767 = vmatpush1.bf16.msra.mxu0 %v1657
    %2768 = vmatprep.subr.bf16.mxu0 %v1698
    %2769 = vmatpush1.bf16.msra.mxu0 %v1697
    %2770 = vmatprep.subr.bf16.mxu0 %v1738
    %2771 = vmatpush1.bf16.msra.mxu0 %v1737
    %2772 = vmatprep.subr.bf16.mxu0 %v1778
    %2773 = vmatpush1.bf16.msra.mxu0 %v1777
    %2774 = vmatprep.subr.bf16.mxu0 %v1818
    %2775 = vmatpush1.bf16.msra.mxu0 %v1817
    %2776 = vmatprep.subr.bf16.mxu0 %v1858
    %2777 = vmatpush1.bf16.msra.mxu0 %v1857
    %2778 = vmatprep.subr.bf16.mxu0 %v1898
    %2779 = vmatpush1.bf16.msra.mxu0 %v1897
    %2780 = vmatprep.subr.bf16.mxu0 0
    %2781 = vmatpush1.bf16.msra.mxu0 0
    %2782 = vmatprep.subr.bf16.mxu0 0
    %2783 = vmatpush1.bf16.msra.mxu0 0
    %2784 = vmatprep.subr.bf16.mxu0 0
    %2785 = vmatpush1.bf16.msra.mxu0 0
    %2786 = vmatprep.subr.bf16.mxu0 0
    %2787 = vmatpush1.bf16.msra.mxu0 0
    %2788 = vmatprep.subr.bf16.mxu0 0
    %2789 = vmatpush1.bf16.msra.mxu0 0
    %2790 = vmatprep.subr.bf16.mxu0 0
    %2791 = vmatpush1.bf16.msra.mxu0 0
    %2792 = vmatprep.subr.bf16.mxu0 0
    %2793 = vmatpush1.bf16.msra.mxu0 0
    %2794 = vmatprep.subr.bf16.mxu0 0
    %2795 = vmatpush1.bf16.msra.mxu0 0
    %2796 = vmatprep.mubr.bf16.mxu0 0
    %2797 = vmatmul.mubr.bf16.gmra.mrb[0].mxu0 %v100
    %v2798 = vpop.f32.mrb[0].mxu0
    %v2799 = vadd.f32 %v538, %v2798
    %v2800 = vpop.f32.mrb[0].mxu0
    %v2801 = vadd.f32 %v542, %v2800
    %v2802 = vpop.f32.mrb[0].mxu0
    %v2803 = vpop.f32.mrb[0].mxu0
    %2804 = vdwg.mxu0
    %2805 = vmatprep.subr.bf16.mxu0 %v1620
    %2806 = vmatpush1.bf16.msra.mxu0 %v1619
    %2807 = vmatprep.subr.bf16.mxu0 %v1660
    %2808 = vmatpush1.bf16.msra.mxu0 %v1659
    %2809 = vmatprep.subr.bf16.mxu0 %v1700
    %2810 = vmatpush1.bf16.msra.mxu0 %v1699
    %2811 = vmatprep.subr.bf16.mxu0 %v1740
    %2812 = vmatpush1.bf16.msra.mxu0 %v1739
    %2813 = vmatprep.subr.bf16.mxu0 %v1780
    %2814 = vmatpush1.bf16.msra.mxu0 %v1779
    %2815 = vmatprep.subr.bf16.mxu0 %v1820
    %2816 = vmatpush1.bf16.msra.mxu0 %v1819
    %2817 = vmatprep.subr.bf16.mxu0 %v1860
    %2818 = vmatpush1.bf16.msra.mxu0 %v1859
    %2819 = vmatprep.subr.bf16.mxu0 %v1900
    %2820 = vmatpush1.bf16.msra.mxu0 %v1899
    %2821 = vmatprep.subr.bf16.mxu0 0
    %2822 = vmatpush1.bf16.msra.mxu0 0
    %2823 = vmatprep.subr.bf16.mxu0 0
    %2824 = vmatpush1.bf16.msra.mxu0 0
    %2825 = vmatprep.subr.bf16.mxu0 0
    %2826 = vmatpush1.bf16.msra.mxu0 0
    %2827 = vmatprep.subr.bf16.mxu0 0
    %2828 = vmatpush1.bf16.msra.mxu0 0
    %2829 = vmatprep.subr.bf16.mxu0 0
    %2830 = vmatpush1.bf16.msra.mxu0 0
    %2831 = vmatprep.subr.bf16.mxu0 0
    %2832 = vmatpush1.bf16.msra.mxu0 0
    %2833 = vmatprep.subr.bf16.mxu0 0
    %2834 = vmatpush1.bf16.msra.mxu0 0
    %2835 = vmatprep.subr.bf16.mxu0 0
    %2836 = vmatpush1.bf16.msra.mxu0 0
    %2837 = vmatprep.mubr.bf16.mxu0 0
    %2838 = vmatmul.mubr.bf16.gmra.mrb[0].mxu0 %v100
    %v2839 = vpop.f32.mrb[0].mxu0
    %v2840 = vadd.f32 %v546, %v2839
    %v2841 = vpop.f32.mrb[0].mxu0
    %v2842 = vadd.f32 %v550, %v2841
    %v2843 = vpop.f32.mrb[0].mxu0
    %v2844 = vpop.f32.mrb[0].mxu0
    %2845 = vdwg.mxu0
    %2846 = vmatprep.subr.bf16.mxu0 %v1622
    %2847 = vmatpush1.bf16.msra.mxu0 %v1621
    %2848 = vmatprep.subr.bf16.mxu0 %v1662
    %2849 = vmatpush1.bf16.msra.mxu0 %v1661
    %2850 = vmatprep.subr.bf16.mxu0 %v1702
    %2851 = vmatpush1.bf16.msra.mxu0 %v1701
    %2852 = vmatprep.subr.bf16.mxu0 %v1742
    %2853 = vmatpush1.bf16.msra.mxu0 %v1741
    %2854 = vmatprep.subr.bf16.mxu0 %v1782
    %2855 = vmatpush1.bf16.msra.mxu0 %v1781
    %2856 = vmatprep.subr.bf16.mxu0 %v1822
    %2857 = vmatpush1.bf16.msra.mxu0 %v1821
    %2858 = vmatprep.subr.bf16.mxu0 %v1862
    %2859 = vmatpush1.bf16.msra.mxu0 %v1861
    %2860 = vmatprep.subr.bf16.mxu0 %v1902
    %2861 = vmatpush1.bf16.msra.mxu0 %v1901
    %2862 = vmatprep.subr.bf16.mxu0 0
    %2863 = vmatpush1.bf16.msra.mxu0 0
    %2864 = vmatprep.subr.bf16.mxu0 0
    %2865 = vmatpush1.bf16.msra.mxu0 0
    %2866 = vmatprep.subr.bf16.mxu0 0
    %2867 = vmatpush1.bf16.msra.mxu0 0
    %2868 = vmatprep.subr.bf16.mxu0 0
    %2869 = vmatpush1.bf16.msra.mxu0 0
    %2870 = vmatprep.subr.bf16.mxu0 0
    %2871 = vmatpush1.bf16.msra.mxu0 0
    %2872 = vmatprep.subr.bf16.mxu0 0
    %2873 = vmatpush1.bf16.msra.mxu0 0
    %2874 = vmatprep.subr.bf16.mxu0 0
    %2875 = vmatpush1.bf16.msra.mxu0 0
    %2876 = vmatprep.subr.bf16.mxu0 0
    %2877 = vmatpush1.bf16.msra.mxu0 0
    %2878 = vmatprep.mubr.bf16.mxu0 0
    %2879 = vmatmul.mubr.bf16.gmra.mrb[0].mxu0 %v100
    %v2880 = vpop.f32.mrb[0].mxu0
    %v2881 = vadd.f32 %v554, %v2880
    %v2882 = vpop.f32.mrb[0].mxu0
    %v2883 = vadd.f32 %v558, %v2882
    %v2884 = vpop.f32.mrb[0].mxu0
    %v2885 = vpop.f32.mrb[0].mxu0
    %2886 = vdwg.mxu0
    %2887 = vmatprep.subr.bf16.mxu0 %v1624
    %2888 = vmatpush1.bf16.msra.mxu0 %v1623
    %2889 = vmatprep.subr.bf16.mxu0 %v1664
    %2890 = vmatpush1.bf16.msra.mxu0 %v1663
    %2891 = vmatprep.subr.bf16.mxu0 %v1704
    %2892 = vmatpush1.bf16.msra.mxu0 %v1703
    %2893 = vmatprep.subr.bf16.mxu0 %v1744
    %2894 = vmatpush1.bf16.msra.mxu0 %v1743
    %2895 = vmatprep.subr.bf16.mxu0 %v1784
    %2896 = vmatpush1.bf16.msra.mxu0 %v1783
    %2897 = vmatprep.subr.bf16.mxu0 %v1824
    %2898 = vmatpush1.bf16.msra.mxu0 %v1823
    %2899 = vmatprep.subr.bf16.mxu0 %v1864
    %2900 = vmatpush1.bf16.msra.mxu0 %v1863
    %2901 = vmatprep.subr.bf16.mxu0 %v1904
    %2902 = vmatpush1.bf16.msra.mxu0 %v1903
    %2903 = vmatprep.subr.bf16.mxu0 0
    %2904 = vmatpush1.bf16.msra.mxu0 0
    %2905 = vmatprep.subr.bf16.mxu0 0
    %2906 = vmatpush1.bf16.msra.mxu0 0
    %2907 = vmatprep.subr.bf16.mxu0 0
    %2908 = vmatpush1.bf16.msra.mxu0 0
    %2909 = vmatprep.subr.bf16.mxu0 0
    %2910 = vmatpush1.bf16.msra.mxu0 0
    %2911 = vmatprep.subr.bf16.mxu0 0
    %2912 = vmatpush1.bf16.msra.mxu0 0
    %2913 = vmatprep.subr.bf16.mxu0 0
    %2914 = vmatpush1.bf16.msra.mxu0 0
    %2915 = vmatprep.subr.bf16.mxu0 0
    %2916 = vmatpush1.bf16.msra.mxu0 0
    %2917 = vmatprep.subr.bf16.mxu0 0
    %2918 = vmatpush1.bf16.msra.mxu0 0
    %2919 = vmatprep.mubr.bf16.mxu0 0
    %2920 = vmatmul.mubr.bf16.gmra.mrb[0].mxu0 %v100
    %v2921 = vpop.f32.mrb[0].mxu0
    %v2922 = vadd.f32 %v562, %v2921
    %v2923 = vpop.f32.mrb[0].mxu0
    %v2924 = vadd.f32 %v566, %v2923
    %v2925 = vpop.f32.mrb[0].mxu0
    %v2926 = vpop.f32.mrb[0].mxu0
    %2927 = vdwg.mxu0
    %2928 = vmatprep.subr.bf16.mxu0 %v1626
    %2929 = vmatpush1.bf16.msra.mxu0 %v1625
    %2930 = vmatprep.subr.bf16.mxu0 %v1666
    %2931 = vmatpush1.bf16.msra.mxu0 %v1665
    %2932 = vmatprep.subr.bf16.mxu0 %v1706
    %2933 = vmatpush1.bf16.msra.mxu0 %v1705
    %2934 = vmatprep.subr.bf16.mxu0 %v1746
    %2935 = vmatpush1.bf16.msra.mxu0 %v1745
    %2936 = vmatprep.subr.bf16.mxu0 %v1786
    %2937 = vmatpush1.bf16.msra.mxu0 %v1785
    %2938 = vmatprep.subr.bf16.mxu0 %v1826
    %2939 = vmatpush1.bf16.msra.mxu0 %v1825
    %2940 = vmatprep.subr.bf16.mxu0 %v1866
    %2941 = vmatpush1.bf16.msra.mxu0 %v1865
    %2942 = vmatprep.subr.bf16.mxu0 %v1906
    %2943 = vmatpush1.bf16.msra.mxu0 %v1905
    %2944 = vmatprep.subr.bf16.mxu0 0
    %2945 = vmatpush1.bf16.msra.mxu0 0
    %2946 = vmatprep.subr.bf16.mxu0 0
    %2947 = vmatpush1.bf16.msra.mxu0 0
    %2948 = vmatprep.subr.bf16.mxu0 0
    %2949 = vmatpush1.bf16.msra.mxu0 0
    %2950 = vmatprep.subr.bf16.mxu0 0
    %2951 = vmatpush1.bf16.msra.mxu0 0
    %2952 = vmatprep.subr.bf16.mxu0 0
    %2953 = vmatpush1.bf16.msra.mxu0 0
    %2954 = vmatprep.subr.bf16.mxu0 0
    %2955 = vmatpush1.bf16.msra.mxu0 0
    %2956 = vmatprep.subr.bf16.mxu0 0
    %2957 = vmatpush1.bf16.msra.mxu0 0
    %2958 = vmatprep.subr.bf16.mxu0 0
    %2959 = vmatpush1.bf16.msra.mxu0 0
    %2960 = vmatprep.mubr.bf16.mxu0 0
    %2961 = vmatmul.mubr.bf16.gmra.mrb[0].mxu0 %v100
    %v2962 = vpop.f32.mrb[0].mxu0
    %v2963 = vadd.f32 %v570, %v2962
    %v2964 = vpop.f32.mrb[0].mxu0
    %v2965 = vadd.f32 %v574, %v2964
    %v2966 = vpop.f32.mrb[0].mxu0
    %v2967 = vpop.f32.mrb[0].mxu0
    %2968 = vdwg.mxu0
    %2969 = vmatprep.subr.bf16.mxu0 %v1628
    %2970 = vmatpush1.bf16.msra.mxu0 %v1627
    %2971 = vmatprep.subr.bf16.mxu0 %v1668
    %2972 = vmatpush1.bf16.msra.mxu0 %v1667
    %2973 = vmatprep.subr.bf16.mxu0 %v1708
    %2974 = vmatpush1.bf16.msra.mxu0 %v1707
    %2975 = vmatprep.subr.bf16.mxu0 %v1748
    %2976 = vmatpush1.bf16.msra.mxu0 %v1747
    %2977 = vmatprep.subr.bf16.mxu0 %v1788
    %2978 = vmatpush1.bf16.msra.mxu0 %v1787
    %2979 = vmatprep.subr.bf16.mxu0 %v1828
    %2980 = vmatpush1.bf16.msra.mxu0 %v1827
    %2981 = vmatprep.subr.bf16.mxu0 %v1868
    %2982 = vmatpush1.bf16.msra.mxu0 %v1867
    %2983 = vmatprep.subr.bf16.mxu0 %v1908
    %2984 = vmatpush1.bf16.msra.mxu0 %v1907
    %2985 = vmatprep.subr.bf16.mxu0 0
    %2986 = vmatpush1.bf16.msra.mxu0 0
    %2987 = vmatprep.subr.bf16.mxu0 0
    %2988 = vmatpush1.bf16.msra.mxu0 0
    %2989 = vmatprep.subr.bf16.mxu0 0
    %2990 = vmatpush1.bf16.msra.mxu0 0
    %2991 = vmatprep.subr.bf16.mxu0 0
    %2992 = vmatpush1.bf16.msra.mxu0 0
    %2993 = vmatprep.subr.bf16.mxu0 0
    %2994 = vmatpush1.bf16.msra.mxu0 0
    %2995 = vmatprep.subr.bf16.mxu0 0
    %2996 = vmatpush1.bf16.msra.mxu0 0
    %2997 = vmatprep.subr.bf16.mxu0 0
    %2998 = vmatpush1.bf16.msra.mxu0 0
    %2999 = vmatprep.subr.bf16.mxu0 0
    %3000 = vmatpush1.bf16.msra.mxu0 0
    %3001 = vmatprep.mubr.bf16.mxu0 0
    %3002 = vmatmul.mubr.bf16.gmra.mrb[0].mxu0 %v100
    %v3003 = vpop.f32.mrb[0].mxu0
    %v3004 = vadd.f32 %v578, %v3003
    %v3005 = vpop.f32.mrb[0].mxu0
    %v3006 = vadd.f32 %v582, %v3005
    %v3007 = vpop.f32.mrb[0].mxu0
    %v3008 = vpop.f32.mrb[0].mxu0
    %3009 = vdwg.mxu0
    %3010 = vmatprep.subr.bf16.mxu0 %v1630
    %3011 = vmatpush1.bf16.msra.mxu0 %v1629
    %3012 = vmatprep.subr.bf16.mxu0 %v1670
    %3013 = vmatpush1.bf16.msra.mxu0 %v1669
    %3014 = vmatprep.subr.bf16.mxu0 %v1710
    %3015 = vmatpush1.bf16.msra.mxu0 %v1709
    %3016 = vmatprep.subr.bf16.mxu0 %v1750
    %3017 = vmatpush1.bf16.msra.mxu0 %v1749
    %3018 = vmatprep.subr.bf16.mxu0 %v1790
    %3019 = vmatpush1.bf16.msra.mxu0 %v1789
    %3020 = vmatprep.subr.bf16.mxu0 %v1830
    %3021 = vmatpush1.bf16.msra.mxu0 %v1829
    %3022 = vmatprep.subr.bf16.mxu0 %v1870
    %3023 = vmatpush1.bf16.msra.mxu0 %v1869
    %3024 = vmatprep.subr.bf16.mxu0 %v1910
    %3025 = vmatpush1.bf16.msra.mxu0 %v1909
    %3026 = vmatprep.subr.bf16.mxu0 0
    %3027 = vmatpush1.bf16.msra.mxu0 0
    %3028 = vmatprep.subr.bf16.mxu0 0
    %3029 = vmatpush1.bf16.msra.mxu0 0
    %3030 = vmatprep.subr.bf16.mxu0 0
    %3031 = vmatpush1.bf16.msra.mxu0 0
    %3032 = vmatprep.subr.bf16.mxu0 0
    %3033 = vmatpush1.bf16.msra.mxu0 0
    %3034 = vmatprep.subr.bf16.mxu0 0
    %3035 = vmatpush1.bf16.msra.mxu0 0
    %3036 = vmatprep.subr.bf16.mxu0 0
    %3037 = vmatpush1.bf16.msra.mxu0 0
    %3038 = vmatprep.subr.bf16.mxu0 0
    %3039 = vmatpush1.bf16.msra.mxu0 0
    %3040 = vmatprep.subr.bf16.mxu0 0
    %3041 = vmatpush1.bf16.msra.mxu0 0
    %3042 = vmatprep.mubr.bf16.mxu0 0
    %3043 = vmatmul.mubr.bf16.gmra.mrb[0].mxu0 %v100
    %v3044 = vpop.f32.mrb[0].mxu0
    %v3045 = vadd.f32 %v586, %v3044
    %v3046 = vpop.f32.mrb[0].mxu0
    %v3047 = vadd.f32 %v590, %v3046
    %v3048 = vpop.f32.mrb[0].mxu0
    %v3049 = vpop.f32.mrb[0].mxu0
    %3050 = vdwg.mxu0
    %v3091 = vcombine.low %v2266, %v2268
    %v3092 = vcombine.low %v2307, %v2309
    %v3094 = vunpack.c.l.s4 1983009808
    %v3095 = vunpack.c.0.s8 %v3094
    %v3096 = vlaneseq
    %v3097 = vshrl.u32 %v3096, 7
    %v3098 = vsub.s32 %v3095, %v3097
    %v3099 = vrot.slane %v3091, %v3098
    %v3101 = vunpack.c.l.s4 1983009808
    %v3102 = vunpack.c.0.s8 %v3101
    %v3103 = vlaneseq
    %v3104 = vshrl.u32 %v3103, 7
    %v3105 = vsub.s32 %v3102, %v3104
    %v3106 = vrot.slane %v3092, %v3105
    %v3107 = vcombine.low %v3099, %v3106
    %v3108 = vcombine.low %v2348, %v2350
    %v3109 = vcombine.low %v2389, %v2391
    %v3111 = vunpack.c.l.s4 1983009808
    %v3112 = vunpack.c.0.s8 %v3111
    %v3113 = vlaneseq
    %v3114 = vshrl.u32 %v3113, 7
    %v3115 = vsub.s32 %v3112, %v3114
    %v3116 = vrot.slane %v3108, %v3115
    %v3118 = vunpack.c.l.s4 1983009808
    %v3119 = vunpack.c.0.s8 %v3118
    %v3120 = vlaneseq
    %v3121 = vshrl.u32 %v3120, 7
    %v3122 = vsub.s32 %v3119, %v3121
    %v3123 = vrot.slane %v3109, %v3122
    %v3124 = vcombine.low %v3116, %v3123
    %v3125 = vcombine.low %v2430, %v2432
    %v3126 = vcombine.low %v2471, %v2473
    %v3128 = vunpack.c.l.s4 1983009808
    %v3129 = vunpack.c.0.s8 %v3128
    %v3130 = vlaneseq
    %v3131 = vshrl.u32 %v3130, 7
    %v3132 = vsub.s32 %v3129, %v3131
    %v3133 = vrot.slane %v3125, %v3132
    %v3135 = vunpack.c.l.s4 1983009808
    %v3136 = vunpack.c.0.s8 %v3135
    %v3137 = vlaneseq
    %v3138 = vshrl.u32 %v3137, 7
    %v3139 = vsub.s32 %v3136, %v3138
    %v3140 = vrot.slane %v3126, %v3139
    %v3141 = vcombine.low %v3133, %v3140
    %v3142 = vcombine.low %v2512, %v2514
    %v3143 = vcombine.low %v2553, %v2555
    %v3145 = vunpack.c.l.s4 1983009808
    %v3146 = vunpack.c.0.s8 %v3145
    %v3147 = vlaneseq
    %v3148 = vshrl.u32 %v3147, 7
    %v3149 = vsub.s32 %v3146, %v3148
    %v3150 = vrot.slane %v3142, %v3149
    %v3152 = vunpack.c.l.s4 1983009808
    %v3153 = vunpack.c.0.s8 %v3152
    %v3154 = vlaneseq
    %v3155 = vshrl.u32 %v3154, 7
    %v3156 = vsub.s32 %v3153, %v3155
    %v3157 = vrot.slane %v3143, %v3156
    %v3158 = vcombine.low %v3150, %v3157
    %v3159 = vcombine.low %v2594, %v2596
    %v3160 = vcombine.low %v2635, %v2637
    %v3162 = vunpack.c.l.s4 1983009808
    %v3163 = vunpack.c.0.s8 %v3162
    %v3164 = vlaneseq
    %v3165 = vshrl.u32 %v3164, 7
    %v3166 = vsub.s32 %v3163, %v3165
    %v3167 = vrot.slane %v3159, %v3166
    %v3169 = vunpack.c.l.s4 1983009808
    %v3170 = vunpack.c.0.s8 %v3169
    %v3171 = vlaneseq
    %v3172 = vshrl.u32 %v3171, 7
    %v3173 = vsub.s32 %v3170, %v3172
    %v3174 = vrot.slane %v3160, %v3173
    %v3175 = vcombine.low %v3167, %v3174
    %v3176 = vcombine.low %v2676, %v2678
    %v3177 = vcombine.low %v2717, %v2719
    %v3179 = vunpack.c.l.s4 1983009808
    %v3180 = vunpack.c.0.s8 %v3179
    %v3181 = vlaneseq
    %v3182 = vshrl.u32 %v3181, 7
    %v3183 = vsub.s32 %v3180, %v3182
    %v3184 = vrot.slane %v3176, %v3183
    %v3186 = vunpack.c.l.s4 1983009808
    %v3187 = vunpack.c.0.s8 %v3186
    %v3188 = vlaneseq
    %v3189 = vshrl.u32 %v3188, 7
    %v3190 = vsub.s32 %v3187, %v3189
    %v3191 = vrot.slane %v3177, %v3190
    %v3192 = vcombine.low %v3184, %v3191
    %v3193 = vcombine.low %v2758, %v2760
    %v3194 = vcombine.low %v2799, %v2801
    %v3196 = vunpack.c.l.s4 1983009808
    %v3197 = vunpack.c.0.s8 %v3196
    %v3198 = vlaneseq
    %v3199 = vshrl.u32 %v3198, 7
    %v3200 = vsub.s32 %v3197, %v3199
    %v3201 = vrot.slane %v3193, %v3200
    %v3203 = vunpack.c.l.s4 1983009808
    %v3204 = vunpack.c.0.s8 %v3203
    %v3205 = vlaneseq
    %v3206 = vshrl.u32 %v3205, 7
    %v3207 = vsub.s32 %v3204, %v3206
    %v3208 = vrot.slane %v3194, %v3207
    %v3209 = vcombine.low %v3201, %v3208
    %v3210 = vcombine.low %v2840, %v2842
    %v3211 = vcombine.low %v2881, %v2883
    %v3213 = vunpack.c.l.s4 1983009808
    %v3214 = vunpack.c.0.s8 %v3213
    %v3215 = vlaneseq
    %v3216 = vshrl.u32 %v3215, 7
    %v3217 = vsub.s32 %v3214, %v3216
    %v3218 = vrot.slane %v3210, %v3217
    %v3220 = vunpack.c.l.s4 1983009808
    %v3221 = vunpack.c.0.s8 %v3220
    %v3222 = vlaneseq
    %v3223 = vshrl.u32 %v3222, 7
    %v3224 = vsub.s32 %v3221, %v3223
    %v3225 = vrot.slane %v3211, %v3224
    %v3226 = vcombine.low %v3218, %v3225
    %v3227 = vcombine.low %v2922, %v2924
    %v3228 = vcombine.low %v2963, %v2965
    %v3230 = vunpack.c.l.s4 1983009808
    %v3231 = vunpack.c.0.s8 %v3230
    %v3232 = vlaneseq
    %v3233 = vshrl.u32 %v3232, 7
    %v3234 = vsub.s32 %v3231, %v3233
    %v3235 = vrot.slane %v3227, %v3234
    %v3237 = vunpack.c.l.s4 1983009808
    %v3238 = vunpack.c.0.s8 %v3237
    %v3239 = vlaneseq
    %v3240 = vshrl.u32 %v3239, 7
    %v3241 = vsub.s32 %v3238, %v3240
    %v3242 = vrot.slane %v3228, %v3241
    %v3243 = vcombine.low %v3235, %v3242
    %v3244 = vcombine.low %v3004, %v3006
    %v3245 = vcombine.low %v3045, %v3047
    %v3247 = vunpack.c.l.s4 1983009808
    %v3248 = vunpack.c.0.s8 %v3247
    %v3249 = vlaneseq
    %v3250 = vshrl.u32 %v3249, 7
    %v3251 = vsub.s32 %v3248, %v3250
    %v3252 = vrot.slane %v3244, %v3251
    %v3254 = vunpack.c.l.s4 1983009808
    %v3255 = vunpack.c.0.s8 %v3254
    %v3256 = vlaneseq
    %v3257 = vshrl.u32 %v3256, 7
    %v3258 = vsub.s32 %v3255, %v3257
    %v3259 = vrot.slane %v3245, %v3258
    %v3260 = vcombine.low %v3252, %v3259
    %3271 = vst [vmem:[#allocation2] sm:$0xff] %v3107
    %3272 = vst [vmem:[#allocation2 + $0x8] sm:$0xff] %v3124
    %3273 = vst [vmem:[#allocation2 + $0x10] sm:$0xff] %v3141
    %3274 = vst [vmem:[#allocation2 + $0x18] sm:$0xff] %v3158
    %3275 = vst [vmem:[#allocation2 + $0x20] sm:$0xff] %v3175
    %3276 = vst [vmem:[#allocation2 + $0x28] sm:$0xff] %v3192
    %3277 = vst [vmem:[#allocation2 + $0x30] sm:$0xff] %v3209
    %3278 = vst [vmem:[#allocation2 + $0x38] sm:$0xff] %v3226
    %3279 = vst [vmem:[#allocation2 + $0x40] sm:$0xff] %v3243
    %3280 = vst [vmem:[#allocation2 + $0x48] sm:$0xff] %v3260
    %3281 = vst [vmem:[#allocation16] sm:$0xff] 0.0
    %3282 = vst [vmem:[#allocation16 + $0x8] sm:$0xff] 0.0
    %3283 = vst [vmem:[#allocation16 + $0x10] sm:$0xff] 0.0
    %3284 = vst [vmem:[#allocation16 + $0x18] sm:$0xff] 0.0
    %3285 = vst [vmem:[#allocation16 + $0x20] sm:$0xff] 0.0
    %3286 = vst [vmem:[#allocation16 + $0x28] sm:$0xff] 0.0
    %3287 = vst [vmem:[#allocation16 + $0x30] sm:$0xff] 0.0
    %3288 = vst [vmem:[#allocation16 + $0x38] sm:$0xff] 0.0
    %3289 = vst [vmem:[#allocation16 + $0x40] sm:$0xff] 0.0
    %3290 = vst [vmem:[#allocation16 + $0x48] sm:$0xff] 0.0
    %v3291 = vld [vmem:[#allocation11] sm:$0xff]
    %v3292 = vld [vmem:[#allocation13] sm:$0xff]
    %v3293 = vld [vmem:[#allocation2] sm:$0xff]
    %v3294 = vld [vmem:[#allocation2 + $0x8] sm:$0xff]
    %v3297 = vcombine.high %v3293, %v3293
    %v3299 = vunpack.c.l.s4 1983009808
    %v3300 = vunpack.c.0.s8 %v3299
    %v3301 = vlaneseq
    %v3302 = vshrl.u32 %v3301, 7
    %v3303 = vsub.s32 %v3300, %v3302
    %v3304 = vrot.slane %v3293, %v3303
    %v3306 = vunpack.c.l.s4 1983009808
    %v3307 = vunpack.c.0.s8 %v3306
    %v3308 = vlaneseq
    %v3309 = vshrl.u32 %v3308, 7
    %v3310 = vsub.s32 %v3307, %v3309
    %v3311 = vrot.slane %v3297, %v3310
    %v3312 = vcombine.high %v3304, %v3304
    %v3313 = vcombine.high %v3311, %v3311
    %v3314 = vcombine.high %v3294, %v3294
    %v3316 = vunpack.c.l.s4 1983009808
    %v3317 = vunpack.c.0.s8 %v3316
    %v3318 = vlaneseq
    %v3319 = vshrl.u32 %v3318, 7
    %v3320 = vsub.s32 %v3317, %v3319
    %v3321 = vrot.slane %v3294, %v3320
    %v3323 = vunpack.c.l.s4 1983009808
    %v3324 = vunpack.c.0.s8 %v3323
    %v3325 = vlaneseq
    %v3326 = vshrl.u32 %v3325, 7
    %v3327 = vsub.s32 %v3324, %v3326
    %v3328 = vrot.slane %v3314, %v3327
    %v3329 = vcombine.high %v3321, %v3321
    %v3330 = vcombine.high %v3328, %v3328
    %vm3339 = vcmask 1041408
    %v3340 = vsel %vm3339, %v3304, -inf
    %v3341 = vsel %vm3339, %v3312, -inf
    %v3342 = vsel %vm3339, %v3311, -inf
    %v3343 = vsel %vm3339, %v3313, -inf
    %v3344 = vsel %vm3339, %v3321, -inf
    %v3345 = vmax.f32 %v3340, %v3344
    %v3346 = vsel %vm3339, %v3329, -inf
    %v3347 = vmax.f32 %v3341, %v3346
    %v3348 = vsel %vm3339, %v3328, -inf
    %v3349 = vmax.f32 %v3342, %v3348
    %vm3350 = vcmask 25600
    %v3351 = vsel %vm3350, %v3330, -inf
    %v3352 = vmax.f32 %v3343, %v3351
    %v3353 = vmax.f32 %v3345, %v3347
    %v3354 = vmax.f32 %v3349, %v3352
    %v3355 = vmax.f32 %v3353, %v3354
    %3356 = vmax.xlane.f32.xlu0 %v3355
    %v3357 = vpop.xlane.xlu0 %3356
    %v3360 = vunpack.c.l.s4 269488144
    %v3361 = vunpack.c.0.s8 %v3360
    %v3362 = vlaneseq
    %v3363 = vshrl.u32 %v3362, 7
    %v3364 = vsub.s32 %v3361, %v3363
    %v3365 = vrot.slane %v3357, %v3364
    %v3367 = vsub.f32 %v3293, %v3365
    %v3368 = vsub.f32 %v3294, %v3365
    %v3369 = vmul.f32 %v3367, 1.442695
    %v3370 = vpow.pop %v3369
    %v3371 = vmul.f32 %v3368, 1.442695
    %v3372 = vpow.pop %v3371
    %v3375 = vcombine.high %v3370, %v3370
    %v3377 = vunpack.c.l.s4 1983009808
    %v3378 = vunpack.c.0.s8 %v3377
    %v3379 = vlaneseq
    %v3380 = vshrl.u32 %v3379, 7
    %v3381 = vsub.s32 %v3378, %v3380
    %v3382 = vrot.slane %v3370, %v3381
    %v3384 = vunpack.c.l.s4 1983009808
    %v3385 = vunpack.c.0.s8 %v3384
    %v3386 = vlaneseq
    %v3387 = vshrl.u32 %v3386, 7
    %v3388 = vsub.s32 %v3385, %v3387
    %v3389 = vrot.slane %v3375, %v3388
    %v3390 = vcombine.high %v3382, %v3382
    %v3391 = vcombine.high %v3389, %v3389
    %v3392 = vcombine.high %v3372, %v3372
    %v3394 = vunpack.c.l.s4 1983009808
    %v3395 = vunpack.c.0.s8 %v3394
    %v3396 = vlaneseq
    %v3397 = vshrl.u32 %v3396, 7
    %v3398 = vsub.s32 %v3395, %v3397
    %v3399 = vrot.slane %v3372, %v3398
    %v3401 = vunpack.c.l.s4 1983009808
    %v3402 = vunpack.c.0.s8 %v3401
    %v3403 = vlaneseq
    %v3404 = vshrl.u32 %v3403, 7
    %v3405 = vsub.s32 %v3402, %v3404
    %v3406 = vrot.slane %v3392, %v3405
    %v3407 = vcombine.high %v3399, %v3399
    %v3408 = vcombine.high %v3406, %v3406
    %v3417 = vsel %vm3339, %v3382, 0.0
    %v3418 = vsel %vm3339, %v3390, 0.0
    %v3419 = vadd.f32 %v3417, %v3418
    %v3420 = vsel %vm3339, %v3389, 0.0
    %v3421 = vadd.f32 %v3419, %v3420
    %v3422 = vsel %vm3339, %v3391, 0.0
    %v3423 = vadd.f32 %v3421, %v3422
    %v3424 = vsel %vm3339, %v3399, 0.0
    %v3425 = vadd.f32 %v3423, %v3424
    %v3426 = vsel %vm3339, %v3407, 0.0
    %v3427 = vadd.f32 %v3425, %v3426
    %v3428 = vsel %vm3339, %v3406, 0.0
    %v3429 = vadd.f32 %v3427, %v3428
    %v3430 = vsel %vm3350, %v3408, 0.0
    %v3431 = vadd.f32 %v3429, %v3430
    %3432 = vadd.xlane.f32.xlu0 %v3431
    %v3433 = vpop.xlane.xlu0 %3432
    %v3434 = vrcp.pop %v3433
    %v3437 = vunpack.c.l.s4 269488144
    %v3438 = vunpack.c.0.s8 %v3437
    %v3439 = vlaneseq
    %v3440 = vshrl.u32 %v3439, 7
    %v3441 = vsub.s32 %v3438, %v3440
    %v3442 = vrot.slane %v3434, %v3441
    %v3444 = vmul.f32 %v3370, %v3442
    %v3445 = vmul.f32 %v3372, %v3442
    %3446 = vst [vmem:[#allocation16] sm:$0xff] %v3444
    %vm3447 = vcmask 1043458
    %vm3448 = vmor %vm3447, %vm3339
    %vm3449 = vcmask 1045508
    %vm3450 = vmor %vm3449, %vm3448
    %vm3451 = vcmask 31750
    %vm3452 = vmor %vm3451, %vm3450
    %3453 = vst.msk [vmem:[#allocation16 + $0x8] sm:$0xff] %vm3452, %v3445
    %v3455 = vlaneseq
    %v3456 = vshrl.u32 %v3455, 7
    %v3457 = vsub.s32 0, %v3456
    %v3458 = vrot.slane %v3291, %v3457
    %v3459 = vlaneseq
    %v3460 = vshrl.u32 %v3459, 7
    %v3461 = vsub.s32 1, %v3460
    %v3462 = vrot.slane %v3291, %v3461
    %v3463 = vlaneseq
    %v3464 = vshrl.u32 %v3463, 7
    %v3465 = vsub.s32 2, %v3464
    %v3466 = vrot.slane %v3291, %v3465
    %v3467 = vlaneseq
    %v3468 = vshrl.u32 %v3467, 7
    %v3469 = vsub.s32 3, %v3468
    %v3470 = vrot.slane %v3291, %v3469
    %v3471 = vlaneseq
    %v3472 = vshrl.u32 %v3471, 7
    %v3473 = vsub.s32 4, %v3472
    %v3474 = vrot.slane %v3291, %v3473
    %v3475 = vlaneseq
    %v3476 = vshrl.u32 %v3475, 7
    %v3477 = vsub.s32 5, %v3476
    %v3478 = vrot.slane %v3291, %v3477
    %v3479 = vlaneseq
    %v3480 = vshrl.u32 %v3479, 7
    %v3481 = vsub.s32 6, %v3480
    %v3482 = vrot.slane %v3291, %v3481
    %v3483 = vlaneseq
    %v3484 = vshrl.u32 %v3483, 7
    %v3485 = vsub.s32 7, %v3484
    %v3486 = vrot.slane %v3291, %v3485
    %v3487 = vcombine.low %v3458, %v3462
    %v3488 = vcombine.low %v3466, %v3470
    %v3490 = vunpack.c.l.s4 1983009808
    %v3491 = vunpack.c.0.s8 %v3490
    %v3492 = vlaneseq
    %v3493 = vshrl.u32 %v3492, 7
    %v3494 = vsub.s32 %v3491, %v3493
    %v3495 = vrot.slane %v3487, %v3494
    %v3497 = vunpack.c.l.s4 1983009808
    %v3498 = vunpack.c.0.s8 %v3497
    %v3499 = vlaneseq
    %v3500 = vshrl.u32 %v3499, 7
    %v3501 = vsub.s32 %v3498, %v3500
    %v3502 = vrot.slane %v3488, %v3501
    %v3503 = vcombine.low %v3495, %v3502
    %v3504 = vcombine.low %v3474, %v3478
    %v3505 = vcombine.low %v3482, %v3486
    %v3507 = vunpack.c.l.s4 1983009808
    %v3508 = vunpack.c.0.s8 %v3507
    %v3509 = vlaneseq
    %v3510 = vshrl.u32 %v3509, 7
    %v3511 = vsub.s32 %v3508, %v3510
    %v3512 = vrot.slane %v3504, %v3511
    %v3514 = vunpack.c.l.s4 1983009808
    %v3515 = vunpack.c.0.s8 %v3514
    %v3516 = vlaneseq
    %v3517 = vshrl.u32 %v3516, 7
    %v3518 = vsub.s32 %v3515, %v3517
    %v3519 = vrot.slane %v3505, %v3518
    %v3520 = vcombine.low %v3512, %v3519
    %v3523 = vmul.f32 %v3370, %v3503
    %v3524 = vmul.f32 %v3372, %v3520
    %v3527 = vcombine.high %v3523, %v3523
    %v3529 = vunpack.c.l.s4 1983009808
    %v3530 = vunpack.c.0.s8 %v3529
    %v3531 = vlaneseq
    %v3532 = vshrl.u32 %v3531, 7
    %v3533 = vsub.s32 %v3530, %v3532
    %v3534 = vrot.slane %v3523, %v3533
    %v3536 = vunpack.c.l.s4 1983009808
    %v3537 = vunpack.c.0.s8 %v3536
    %v3538 = vlaneseq
    %v3539 = vshrl.u32 %v3538, 7
    %v3540 = vsub.s32 %v3537, %v3539
    %v3541 = vrot.slane %v3527, %v3540
    %v3542 = vcombine.high %v3534, %v3534
    %v3543 = vcombine.high %v3541, %v3541
    %v3544 = vcombine.high %v3524, %v3524
    %v3546 = vunpack.c.l.s4 1983009808
    %v3547 = vunpack.c.0.s8 %v3546
    %v3548 = vlaneseq
    %v3549 = vshrl.u32 %v3548, 7
    %v3550 = vsub.s32 %v3547, %v3549
    %v3551 = vrot.slane %v3524, %v3550
    %v3553 = vunpack.c.l.s4 1983009808
    %v3554 = vunpack.c.0.s8 %v3553
    %v3555 = vlaneseq
    %v3556 = vshrl.u32 %v3555, 7
    %v3557 = vsub.s32 %v3554, %v3556
    %v3558 = vrot.slane %v3544, %v3557
    %v3559 = vcombine.high %v3551, %v3551
    %v3560 = vcombine.high %v3558, %v3558
    %v3569 = vsel %vm3339, %v3534, 0.0
    %v3570 = vsel %vm3339, %v3542, 0.0
    %v3571 = vadd.f32 %v3569, %v3570
    %v3572 = vsel %vm3339, %v3541, 0.0
    %v3573 = vadd.f32 %v3571, %v3572
    %v3574 = vsel %vm3339, %v3543, 0.0
    %v3575 = vadd.f32 %v3573, %v3574
    %v3576 = vsel %vm3339, %v3551, 0.0
    %v3577 = vadd.f32 %v3575, %v3576
    %v3578 = vsel %vm3339, %v3559, 0.0
    %v3579 = vadd.f32 %v3577, %v3578
    %v3580 = vsel %vm3339, %v3558, 0.0
    %v3581 = vadd.f32 %v3579, %v3580
    %v3582 = vsel %vm3350, %v3560, 0.0
    %v3583 = vadd.f32 %v3581, %v3582
    %3584 = vadd.xlane.f32.xlu0 %v3583
    %v3585 = vpop.xlane.xlu0 %3584
    %v3586 = vrcp.pop %v3433
    %v3587 = vmul.f32 %v3585, %v3586
    %vm3588 = vcmask 1024
    %3589 = vst.msk [vmem:[#allocation3] sm:$0x3] %vm3588, %v3587
    %v3591 = vlaneseq
    %v3592 = vshrl.u32 %v3591, 7
    %v3593 = vsub.s32 0, %v3592
    %v3594 = vrot.slane %v3292, %v3593
    %v3595 = vlaneseq
    %v3596 = vshrl.u32 %v3595, 7
    %v3597 = vsub.s32 1, %v3596
    %v3598 = vrot.slane %v3292, %v3597
    %v3599 = vlaneseq
    %v3600 = vshrl.u32 %v3599, 7
    %v3601 = vsub.s32 2, %v3600
    %v3602 = vrot.slane %v3292, %v3601
    %v3603 = vlaneseq
    %v3604 = vshrl.u32 %v3603, 7
    %v3605 = vsub.s32 3, %v3604
    %v3606 = vrot.slane %v3292, %v3605
    %v3607 = vlaneseq
    %v3608 = vshrl.u32 %v3607, 7
    %v3609 = vsub.s32 4, %v3608
    %v3610 = vrot.slane %v3292, %v3609
    %v3611 = vlaneseq
    %v3612 = vshrl.u32 %v3611, 7
    %v3613 = vsub.s32 5, %v3612
    %v3614 = vrot.slane %v3292, %v3613
    %v3615 = vlaneseq
    %v3616 = vshrl.u32 %v3615, 7
    %v3617 = vsub.s32 6, %v3616
    %v3618 = vrot.slane %v3292, %v3617
    %v3619 = vlaneseq
    %v3620 = vshrl.u32 %v3619, 7
    %v3621 = vsub.s32 7, %v3620
    %v3622 = vrot.slane %v3292, %v3621
    %v3623 = vcombine.low %v3594, %v3598
    %v3624 = vcombine.low %v3602, %v3606
    %v3626 = vunpack.c.l.s4 1983009808
    %v3627 = vunpack.c.0.s8 %v3626
    %v3628 = vlaneseq
    %v3629 = vshrl.u32 %v3628, 7
    %v3630 = vsub.s32 %v3627, %v3629
    %v3631 = vrot.slane %v3623, %v3630
    %v3633 = vunpack.c.l.s4 1983009808
    %v3634 = vunpack.c.0.s8 %v3633
    %v3635 = vlaneseq
    %v3636 = vshrl.u32 %v3635, 7
    %v3637 = vsub.s32 %v3634, %v3636
    %v3638 = vrot.slane %v3624, %v3637
    %v3639 = vcombine.low %v3631, %v3638
    %v3640 = vcombine.low %v3610, %v3614
    %v3641 = vcombine.low %v3618, %v3622
    %v3643 = vunpack.c.l.s4 1983009808
    %v3644 = vunpack.c.0.s8 %v3643
    %v3645 = vlaneseq
    %v3646 = vshrl.u32 %v3645, 7
    %v3647 = vsub.s32 %v3644, %v3646
    %v3648 = vrot.slane %v3640, %v3647
    %v3650 = vunpack.c.l.s4 1983009808
    %v3651 = vunpack.c.0.s8 %v3650
    %v3652 = vlaneseq
    %v3653 = vshrl.u32 %v3652, 7
    %v3654 = vsub.s32 %v3651, %v3653
    %v3655 = vrot.slane %v3641, %v3654
    %v3656 = vcombine.low %v3648, %v3655
    %v3659 = vmul.f32 %v3370, %v3639
    %v3660 = vmul.f32 %v3372, %v3656
    %v3663 = vcombine.high %v3659, %v3659
    %v3665 = vunpack.c.l.s4 1983009808
    %v3666 = vunpack.c.0.s8 %v3665
    %v3667 = vlaneseq
    %v3668 = vshrl.u32 %v3667, 7
    %v3669 = vsub.s32 %v3666, %v3668
    %v3670 = vrot.slane %v3659, %v3669
    %v3672 = vunpack.c.l.s4 1983009808
    %v3673 = vunpack.c.0.s8 %v3672
    %v3674 = vlaneseq
    %v3675 = vshrl.u32 %v3674, 7
    %v3676 = vsub.s32 %v3673, %v3675
    %v3677 = vrot.slane %v3663, %v3676
    %v3678 = vcombine.high %v3670, %v3670
    %v3679 = vcombine.high %v3677, %v3677
    %v3680 = vcombine.high %v3660, %v3660
    %v3682 = vunpack.c.l.s4 1983009808
    %v3683 = vunpack.c.0.s8 %v3682
    %v3684 = vlaneseq
    %v3685 = vshrl.u32 %v3684, 7
    %v3686 = vsub.s32 %v3683, %v3685
    %v3687 = vrot.slane %v3660, %v3686
    %v3689 = vunpack.c.l.s4 1983009808
    %v3690 = vunpack.c.0.s8 %v3689
    %v3691 = vlaneseq
    %v3692 = vshrl.u32 %v3691, 7
    %v3693 = vsub.s32 %v3690, %v3692
    %v3694 = vrot.slane %v3680, %v3693
    %v3695 = vcombine.high %v3687, %v3687
    %v3696 = vcombine.high %v3694, %v3694
    %v3705 = vsel %vm3339, %v3670, 0.0
    %v3706 = vsel %vm3339, %v3678, 0.0
    %v3707 = vadd.f32 %v3705, %v3706
    %v3708 = vsel %vm3339, %v3677, 0.0
    %v3709 = vadd.f32 %v3707, %v3708
    %v3710 = vsel %vm3339, %v3679, 0.0
    %v3711 = vadd.f32 %v3709, %v3710
    %v3712 = vsel %vm3339, %v3687, 0.0
    %v3713 = vadd.f32 %v3711, %v3712
    %v3714 = vsel %vm3339, %v3695, 0.0
    %v3715 = vadd.f32 %v3713, %v3714
    %v3716 = vsel %vm3339, %v3694, 0.0
    %v3717 = vadd.f32 %v3715, %v3716
    %v3718 = vsel %vm3350, %v3696, 0.0
    %v3719 = vadd.f32 %v3717, %v3718
    %3720 = vadd.xlane.f32.xlu0 %v3719
    %v3721 = vpop.xlane.xlu0 %3720
    %v3722 = vmul.f32 %v3721, %v3586
    %3723 = vst.msk [vmem:[#allocation4] sm:$0x3] %vm3588, %v3722
    %v3724 = vld [vmem:[#allocation2 + $0x10] sm:$0xff]
    %v3725 = vld [vmem:[#allocation2 + $0x18] sm:$0xff]
    %v3728 = vcombine.high %v3724, %v3724
    %v3730 = vunpack.c.l.s4 1983009808
    %v3731 = vunpack.c.0.s8 %v3730
    %v3732 = vlaneseq
    %v3733 = vshrl.u32 %v3732, 7
    %v3734 = vsub.s32 %v3731, %v3733
    %v3735 = vrot.slane %v3724, %v3734
    %v3737 = vunpack.c.l.s4 1983009808
    %v3738 = vunpack.c.0.s8 %v3737
    %v3739 = vlaneseq
    %v3740 = vshrl.u32 %v3739, 7
    %v3741 = vsub.s32 %v3738, %v3740
    %v3742 = vrot.slane %v3728, %v3741
    %v3743 = vcombine.high %v3735, %v3735
    %v3744 = vcombine.high %v3742, %v3742
    %v3745 = vcombine.high %v3725, %v3725
    %v3747 = vunpack.c.l.s4 1983009808
    %v3748 = vunpack.c.0.s8 %v3747
    %v3749 = vlaneseq
    %v3750 = vshrl.u32 %v3749, 7
    %v3751 = vsub.s32 %v3748, %v3750
    %v3752 = vrot.slane %v3725, %v3751
    %v3754 = vunpack.c.l.s4 1983009808
    %v3755 = vunpack.c.0.s8 %v3754
    %v3756 = vlaneseq
    %v3757 = vshrl.u32 %v3756, 7
    %v3758 = vsub.s32 %v3755, %v3757
    %v3759 = vrot.slane %v3745, %v3758
    %v3760 = vcombine.high %v3752, %v3752
    %v3761 = vcombine.high %v3759, %v3759
    %v3770 = vsel %vm3339, %v3735, -inf
    %v3771 = vsel %vm3339, %v3743, -inf
    %v3772 = vsel %vm3339, %v3742, -inf
    %v3773 = vsel %vm3339, %v3744, -inf
    %v3774 = vsel %vm3339, %v3752, -inf
    %v3775 = vmax.f32 %v3770, %v3774
    %v3776 = vsel %vm3339, %v3760, -inf
    %v3777 = vmax.f32 %v3771, %v3776
    %v3778 = vsel %vm3339, %v3759, -inf
    %v3779 = vmax.f32 %v3772, %v3778
    %v3780 = vsel %vm3350, %v3761, -inf
    %v3781 = vmax.f32 %v3773, %v3780
    %v3782 = vmax.f32 %v3775, %v3777
    %v3783 = vmax.f32 %v3779, %v3781
    %v3784 = vmax.f32 %v3782, %v3783
    %3785 = vmax.xlane.f32.xlu0 %v3784
    %v3786 = vpop.xlane.xlu0 %3785
    %v3789 = vunpack.c.l.s4 269488144
    %v3790 = vunpack.c.0.s8 %v3789
    %v3791 = vlaneseq
    %v3792 = vshrl.u32 %v3791, 7
    %v3793 = vsub.s32 %v3790, %v3792
    %v3794 = vrot.slane %v3786, %v3793
    %v3796 = vsub.f32 %v3724, %v3794
    %v3797 = vsub.f32 %v3725, %v3794
    %v3798 = vmul.f32 %v3796, 1.442695
    %v3799 = vpow.pop %v3798
    %v3800 = vmul.f32 %v3797, 1.442695
    %v3801 = vpow.pop %v3800
    %v3804 = vcombine.high %v3799, %v3799
    %v3806 = vunpack.c.l.s4 1983009808
    %v3807 = vunpack.c.0.s8 %v3806
    %v3808 = vlaneseq
    %v3809 = vshrl.u32 %v3808, 7
    %v3810 = vsub.s32 %v3807, %v3809
    %v3811 = vrot.slane %v3799, %v3810
    %v3813 = vunpack.c.l.s4 1983009808
    %v3814 = vunpack.c.0.s8 %v3813
    %v3815 = vlaneseq
    %v3816 = vshrl.u32 %v3815, 7
    %v3817 = vsub.s32 %v3814, %v3816
    %v3818 = vrot.slane %v3804, %v3817
    %v3819 = vcombine.high %v3811, %v3811
    %v3820 = vcombine.high %v3818, %v3818
    %v3821 = vcombine.high %v3801, %v3801
    %v3823 = vunpack.c.l.s4 1983009808
    %v3824 = vunpack.c.0.s8 %v3823
    %v3825 = vlaneseq
    %v3826 = vshrl.u32 %v3825, 7
    %v3827 = vsub.s32 %v3824, %v3826
    %v3828 = vrot.slane %v3801, %v3827
    %v3830 = vunpack.c.l.s4 1983009808
    %v3831 = vunpack.c.0.s8 %v3830
    %v3832 = vlaneseq
    %v3833 = vshrl.u32 %v3832, 7
    %v3834 = vsub.s32 %v3831, %v3833
    %v3835 = vrot.slane %v3821, %v3834
    %v3836 = vcombine.high %v3828, %v3828
    %v3837 = vcombine.high %v3835, %v3835
    %v3846 = vsel %vm3339, %v3811, 0.0
    %v3847 = vsel %vm3339, %v3819, 0.0
    %v3848 = vadd.f32 %v3846, %v3847
    %v3849 = vsel %vm3339, %v3818, 0.0
    %v3850 = vadd.f32 %v3848, %v3849
    %v3851 = vsel %vm3339, %v3820, 0.0
    %v3852 = vadd.f32 %v3850, %v3851
    %v3853 = vsel %vm3339, %v3828, 0.0
    %v3854 = vadd.f32 %v3852, %v3853
    %v3855 = vsel %vm3339, %v3836, 0.0
    %v3856 = vadd.f32 %v3854, %v3855
    %v3857 = vsel %vm3339, %v3835, 0.0
    %v3858 = vadd.f32 %v3856, %v3857
    %v3859 = vsel %vm3350, %v3837, 0.0
    %v3860 = vadd.f32 %v3858, %v3859
    %3861 = vadd.xlane.f32.xlu0 %v3860
    %v3862 = vpop.xlane.xlu0 %3861
    %v3863 = vrcp.pop %v3862
    %v3866 = vunpack.c.l.s4 269488144
    %v3867 = vunpack.c.0.s8 %v3866
    %v3868 = vlaneseq
    %v3869 = vshrl.u32 %v3868, 7
    %v3870 = vsub.s32 %v3867, %v3869
    %v3871 = vrot.slane %v3863, %v3870
    %v3873 = vmul.f32 %v3799, %v3871
    %v3874 = vmul.f32 %v3801, %v3871
    %3875 = vst [vmem:[#allocation16 + $0x10] sm:$0xff] %v3873
    %3876 = vst.msk [vmem:[#allocation16 + $0x18] sm:$0xff] %vm3452, %v3874
    %v3877 = vmul.f32 %v3799, %v3503
    %v3878 = vmul.f32 %v3801, %v3520
    %v3881 = vcombine.high %v3877, %v3877
    %v3883 = vunpack.c.l.s4 1983009808
    %v3884 = vunpack.c.0.s8 %v3883
    %v3885 = vlaneseq
    %v3886 = vshrl.u32 %v3885, 7
    %v3887 = vsub.s32 %v3884, %v3886
    %v3888 = vrot.slane %v3877, %v3887
    %v3890 = vunpack.c.l.s4 1983009808
    %v3891 = vunpack.c.0.s8 %v3890
    %v3892 = vlaneseq
    %v3893 = vshrl.u32 %v3892, 7
    %v3894 = vsub.s32 %v3891, %v3893
    %v3895 = vrot.slane %v3881, %v3894
    %v3896 = vcombine.high %v3888, %v3888
    %v3897 = vcombine.high %v3895, %v3895
    %v3898 = vcombine.high %v3878, %v3878
    %v3900 = vunpack.c.l.s4 1983009808
    %v3901 = vunpack.c.0.s8 %v3900
    %v3902 = vlaneseq
    %v3903 = vshrl.u32 %v3902, 7
    %v3904 = vsub.s32 %v3901, %v3903
    %v3905 = vrot.slane %v3878, %v3904
    %v3907 = vunpack.c.l.s4 1983009808
    %v3908 = vunpack.c.0.s8 %v3907
    %v3909 = vlaneseq
    %v3910 = vshrl.u32 %v3909, 7
    %v3911 = vsub.s32 %v3908, %v3910
    %v3912 = vrot.slane %v3898, %v3911
    %v3913 = vcombine.high %v3905, %v3905
    %v3914 = vcombine.high %v3912, %v3912
    %v3923 = vsel %vm3339, %v3888, 0.0
    %v3924 = vsel %vm3339, %v3896, 0.0
    %v3925 = vadd.f32 %v3923, %v3924
    %v3926 = vsel %vm3339, %v3895, 0.0
    %v3927 = vadd.f32 %v3925, %v3926
    %v3928 = vsel %vm3339, %v3897, 0.0
    %v3929 = vadd.f32 %v3927, %v3928
    %v3930 = vsel %vm3339, %v3905, 0.0
    %v3931 = vadd.f32 %v3929, %v3930
    %v3932 = vsel %vm3339, %v3913, 0.0
    %v3933 = vadd.f32 %v3931, %v3932
    %v3934 = vsel %vm3339, %v3912, 0.0
    %v3935 = vadd.f32 %v3933, %v3934
    %v3936 = vsel %vm3350, %v3914, 0.0
    %v3937 = vadd.f32 %v3935, %v3936
    %3938 = vadd.xlane.f32.xlu0 %v3937
    %v3939 = vpop.xlane.xlu0 %3938
    %v3940 = vrcp.pop %v3862
    %v3941 = vmul.f32 %v3939, %v3940
    %vm3942 = vcmask 9224
    %3943 = vst.msk [vmem:[#allocation3] sm:$0x3] %vm3942, %v3941
    %v3944 = vmul.f32 %v3799, %v3639
    %v3945 = vmul.f32 %v3801, %v3656
    %v3948 = vcombine.high %v3944, %v3944
    %v3950 = vunpack.c.l.s4 1983009808
    %v3951 = vunpack.c.0.s8 %v3950
    %v3952 = vlaneseq
    %v3953 = vshrl.u32 %v3952, 7
    %v3954 = vsub.s32 %v3951, %v3953
    %v3955 = vrot.slane %v3944, %v3954
    %v3957 = vunpack.c.l.s4 1983009808
    %v3958 = vunpack.c.0.s8 %v3957
    %v3959 = vlaneseq
    %v3960 = vshrl.u32 %v3959, 7
    %v3961 = vsub.s32 %v3958, %v3960
    %v3962 = vrot.slane %v3948, %v3961
    %v3963 = vcombine.high %v3955, %v3955
    %v3964 = vcombine.high %v3962, %v3962
    %v3965 = vcombine.high %v3945, %v3945
    %v3967 = vunpack.c.l.s4 1983009808
    %v3968 = vunpack.c.0.s8 %v3967
    %v3969 = vlaneseq
    %v3970 = vshrl.u32 %v3969, 7
    %v3971 = vsub.s32 %v3968, %v3970
    %v3972 = vrot.slane %v3945, %v3971
    %v3974 = vunpack.c.l.s4 1983009808
    %v3975 = vunpack.c.0.s8 %v3974
    %v3976 = vlaneseq
    %v3977 = vshrl.u32 %v3976, 7
    %v3978 = vsub.s32 %v3975, %v3977
    %v3979 = vrot.slane %v3965, %v3978
    %v3980 = vcombine.high %v3972, %v3972
    %v3981 = vcombine.high %v3979, %v3979
    %v3990 = vsel %vm3339, %v3955, 0.0
    %v3991 = vsel %vm3339, %v3963, 0.0
    %v3992 = vadd.f32 %v3990, %v3991
    %v3993 = vsel %vm3339, %v3962, 0.0
    %v3994 = vadd.f32 %v3992, %v3993
    %v3995 = vsel %vm3339, %v3964, 0.0
    %v3996 = vadd.f32 %v3994, %v3995
    %v3997 = vsel %vm3339, %v3972, 0.0
    %v3998 = vadd.f32 %v3996, %v3997
    %v3999 = vsel %vm3339, %v3980, 0.0
    %v4000 = vadd.f32 %v3998, %v3999
    %v4001 = vsel %vm3339, %v3979, 0.0
    %v4002 = vadd.f32 %v4000, %v4001
    %v4003 = vsel %vm3350, %v3981, 0.0
    %v4004 = vadd.f32 %v4002, %v4003
    %4005 = vadd.xlane.f32.xlu0 %v4004
    %v4006 = vpop.xlane.xlu0 %4005
    %v4007 = vmul.f32 %v4006, %v3940
    %4008 = vst.msk [vmem:[#allocation4] sm:$0x3] %vm3942, %v4007
    %v4009 = vld [vmem:[#allocation2 + $0x20] sm:$0xff]
    %v4010 = vld [vmem:[#allocation2 + $0x28] sm:$0xff]
    %v4013 = vcombine.high %v4009, %v4009
    %v4015 = vunpack.c.l.s4 1983009808
    %v4016 = vunpack.c.0.s8 %v4015
    %v4017 = vlaneseq
    %v4018 = vshrl.u32 %v4017, 7
    %v4019 = vsub.s32 %v4016, %v4018
    %v4020 = vrot.slane %v4009, %v4019
    %v4022 = vunpack.c.l.s4 1983009808
    %v4023 = vunpack.c.0.s8 %v4022
    %v4024 = vlaneseq
    %v4025 = vshrl.u32 %v4024, 7
    %v4026 = vsub.s32 %v4023, %v4025
    %v4027 = vrot.slane %v4013, %v4026
    %v4028 = vcombine.high %v4020, %v4020
    %v4029 = vcombine.high %v4027, %v4027
    %v4030 = vcombine.high %v4010, %v4010
    %v4032 = vunpack.c.l.s4 1983009808
    %v4033 = vunpack.c.0.s8 %v4032
    %v4034 = vlaneseq
    %v4035 = vshrl.u32 %v4034, 7
    %v4036 = vsub.s32 %v4033, %v4035
    %v4037 = vrot.slane %v4010, %v4036
    %v4039 = vunpack.c.l.s4 1983009808
    %v4040 = vunpack.c.0.s8 %v4039
    %v4041 = vlaneseq
    %v4042 = vshrl.u32 %v4041, 7
    %v4043 = vsub.s32 %v4040, %v4042
    %v4044 = vrot.slane %v4030, %v4043
    %v4045 = vcombine.high %v4037, %v4037
    %v4046 = vcombine.high %v4044, %v4044
    %v4055 = vsel %vm3339, %v4020, -inf
    %v4056 = vsel %vm3339, %v4028, -inf
    %v4057 = vsel %vm3339, %v4027, -inf
    %v4058 = vsel %vm3339, %v4029, -inf
    %v4059 = vsel %vm3339, %v4037, -inf
    %v4060 = vmax.f32 %v4055, %v4059
    %v4061 = vsel %vm3339, %v4045, -inf
    %v4062 = vmax.f32 %v4056, %v4061
    %v4063 = vsel %vm3339, %v4044, -inf
    %v4064 = vmax.f32 %v4057, %v4063
    %v4065 = vsel %vm3350, %v4046, -inf
    %v4066 = vmax.f32 %v4058, %v4065
    %v4067 = vmax.f32 %v4060, %v4062
    %v4068 = vmax.f32 %v4064, %v4066
    %v4069 = vmax.f32 %v4067, %v4068
    %4070 = vmax.xlane.f32.xlu0 %v4069
    %v4071 = vpop.xlane.xlu0 %4070
    %v4074 = vunpack.c.l.s4 269488144
    %v4075 = vunpack.c.0.s8 %v4074
    %v4076 = vlaneseq
    %v4077 = vshrl.u32 %v4076, 7
    %v4078 = vsub.s32 %v4075, %v4077
    %v4079 = vrot.slane %v4071, %v4078
    %v4081 = vsub.f32 %v4009, %v4079
    %v4082 = vsub.f32 %v4010, %v4079
    %v4083 = vmul.f32 %v4081, 1.442695
    %v4084 = vpow.pop %v4083
    %v4085 = vmul.f32 %v4082, 1.442695
    %v4086 = vpow.pop %v4085
    %v4089 = vcombine.high %v4084, %v4084
    %v4091 = vunpack.c.l.s4 1983009808
    %v4092 = vunpack.c.0.s8 %v4091
    %v4093 = vlaneseq
    %v4094 = vshrl.u32 %v4093, 7
    %v4095 = vsub.s32 %v4092, %v4094
    %v4096 = vrot.slane %v4084, %v4095
    %v4098 = vunpack.c.l.s4 1983009808
    %v4099 = vunpack.c.0.s8 %v4098
    %v4100 = vlaneseq
    %v4101 = vshrl.u32 %v4100, 7
    %v4102 = vsub.s32 %v4099, %v4101
    %v4103 = vrot.slane %v4089, %v4102
    %v4104 = vcombine.high %v4096, %v4096
    %v4105 = vcombine.high %v4103, %v4103
    %v4106 = vcombine.high %v4086, %v4086
    %v4108 = vunpack.c.l.s4 1983009808
    %v4109 = vunpack.c.0.s8 %v4108
    %v4110 = vlaneseq
    %v4111 = vshrl.u32 %v4110, 7
    %v4112 = vsub.s32 %v4109, %v4111
    %v4113 = vrot.slane %v4086, %v4112
    %v4115 = vunpack.c.l.s4 1983009808
    %v4116 = vunpack.c.0.s8 %v4115
    %v4117 = vlaneseq
    %v4118 = vshrl.u32 %v4117, 7
    %v4119 = vsub.s32 %v4116, %v4118
    %v4120 = vrot.slane %v4106, %v4119
    %v4121 = vcombine.high %v4113, %v4113
    %v4122 = vcombine.high %v4120, %v4120
    %v4131 = vsel %vm3339, %v4096, 0.0
    %v4132 = vsel %vm3339, %v4104, 0.0
    %v4133 = vadd.f32 %v4131, %v4132
    %v4134 = vsel %vm3339, %v4103, 0.0
    %v4135 = vadd.f32 %v4133, %v4134
    %v4136 = vsel %vm3339, %v4105, 0.0
    %v4137 = vadd.f32 %v4135, %v4136
    %v4138 = vsel %vm3339, %v4113, 0.0
    %v4139 = vadd.f32 %v4137, %v4138
    %v4140 = vsel %vm3339, %v4121, 0.0
    %v4141 = vadd.f32 %v4139, %v4140
    %v4142 = vsel %vm3339, %v4120, 0.0
    %v4143 = vadd.f32 %v4141, %v4142
    %v4144 = vsel %vm3350, %v4122, 0.0
    %v4145 = vadd.f32 %v4143, %v4144
    %4146 = vadd.xlane.f32.xlu0 %v4145
    %v4147 = vpop.xlane.xlu0 %4146
    %v4148 = vrcp.pop %v4147
    %v4151 = vunpack.c.l.s4 269488144
    %v4152 = vunpack.c.0.s8 %v4151
    %v4153 = vlaneseq
    %v4154 = vshrl.u32 %v4153, 7
    %v4155 = vsub.s32 %v4152, %v4154
    %v4156 = vrot.slane %v4148, %v4155
    %v4158 = vmul.f32 %v4084, %v4156
    %v4159 = vmul.f32 %v4086, %v4156
    %4160 = vst [vmem:[#allocation16 + $0x20] sm:$0xff] %v4158
    %4161 = vst.msk [vmem:[#allocation16 + $0x28] sm:$0xff] %vm3452, %v4159
    %v4162 = vmul.f32 %v4084, %v3503
    %v4163 = vmul.f32 %v4086, %v3520
    %v4166 = vcombine.high %v4162, %v4162
    %v4168 = vunpack.c.l.s4 1983009808
    %v4169 = vunpack.c.0.s8 %v4168
    %v4170 = vlaneseq
    %v4171 = vshrl.u32 %v4170, 7
    %v4172 = vsub.s32 %v4169, %v4171
    %v4173 = vrot.slane %v4162, %v4172
    %v4175 = vunpack.c.l.s4 1983009808
    %v4176 = vunpack.c.0.s8 %v4175
    %v4177 = vlaneseq
    %v4178 = vshrl.u32 %v4177, 7
    %v4179 = vsub.s32 %v4176, %v4178
    %v4180 = vrot.slane %v4166, %v4179
    %v4181 = vcombine.high %v4173, %v4173
    %v4182 = vcombine.high %v4180, %v4180
    %v4183 = vcombine.high %v4163, %v4163
    %v4185 = vunpack.c.l.s4 1983009808
    %v4186 = vunpack.c.0.s8 %v4185
    %v4187 = vlaneseq
    %v4188 = vshrl.u32 %v4187, 7
    %v4189 = vsub.s32 %v4186, %v4188
    %v4190 = vrot.slane %v4163, %v4189
    %v4192 = vunpack.c.l.s4 1983009808
    %v4193 = vunpack.c.0.s8 %v4192
    %v4194 = vlaneseq
    %v4195 = vshrl.u32 %v4194, 7
    %v4196 = vsub.s32 %v4193, %v4195
    %v4197 = vrot.slane %v4183, %v4196
    %v4198 = vcombine.high %v4190, %v4190
    %v4199 = vcombine.high %v4197, %v4197
    %v4208 = vsel %vm3339, %v4173, 0.0
    %v4209 = vsel %vm3339, %v4181, 0.0
    %v4210 = vadd.f32 %v4208, %v4209
    %v4211 = vsel %vm3339, %v4180, 0.0
    %v4212 = vadd.f32 %v4210, %v4211
    %v4213 = vsel %vm3339, %v4182, 0.0
    %v4214 = vadd.f32 %v4212, %v4213
    %v4215 = vsel %vm3339, %v4190, 0.0
    %v4216 = vadd.f32 %v4214, %v4215
    %v4217 = vsel %vm3339, %v4198, 0.0
    %v4218 = vadd.f32 %v4216, %v4217
    %v4219 = vsel %vm3339, %v4197, 0.0
    %v4220 = vadd.f32 %v4218, %v4219
    %v4221 = vsel %vm3350, %v4199, 0.0
    %v4222 = vadd.f32 %v4220, %v4221
    %4223 = vadd.xlane.f32.xlu0 %v4222
    %v4224 = vpop.xlane.xlu0 %4223
    %v4225 = vrcp.pop %v4147
    %v4226 = vmul.f32 %v4224, %v4225
    %vm4227 = vcmask 17424
    %4228 = vst.msk [vmem:[#allocation3] sm:$0x3] %vm4227, %v4226
    %v4229 = vmul.f32 %v4084, %v3639
    %v4230 = vmul.f32 %v4086, %v3656
    %v4233 = vcombine.high %v4229, %v4229
    %v4235 = vunpack.c.l.s4 1983009808
    %v4236 = vunpack.c.0.s8 %v4235
    %v4237 = vlaneseq
    %v4238 = vshrl.u32 %v4237, 7
    %v4239 = vsub.s32 %v4236, %v4238
    %v4240 = vrot.slane %v4229, %v4239
    %v4242 = vunpack.c.l.s4 1983009808
    %v4243 = vunpack.c.0.s8 %v4242
    %v4244 = vlaneseq
    %v4245 = vshrl.u32 %v4244, 7
    %v4246 = vsub.s32 %v4243, %v4245
    %v4247 = vrot.slane %v4233, %v4246
    %v4248 = vcombine.high %v4240, %v4240
    %v4249 = vcombine.high %v4247, %v4247
    %v4250 = vcombine.high %v4230, %v4230
    %v4252 = vunpack.c.l.s4 1983009808
    %v4253 = vunpack.c.0.s8 %v4252
    %v4254 = vlaneseq
    %v4255 = vshrl.u32 %v4254, 7
    %v4256 = vsub.s32 %v4253, %v4255
    %v4257 = vrot.slane %v4230, %v4256
    %v4259 = vunpack.c.l.s4 1983009808
    %v4260 = vunpack.c.0.s8 %v4259
    %v4261 = vlaneseq
    %v4262 = vshrl.u32 %v4261, 7
    %v4263 = vsub.s32 %v4260, %v4262
    %v4264 = vrot.slane %v4250, %v4263
    %v4265 = vcombine.high %v4257, %v4257
    %v4266 = vcombine.high %v4264, %v4264
    %v4275 = vsel %vm3339, %v4240, 0.0
    %v4276 = vsel %vm3339, %v4248, 0.0
    %v4277 = vadd.f32 %v4275, %v4276
    %v4278 = vsel %vm3339, %v4247, 0.0
    %v4279 = vadd.f32 %v4277, %v4278
    %v4280 = vsel %vm3339, %v4249, 0.0
    %v4281 = vadd.f32 %v4279, %v4280
    %v4282 = vsel %vm3339, %v4257, 0.0
    %v4283 = vadd.f32 %v4281, %v4282
    %v4284 = vsel %vm3339, %v4265, 0.0
    %v4285 = vadd.f32 %v4283, %v4284
    %v4286 = vsel %vm3339, %v4264, 0.0
    %v4287 = vadd.f32 %v4285, %v4286
    %v4288 = vsel %vm3350, %v4266, 0.0
    %v4289 = vadd.f32 %v4287, %v4288
    %4290 = vadd.xlane.f32.xlu0 %v4289
    %v4291 = vpop.xlane.xlu0 %4290
    %v4292 = vmul.f32 %v4291, %v4225
    %4293 = vst.msk [vmem:[#allocation4] sm:$0x3] %vm4227, %v4292
    %v4294 = vld [vmem:[#allocation2 + $0x30] sm:$0xff]
    %v4295 = vld [vmem:[#allocation2 + $0x38] sm:$0xff]
    %v4298 = vcombine.high %v4294, %v4294
    %v4300 = vunpack.c.l.s4 1983009808
    %v4301 = vunpack.c.0.s8 %v4300
    %v4302 = vlaneseq
    %v4303 = vshrl.u32 %v4302, 7
    %v4304 = vsub.s32 %v4301, %v4303
    %v4305 = vrot.slane %v4294, %v4304
    %v4307 = vunpack.c.l.s4 1983009808
    %v4308 = vunpack.c.0.s8 %v4307
    %v4309 = vlaneseq
    %v4310 = vshrl.u32 %v4309, 7
    %v4311 = vsub.s32 %v4308, %v4310
    %v4312 = vrot.slane %v4298, %v4311
    %v4313 = vcombine.high %v4305, %v4305
    %v4314 = vcombine.high %v4312, %v4312
    %v4315 = vcombine.high %v4295, %v4295
    %v4317 = vunpack.c.l.s4 1983009808
    %v4318 = vunpack.c.0.s8 %v4317
    %v4319 = vlaneseq
    %v4320 = vshrl.u32 %v4319, 7
    %v4321 = vsub.s32 %v4318, %v4320
    %v4322 = vrot.slane %v4295, %v4321
    %v4324 = vunpack.c.l.s4 1983009808
    %v4325 = vunpack.c.0.s8 %v4324
    %v4326 = vlaneseq
    %v4327 = vshrl.u32 %v4326, 7
    %v4328 = vsub.s32 %v4325, %v4327
    %v4329 = vrot.slane %v4315, %v4328
    %v4330 = vcombine.high %v4322, %v4322
    %v4331 = vcombine.high %v4329, %v4329
    %v4340 = vsel %vm3339, %v4305, -inf
    %v4341 = vsel %vm3339, %v4313, -inf
    %v4342 = vsel %vm3339, %v4312, -inf
    %v4343 = vsel %vm3339, %v4314, -inf
    %v4344 = vsel %vm3339, %v4322, -inf
    %v4345 = vmax.f32 %v4340, %v4344
    %v4346 = vsel %vm3339, %v4330, -inf
    %v4347 = vmax.f32 %v4341, %v4346
    %v4348 = vsel %vm3339, %v4329, -inf
    %v4349 = vmax.f32 %v4342, %v4348
    %v4350 = vsel %vm3350, %v4331, -inf
    %v4351 = vmax.f32 %v4343, %v4350
    %v4352 = vmax.f32 %v4345, %v4347
    %v4353 = vmax.f32 %v4349, %v4351
    %v4354 = vmax.f32 %v4352, %v4353
    %4355 = vmax.xlane.f32.xlu0 %v4354
    %v4356 = vpop.xlane.xlu0 %4355
    %v4359 = vunpack.c.l.s4 269488144
    %v4360 = vunpack.c.0.s8 %v4359
    %v4361 = vlaneseq
    %v4362 = vshrl.u32 %v4361, 7
    %v4363 = vsub.s32 %v4360, %v4362
    %v4364 = vrot.slane %v4356, %v4363
    %v4366 = vsub.f32 %v4294, %v4364
    %v4367 = vsub.f32 %v4295, %v4364
    %v4368 = vmul.f32 %v4366, 1.442695
    %v4369 = vpow.pop %v4368
    %v4370 = vmul.f32 %v4367, 1.442695
    %v4371 = vpow.pop %v4370
    %v4374 = vcombine.high %v4369, %v4369
    %v4376 = vunpack.c.l.s4 1983009808
    %v4377 = vunpack.c.0.s8 %v4376
    %v4378 = vlaneseq
    %v4379 = vshrl.u32 %v4378, 7
    %v4380 = vsub.s32 %v4377, %v4379
    %v4381 = vrot.slane %v4369, %v4380
    %v4383 = vunpack.c.l.s4 1983009808
    %v4384 = vunpack.c.0.s8 %v4383
    %v4385 = vlaneseq
    %v4386 = vshrl.u32 %v4385, 7
    %v4387 = vsub.s32 %v4384, %v4386
    %v4388 = vrot.slane %v4374, %v4387
    %v4389 = vcombine.high %v4381, %v4381
    %v4390 = vcombine.high %v4388, %v4388
    %v4391 = vcombine.high %v4371, %v4371
    %v4393 = vunpack.c.l.s4 1983009808
    %v4394 = vunpack.c.0.s8 %v4393
    %v4395 = vlaneseq
    %v4396 = vshrl.u32 %v4395, 7
    %v4397 = vsub.s32 %v4394, %v4396
    %v4398 = vrot.slane %v4371, %v4397
    %v4400 = vunpack.c.l.s4 1983009808
    %v4401 = vunpack.c.0.s8 %v4400
    %v4402 = vlaneseq
    %v4403 = vshrl.u32 %v4402, 7
    %v4404 = vsub.s32 %v4401, %v4403
    %v4405 = vrot.slane %v4391, %v4404
    %v4406 = vcombine.high %v4398, %v4398
    %v4407 = vcombine.high %v4405, %v4405
    %v4416 = vsel %vm3339, %v4381, 0.0
    %v4417 = vsel %vm3339, %v4389, 0.0
    %v4418 = vadd.f32 %v4416, %v4417
    %v4419 = vsel %vm3339, %v4388, 0.0
    %v4420 = vadd.f32 %v4418, %v4419
    %v4421 = vsel %vm3339, %v4390, 0.0
    %v4422 = vadd.f32 %v4420, %v4421
    %v4423 = vsel %vm3339, %v4398, 0.0
    %v4424 = vadd.f32 %v4422, %v4423
    %v4425 = vsel %vm3339, %v4406, 0.0
    %v4426 = vadd.f32 %v4424, %v4425
    %v4427 = vsel %vm3339, %v4405, 0.0
    %v4428 = vadd.f32 %v4426, %v4427
    %v4429 = vsel %vm3350, %v4407, 0.0
    %v4430 = vadd.f32 %v4428, %v4429
    %4431 = vadd.xlane.f32.xlu0 %v4430
    %v4432 = vpop.xlane.xlu0 %4431
    %v4433 = vrcp.pop %v4432
    %v4436 = vunpack.c.l.s4 269488144
    %v4437 = vunpack.c.0.s8 %v4436
    %v4438 = vlaneseq
    %v4439 = vshrl.u32 %v4438, 7
    %v4440 = vsub.s32 %v4437, %v4439
    %v4441 = vrot.slane %v4433, %v4440
    %v4443 = vmul.f32 %v4369, %v4441
    %v4444 = vmul.f32 %v4371, %v4441
    %4445 = vst [vmem:[#allocation16 + $0x30] sm:$0xff] %v4443
    %4446 = vst.msk [vmem:[#allocation16 + $0x38] sm:$0xff] %vm3452, %v4444
    %v4447 = vmul.f32 %v4369, %v3503
    %v4448 = vmul.f32 %v4371, %v3520
    %v4451 = vcombine.high %v4447, %v4447
    %v4453 = vunpack.c.l.s4 1983009808
    %v4454 = vunpack.c.0.s8 %v4453
    %v4455 = vlaneseq
    %v4456 = vshrl.u32 %v4455, 7
    %v4457 = vsub.s32 %v4454, %v4456
    %v4458 = vrot.slane %v4447, %v4457
    %v4460 = vunpack.c.l.s4 1983009808
    %v4461 = vunpack.c.0.s8 %v4460
    %v4462 = vlaneseq
    %v4463 = vshrl.u32 %v4462, 7
    %v4464 = vsub.s32 %v4461, %v4463
    %v4465 = vrot.slane %v4451, %v4464
    %v4466 = vcombine.high %v4458, %v4458
    %v4467 = vcombine.high %v4465, %v4465
    %v4468 = vcombine.high %v4448, %v4448
    %v4470 = vunpack.c.l.s4 1983009808
    %v4471 = vunpack.c.0.s8 %v4470
    %v4472 = vlaneseq
    %v4473 = vshrl.u32 %v4472, 7
    %v4474 = vsub.s32 %v4471, %v4473
    %v4475 = vrot.slane %v4448, %v4474
    %v4477 = vunpack.c.l.s4 1983009808
    %v4478 = vunpack.c.0.s8 %v4477
    %v4479 = vlaneseq
    %v4480 = vshrl.u32 %v4479, 7
    %v4481 = vsub.s32 %v4478, %v4480
    %v4482 = vrot.slane %v4468, %v4481
    %v4483 = vcombine.high %v4475, %v4475
    %v4484 = vcombine.high %v4482, %v4482
    %v4493 = vsel %vm3339, %v4458, 0.0
    %v4494 = vsel %vm3339, %v4466, 0.0
    %v4495 = vadd.f32 %v4493, %v4494
    %v4496 = vsel %vm3339, %v4465, 0.0
    %v4497 = vadd.f32 %v4495, %v4496
    %v4498 = vsel %vm3339, %v4467, 0.0
    %v4499 = vadd.f32 %v4497, %v4498
    %v4500 = vsel %vm3339, %v4475, 0.0
    %v4501 = vadd.f32 %v4499, %v4500
    %v4502 = vsel %vm3339, %v4483, 0.0
    %v4503 = vadd.f32 %v4501, %v4502
    %v4504 = vsel %vm3339, %v4482, 0.0
    %v4505 = vadd.f32 %v4503, %v4504
    %v4506 = vsel %vm3350, %v4484, 0.0
    %v4507 = vadd.f32 %v4505, %v4506
    %4508 = vadd.xlane.f32.xlu0 %v4507
    %v4509 = vpop.xlane.xlu0 %4508
    %v4510 = vrcp.pop %v4432
    %v4511 = vmul.f32 %v4509, %v4510
    %vm4512 = vcmask 25624
    %4513 = vst.msk [vmem:[#allocation3] sm:$0x3] %vm4512, %v4511
    %v4514 = vmul.f32 %v4369, %v3639
    %v4515 = vmul.f32 %v4371, %v3656
    %v4518 = vcombine.high %v4514, %v4514
    %v4520 = vunpack.c.l.s4 1983009808
    %v4521 = vunpack.c.0.s8 %v4520
    %v4522 = vlaneseq
    %v4523 = vshrl.u32 %v4522, 7
    %v4524 = vsub.s32 %v4521, %v4523
    %v4525 = vrot.slane %v4514, %v4524
    %v4527 = vunpack.c.l.s4 1983009808
    %v4528 = vunpack.c.0.s8 %v4527
    %v4529 = vlaneseq
    %v4530 = vshrl.u32 %v4529, 7
    %v4531 = vsub.s32 %v4528, %v4530
    %v4532 = vrot.slane %v4518, %v4531
    %v4533 = vcombine.high %v4525, %v4525
    %v4534 = vcombine.high %v4532, %v4532
    %v4535 = vcombine.high %v4515, %v4515
    %v4537 = vunpack.c.l.s4 1983009808
    %v4538 = vunpack.c.0.s8 %v4537
    %v4539 = vlaneseq
    %v4540 = vshrl.u32 %v4539, 7
    %v4541 = vsub.s32 %v4538, %v4540
    %v4542 = vrot.slane %v4515, %v4541
    %v4544 = vunpack.c.l.s4 1983009808
    %v4545 = vunpack.c.0.s8 %v4544
    %v4546 = vlaneseq
    %v4547 = vshrl.u32 %v4546, 7
    %v4548 = vsub.s32 %v4545, %v4547
    %v4549 = vrot.slane %v4535, %v4548
    %v4550 = vcombine.high %v4542, %v4542
    %v4551 = vcombine.high %v4549, %v4549
    %v4560 = vsel %vm3339, %v4525, 0.0
    %v4561 = vsel %vm3339, %v4533, 0.0
    %v4562 = vadd.f32 %v4560, %v4561
    %v4563 = vsel %vm3339, %v4532, 0.0
    %v4564 = vadd.f32 %v4562, %v4563
    %v4565 = vsel %vm3339, %v4534, 0.0
    %v4566 = vadd.f32 %v4564, %v4565
    %v4567 = vsel %vm3339, %v4542, 0.0
    %v4568 = vadd.f32 %v4566, %v4567
    %v4569 = vsel %vm3339, %v4550, 0.0
    %v4570 = vadd.f32 %v4568, %v4569
    %v4571 = vsel %vm3339, %v4549, 0.0
    %v4572 = vadd.f32 %v4570, %v4571
    %v4573 = vsel %vm3350, %v4551, 0.0
    %v4574 = vadd.f32 %v4572, %v4573
    %4575 = vadd.xlane.f32.xlu0 %v4574
    %v4576 = vpop.xlane.xlu0 %4575
    %v4577 = vmul.f32 %v4576, %v4510
    %4578 = vst.msk [vmem:[#allocation4] sm:$0x3] %vm4512, %v4577
    %v4579 = vld [vmem:[#allocation2 + $0x40] sm:$0xff]
    %v4580 = vld [vmem:[#allocation2 + $0x48] sm:$0xff]
    %v4583 = vcombine.high %v4579, %v4579
    %v4585 = vunpack.c.l.s4 1983009808
    %v4586 = vunpack.c.0.s8 %v4585
    %v4587 = vlaneseq
    %v4588 = vshrl.u32 %v4587, 7
    %v4589 = vsub.s32 %v4586, %v4588
    %v4590 = vrot.slane %v4579, %v4589
    %v4592 = vunpack.c.l.s4 1983009808
    %v4593 = vunpack.c.0.s8 %v4592
    %v4594 = vlaneseq
    %v4595 = vshrl.u32 %v4594, 7
    %v4596 = vsub.s32 %v4593, %v4595
    %v4597 = vrot.slane %v4583, %v4596
    %v4598 = vcombine.high %v4590, %v4590
    %v4599 = vcombine.high %v4597, %v4597
    %v4600 = vcombine.high %v4580, %v4580
    %v4602 = vunpack.c.l.s4 1983009808
    %v4603 = vunpack.c.0.s8 %v4602
    %v4604 = vlaneseq
    %v4605 = vshrl.u32 %v4604, 7
    %v4606 = vsub.s32 %v4603, %v4605
    %v4607 = vrot.slane %v4580, %v4606
    %v4609 = vunpack.c.l.s4 1983009808
    %v4610 = vunpack.c.0.s8 %v4609
    %v4611 = vlaneseq
    %v4612 = vshrl.u32 %v4611, 7
    %v4613 = vsub.s32 %v4610, %v4612
    %v4614 = vrot.slane %v4600, %v4613
    %v4615 = vcombine.high %v4607, %v4607
    %v4616 = vcombine.high %v4614, %v4614
    %v4625 = vsel %vm3339, %v4590, -inf
    %v4626 = vsel %vm3339, %v4598, -inf
    %v4627 = vsel %vm3339, %v4597, -inf
    %v4628 = vsel %vm3339, %v4599, -inf
    %v4629 = vsel %vm3339, %v4607, -inf
    %v4630 = vmax.f32 %v4625, %v4629
    %v4631 = vsel %vm3339, %v4615, -inf
    %v4632 = vmax.f32 %v4626, %v4631
    %v4633 = vsel %vm3339, %v4614, -inf
    %v4634 = vmax.f32 %v4627, %v4633
    %v4635 = vsel %vm3350, %v4616, -inf
    %v4636 = vmax.f32 %v4628, %v4635
    %v4637 = vmax.f32 %v4630, %v4632
    %v4638 = vmax.f32 %v4634, %v4636
    %v4639 = vmax.f32 %v4637, %v4638
    %4640 = vmax.xlane.f32.xlu0 %v4639
    %v4641 = vpop.xlane.xlu0 %4640
    %v4644 = vunpack.c.l.s4 269488144
    %v4645 = vunpack.c.0.s8 %v4644
    %v4646 = vlaneseq
    %v4647 = vshrl.u32 %v4646, 7
    %v4648 = vsub.s32 %v4645, %v4647
    %v4649 = vrot.slane %v4641, %v4648
    %v4651 = vsub.f32 %v4579, %v4649
    %v4652 = vsub.f32 %v4580, %v4649
    %v4653 = vmul.f32 %v4651, 1.442695
    %v4654 = vpow.pop %v4653
    %v4655 = vmul.f32 %v4652, 1.442695
    %v4656 = vpow.pop %v4655
    %v4659 = vcombine.high %v4654, %v4654
    %v4661 = vunpack.c.l.s4 1983009808
    %v4662 = vunpack.c.0.s8 %v4661
    %v4663 = vlaneseq
    %v4664 = vshrl.u32 %v4663, 7
    %v4665 = vsub.s32 %v4662, %v4664
    %v4666 = vrot.slane %v4654, %v4665
    %v4668 = vunpack.c.l.s4 1983009808
    %v4669 = vunpack.c.0.s8 %v4668
    %v4670 = vlaneseq
    %v4671 = vshrl.u32 %v4670, 7
    %v4672 = vsub.s32 %v4669, %v4671
    %v4673 = vrot.slane %v4659, %v4672
    %v4674 = vcombine.high %v4666, %v4666
    %v4675 = vcombine.high %v4673, %v4673
    %v4676 = vcombine.high %v4656, %v4656
    %v4678 = vunpack.c.l.s4 1983009808
    %v4679 = vunpack.c.0.s8 %v4678
    %v4680 = vlaneseq
    %v4681 = vshrl.u32 %v4680, 7
    %v4682 = vsub.s32 %v4679, %v4681
    %v4683 = vrot.slane %v4656, %v4682
    %v4685 = vunpack.c.l.s4 1983009808
    %v4686 = vunpack.c.0.s8 %v4685
    %v4687 = vlaneseq
    %v4688 = vshrl.u32 %v4687, 7
    %v4689 = vsub.s32 %v4686, %v4688
    %v4690 = vrot.slane %v4676, %v4689
    %v4691 = vcombine.high %v4683, %v4683
    %v4692 = vcombine.high %v4690, %v4690
    %v4701 = vsel %vm3339, %v4666, 0.0
    %v4702 = vsel %vm3339, %v4674, 0.0
    %v4703 = vadd.f32 %v4701, %v4702
    %v4704 = vsel %vm3339, %v4673, 0.0
    %v4705 = vadd.f32 %v4703, %v4704
    %v4706 = vsel %vm3339, %v4675, 0.0
    %v4707 = vadd.f32 %v4705, %v4706
    %v4708 = vsel %vm3339, %v4683, 0.0
    %v4709 = vadd.f32 %v4707, %v4708
    %v4710 = vsel %vm3339, %v4691, 0.0
    %v4711 = vadd.f32 %v4709, %v4710
    %v4712 = vsel %vm3339, %v4690, 0.0
    %v4713 = vadd.f32 %v4711, %v4712
    %v4714 = vsel %vm3350, %v4692, 0.0
    %v4715 = vadd.f32 %v4713, %v4714
    %4716 = vadd.xlane.f32.xlu0 %v4715
    %v4717 = vpop.xlane.xlu0 %4716
    %v4718 = vrcp.pop %v4717
    %v4721 = vunpack.c.l.s4 269488144
    %v4722 = vunpack.c.0.s8 %v4721
    %v4723 = vlaneseq
    %v4724 = vshrl.u32 %v4723, 7
    %v4725 = vsub.s32 %v4722, %v4724
    %v4726 = vrot.slane %v4718, %v4725
    %v4728 = vmul.f32 %v4654, %v4726
    %v4729 = vmul.f32 %v4656, %v4726
    %4730 = vst [vmem:[#allocation16 + $0x40] sm:$0xff] %v4728
    %4731 = vst.msk [vmem:[#allocation16 + $0x48] sm:$0xff] %vm3452, %v4729
    %v4732 = vmul.f32 %v4654, %v3503
    %v4733 = vmul.f32 %v4656, %v3520
    %v4736 = vcombine.high %v4732, %v4732
    %v4738 = vunpack.c.l.s4 1983009808
    %v4739 = vunpack.c.0.s8 %v4738
    %v4740 = vlaneseq
    %v4741 = vshrl.u32 %v4740, 7
    %v4742 = vsub.s32 %v4739, %v4741
    %v4743 = vrot.slane %v4732, %v4742
    %v4745 = vunpack.c.l.s4 1983009808
    %v4746 = vunpack.c.0.s8 %v4745
    %v4747 = vlaneseq
    %v4748 = vshrl.u32 %v4747, 7
    %v4749 = vsub.s32 %v4746, %v4748
    %v4750 = vrot.slane %v4736, %v4749
    %v4751 = vcombine.high %v4743, %v4743
    %v4752 = vcombine.high %v4750, %v4750
    %v4753 = vcombine.high %v4733, %v4733
    %v4755 = vunpack.c.l.s4 1983009808
    %v4756 = vunpack.c.0.s8 %v4755
    %v4757 = vlaneseq
    %v4758 = vshrl.u32 %v4757, 7
    %v4759 = vsub.s32 %v4756, %v4758
    %v4760 = vrot.slane %v4733, %v4759
    %v4762 = vunpack.c.l.s4 1983009808
    %v4763 = vunpack.c.0.s8 %v4762
    %v4764 = vlaneseq
    %v4765 = vshrl.u32 %v4764, 7
    %v4766 = vsub.s32 %v4763, %v4765
    %v4767 = vrot.slane %v4753, %v4766
    %v4768 = vcombine.high %v4760, %v4760
    %v4769 = vcombine.high %v4767, %v4767
    %v4778 = vsel %vm3339, %v4743, 0.0
    %v4779 = vsel %vm3339, %v4751, 0.0
    %v4780 = vadd.f32 %v4778, %v4779
    %v4781 = vsel %vm3339, %v4750, 0.0
    %v4782 = vadd.f32 %v4780, %v4781
    %v4783 = vsel %vm3339, %v4752, 0.0
    %v4784 = vadd.f32 %v4782, %v4783
    %v4785 = vsel %vm3339, %v4760, 0.0
    %v4786 = vadd.f32 %v4784, %v4785
    %v4787 = vsel %vm3339, %v4768, 0.0
    %v4788 = vadd.f32 %v4786, %v4787
    %v4789 = vsel %vm3339, %v4767, 0.0
    %v4790 = vadd.f32 %v4788, %v4789
    %v4791 = vsel %vm3350, %v4769, 0.0
    %v4792 = vadd.f32 %v4790, %v4791
    %4793 = vadd.xlane.f32.xlu0 %v4792
    %v4794 = vpop.xlane.xlu0 %4793
    %v4795 = vrcp.pop %v4717
    %v4796 = vmul.f32 %v4794, %v4795
    %vm4797 = vcmask 33824
    %4798 = vst.msk [vmem:[#allocation3] sm:$0x3] %vm4797, %v4796
    %v4799 = vmul.f32 %v4654, %v3639
    %v4800 = vmul.f32 %v4656, %v3656
    %v4803 = vcombine.high %v4799, %v4799
    %v4805 = vunpack.c.l.s4 1983009808
    %v4806 = vunpack.c.0.s8 %v4805
    %v4807 = vlaneseq
    %v4808 = vshrl.u32 %v4807, 7
    %v4809 = vsub.s32 %v4806, %v4808
    %v4810 = vrot.slane %v4799, %v4809
    %v4812 = vunpack.c.l.s4 1983009808
    %v4813 = vunpack.c.0.s8 %v4812
    %v4814 = vlaneseq
    %v4815 = vshrl.u32 %v4814, 7
    %v4816 = vsub.s32 %v4813, %v4815
    %v4817 = vrot.slane %v4803, %v4816
    %v4818 = vcombine.high %v4810, %v4810
    %v4819 = vcombine.high %v4817, %v4817
    %v4820 = vcombine.high %v4800, %v4800
    %v4822 = vunpack.c.l.s4 1983009808
    %v4823 = vunpack.c.0.s8 %v4822
    %v4824 = vlaneseq
    %v4825 = vshrl.u32 %v4824, 7
    %v4826 = vsub.s32 %v4823, %v4825
    %v4827 = vrot.slane %v4800, %v4826
    %v4829 = vunpack.c.l.s4 1983009808
    %v4830 = vunpack.c.0.s8 %v4829
    %v4831 = vlaneseq
    %v4832 = vshrl.u32 %v4831, 7
    %v4833 = vsub.s32 %v4830, %v4832
    %v4834 = vrot.slane %v4820, %v4833
    %v4835 = vcombine.high %v4827, %v4827
    %v4836 = vcombine.high %v4834, %v4834
    %v4845 = vsel %vm3339, %v4810, 0.0
    %v4846 = vsel %vm3339, %v4818, 0.0
    %v4847 = vadd.f32 %v4845, %v4846
    %v4848 = vsel %vm3339, %v4817, 0.0
    %v4849 = vadd.f32 %v4847, %v4848
    %v4850 = vsel %vm3339, %v4819, 0.0
    %v4851 = vadd.f32 %v4849, %v4850
    %v4852 = vsel %vm3339, %v4827, 0.0
    %v4853 = vadd.f32 %v4851, %v4852
    %v4854 = vsel %vm3339, %v4835, 0.0
    %v4855 = vadd.f32 %v4853, %v4854
    %v4856 = vsel %vm3339, %v4834, 0.0
    %v4857 = vadd.f32 %v4855, %v4856
    %v4858 = vsel %vm3350, %v4836, 0.0
    %v4859 = vadd.f32 %v4857, %v4858
    %4860 = vadd.xlane.f32.xlu0 %v4859
    %v4861 = vpop.xlane.xlu0 %4860
    %v4862 = vmul.f32 %v4861, %v4795
    %4863 = vst.msk [vmem:[#allocation4] sm:$0x3] %vm4797, %v4862
    %v4864 = vld [vmem:[#allocation3] sm:$0x3]
    %v4865 = vld [vmem:[#allocation4] sm:$0x3]
    %v4866 = vld [vmem:[#allocation14] sm:$0x1]
    %vm4867 = vcmask 33792
    %4868 = vst.msk [vmem:[#allocation17] sm:$0x3] %vm4867, %v4864
    %s4869 = scalar_lea.vmem [#allocation17], 2
    %4870 = vst.msk [vmem:[%s4869] sm:$0x3] %vm4867, %v4865
    %v4872 = vlaneseq
    %v4873 = vshrl.u32 %v4872, 7
    %v4874 = vsub.s32 0, %v4873
    %v4875 = vrot.slane %v4866, %v4874
    %v4877 = vmul.f32 %v4864, %v4875
    %s4878 = scalar_lea.vmem [#allocation17], 4
    %4879 = vst.msk [vmem:[%s4878] sm:$0x3] %vm4867, %v4877
    %v4880 = vmul.f32 %v4865, %v4875
    %s4881 = scalar_lea.vmem [#allocation17], 6
    %4882 = vst.msk [vmem:[%s4881] sm:$0x3] %vm4867, %v4880
    // Predicated region
    $region50: #{tpu_custom_call.1} parent=1 // pred_check
      _
    $region51: #{tpu_custom_call.1} parent=1 // pred_check_branch
      %4884 = sbr.rel (0) target = $region53
    $region52: #{tpu_custom_call.1} parent=1 // pred_region
      %s4886 = ssub.s32 1280, 1280
      %4887 = vsyncadd [#allocation7], %s4886
      %s4889 = sshll.u32 [#allocation16], 4
      %s4890 = int_to_ptr.vmem [resolvable:$true] %s4889
      %4892 = dma.vmem_to_hbm [thread:$0]  %s4890, 1280, %s6, [#allocation7]
    $region53: #{tpu_custom_call.1} parent=1 // pred_fallthru
      _
    // Predicated region
    $region54: #{tpu_custom_call.1} parent=1 // pred_check
      _
    $region55: #{tpu_custom_call.1} parent=1 // pred_check_branch
      %4894 = sbr.rel (0) target = $region57
    $region56: #{tpu_custom_call.1} parent=1 // pred_region
      %s4896 = ssub.s32 128, 128
      %4897 = vsyncadd [#allocation18], %s4896
      %s4898 = sshll.u32 [#allocation17], 4
      %s4899 = int_to_ptr.vmem [resolvable:$true] %s4898
      %4904 = dma.vmem_to_hbm [thread:$0]  %s4899, 128, %s7, [#allocation18], 32, 32, 2
    $region57: #{tpu_custom_call.1} parent=1 // pred_fallthru
      _
    // Predicated region
    $region58: #{tpu_custom_call.1} parent=1 // pred_check
      _
    $region59: #{tpu_custom_call.1} parent=1 // pred_check_branch
      %4906 = sbr.rel (0) target = $region61
    $region60: #{tpu_custom_call.1} parent=1 // pred_region
      %4907 = dma.done [#allocation7], 1280
    $region61: #{tpu_custom_call.1} parent=1 // pred_fallthru
      _
    // Predicated region
    $region62: #{tpu_custom_call.1} parent=1 // pred_check
      _
    $region63: #{tpu_custom_call.1} parent=1 // pred_check_branch
      %4909 = sbr.rel (0) target = $region65
    $region64: #{tpu_custom_call.1} parent=1 // pred_region
      %4910 = dma.done [#allocation18], 128
    $region65: #{tpu_custom_call.1} parent=1 // pred_fallthru
      _
    %4911 = vsyncpa [#allocation6], 1
    %4912 = vsyncpa [#allocation9], 1
    %4913 = vsyncpa [#allocation12], 1
    %4914 = vsyncpa [#allocation15], 1
    %4915 = vsyncpa [#allocation7], 1
    %4916 = vsyncpa [#allocation18], 1

</llo_original>
